<compile_context>
chip_gen: v7x
topology: tpu7x:2x2x1
jax: 0.10.0
libtpu: 0.0.40
codegen_flags: <defaults>
</compile_context>

<pallas_src>
import functools

import jax
import jax.numpy as jnp
from jax.experimental import pallas as pl
from jax.experimental.pallas import tpu as pltpu

EPS = 1e-5
LANE = 128
VMEM_LIMIT_BYTES = 48 * 1024 * 1024  # fits v7x (64 MiB) and v5e/v6e (128 MiB)


def _round_up(v, m):
    return (v + m - 1) // m * m


def _pad_to(x, shape):
    pads = [(0, t - s) for s, t in zip(x.shape, shape)]
    if any(p for _, p in pads):
        x = jnp.pad(x, pads)
    return x


# ---------------------------------------------------------------------------
# The fused BasicBlock kernel (one grid step = one image).
#   xpl_ref : (P, Hp, Wp, Cin)  bf16   stride-parity planes of the padded input
#   w1_ref  : (9, Cin, Cp)      bf16   conv1 taps, bn1 scale folded in
#   b1_ref  : (1, Cp)           f32    folded bn1 bias
#   w2_ref  : (9, Cp, Cp)       bf16   conv2 taps, bn2 scale folded in
#   b2_ref  : (1, Cp)           f32    folded bn2 bias
#   ws_ref  : (Cin, Cp)         bf16   1x1 projection (or identity matrix)
#   bs_ref  : (1, Cp)           f32    folded shortcut-bn bias (or zeros)
#   o_ref   : (1, Ho, Wo, Cp)   f32
#   out1_ref: (Ho+2, Wo+2, Cp)  bf16 scratch (zero halo = conv2 padding)
#   acc_ref : (Ho*Wo, Cp)       f32  scratch accumulator (reused by both convs)
# ---------------------------------------------------------------------------
def _basic_block_kernel(xpl_ref, w1_ref, b1_ref, w2_ref, b2_ref, ws_ref, bs_ref,
                        o_ref, out1_ref, acc_ref, *,
                        taps1, sc_slice, ho, wo, cin, cp):
    m = ho * wo

    # ---- conv1 (3x3, stride folded into the tap table) + bn1 + relu --------
    acc_ref[...] = jnp.zeros_like(acc_ref)
    for t, (p, r0, c0) in enumerate(taps1):
        xt = xpl_ref[p, r0:r0 + ho, c0:c0 + wo, :].reshape(m, cin)
        acc_ref[...] += jnp.dot(xt, w1_ref[t],
                                preferred_element_type=jnp.float32)
    out1 = jnp.maximum(acc_ref[...] + b1_ref[...], 0.0)

    # Stash out1 (bf16) in a VMEM scratch with a zero 1-pixel halo, so conv2
    # can read its padded input with plain contiguous slices.
    out1_ref[...] = jnp.zeros_like(out1_ref)
    out1_ref[1:1 + ho, 1:1 + wo, :] = out1.reshape(ho, wo, cp).astype(out1_ref.dtype)

    # ---- conv2 (3x3, stride 1) + bn2 ---------------------------------------
    acc_ref[...] = jnp.zeros_like(acc_ref)
    for t in range(9):
        r0, c0 = t // 3, t % 3
        yt = out1_ref[r0:r0 + ho, c0:c0 + wo, :].reshape(m, cp)
        acc_ref[...] += jnp.dot(yt, w2_ref[t],
                                preferred_element_type=jnp.float32)
    out = acc_ref[...] + b2_ref[...]

    # ---- shortcut: 1x1 projection + bn, or identity (ws = eye, bs = 0) -----
    ps, rs, cs = sc_slice
    xs = xpl_ref[ps, rs:rs + ho, cs:cs + wo, :].reshape(m, cin)
    out = out + (jnp.dot(xs, ws_ref[...], preferred_element_type=jnp.float32)
                 + bs_ref[...])

    # ---- relu + lane-dense store --------------------------------------------
    o_ref[...] = jnp.maximum(out, 0.0).reshape(1, ho, wo, cp).astype(o_ref.dtype)


# ---------------------------------------------------------------------------
# Folded (inference-mode) BatchNorm.
# TODO(synk): training-mode batch statistics are not reproduced; BN is folded
# with running stats (eval mode), matching the inference forward pass.
# ---------------------------------------------------------------------------
def _fold_bn(bn):
    scale = bn["gamma"] / jnp.sqrt(bn["var"] + EPS)
    bias = bn["beta"] - bn["mean"] * scale
    return scale, bias


# ---------------------------------------------------------------------------
# BasicBlock forward (Pallas-backed): exactly ONE pallas_call.
# ---------------------------------------------------------------------------
def basic_block_forward(x_nchw, params, stride, compute_dtype=jnp.bfloat16):
    planes = params["w1"].shape[0]
    in_planes = params["w1"].shape[1]
    N, _, H, W = x_nchw.shape
    ho = (H - 1) // stride + 1
    wo = (W - 1) // stride + 1
    cp = _round_up(planes, LANE)

    # NCHW f32 -> NHWC bf16, spatial zero-pad of 1 (conv padding).
    x = jnp.transpose(x_nchw, (0, 2, 3, 1)).astype(compute_dtype)
    xp = jnp.pad(x, ((0, 0), (1, 1), (1, 1), (0, 0)))

    if stride == 1:
        # One plane: the padded image itself.  Tap (dh, dw) -> slice offset.
        xpl = xp[:, None]                                  # (N, 1, H+2, W+2, C)
        taps1 = [(0, dh, dw) for dh in range(3) for dw in range(3)]
        sc_slice = (0, 1, 1)                               # x = interior of xp
    else:
        # stride 2: split the padded image into its 4 row/col parity planes
        # (same total bytes as the input), so every tap becomes a contiguous
        # (no strided access) slice of one plane.
        hp = -(-(H + 2) // 2)
        wp = -(-(W + 2) // 2)
        plane_list = []
        for a in range(2):
            for b in range(2):
                pab = xp[:, a::2, b::2, :]
                pab = jnp.pad(pab, ((0, 0), (0, hp - pab.shape[1]),
                                    (0, wp - pab.shape[2]), (0, 0)))
                plane_list.append(pab)
        xpl = jnp.stack(plane_list, axis=1)                # (N, 4, hp, wp, C)
        taps1 = [((dh % 2) * 2 + (dw % 2), dh // 2, dw // 2)
                 for dh in range(3) for dw in range(3)]
        sc_slice = (3, 0, 0)                               # x[::2, ::2] plane

    P, Hp, Wp = xpl.shape[1], xpl.shape[2], xpl.shape[3]
    xpl = xpl.reshape(N * P, Hp, Wp, in_planes)

    # --- weights: fold BN scale in f32, cast bf16, pad channels -------------
    s1, b1 = _fold_bn(params["bn1"])
    s2, b2 = _fold_bn(params["bn2"])
    w1 = jnp.transpose(params["w1"], (2, 3, 1, 0)).reshape(9, in_planes, planes)
    w1 = _pad_to((w1 * s1[None, None, :]).astype(compute_dtype), (9, in_planes, cp))
    w2 = jnp.transpose(params["w2"], (2, 3, 1, 0)).reshape(9, planes, planes)
    w2 = _pad_to((w2 * s2[None, None, :]).astype(compute_dtype), (9, cp, cp))
    b1p = _pad_to(b1.reshape(1, planes).astype(jnp.float32), (1, cp))
    b2p = _pad_to(b2.reshape(1, planes).astype(jnp.float32), (1, cp))

    if stride != 1 or in_planes != planes:
        ss, bs = _fold_bn(params["bns"])
        ws = jnp.transpose(params["ws"][:, :, 0, 0], (1, 0))       # (Cin, planes)
        ws = _pad_to((ws * ss[None, :]).astype(compute_dtype), (in_planes, cp))
        bsp = _pad_to(bs.reshape(1, planes).astype(jnp.float32), (1, cp))
    else:
        # Identity residual expressed as a 1x1 matmul with an identity matrix,
        # which keeps a single kernel code path and avoids lane-padding the
        # residual activation in HBM.
        ws = _pad_to(jnp.eye(in_planes, planes, dtype=compute_dtype),
                     (in_planes, cp))
        bsp = jnp.zeros((1, cp), jnp.float32)

    kernel = functools.partial(_basic_block_kernel, taps1=taps1,
                               sc_slice=sc_slice, ho=ho, wo=wo,
                               cin=in_planes, cp=cp)

    out = pl.pallas_call(
        kernel,
        out_shape=jax.ShapeDtypeStruct((N, ho, wo, cp), jnp.float32),
        grid=(N,),
        in_specs=[
            # activation planes: one image per grid step
            pl.BlockSpec((P, Hp, Wp, in_planes), lambda i: (i, 0, 0, 0)),
            # all weights/biases: grid-constant index_maps -> DMA'd once
            pl.BlockSpec((9, in_planes, cp), lambda i: (0, 0, 0)),
            pl.BlockSpec((1, cp), lambda i: (0, 0)),
            pl.BlockSpec((9, cp, cp), lambda i: (0, 0, 0)),
            pl.BlockSpec((1, cp), lambda i: (0, 0)),
            pl.BlockSpec((in_planes, cp), lambda i: (0, 0)),
            pl.BlockSpec((1, cp), lambda i: (0, 0)),
        ],
        out_specs=pl.BlockSpec((1, ho, wo, cp), lambda i: (i, 0, 0, 0)),
        scratch_shapes=[
            pltpu.VMEM((ho + 2, wo + 2, cp), compute_dtype),   # out1 + halo
            pltpu.VMEM((ho * wo, cp), jnp.float32),            # f32 accumulator
        ],
        compiler_params=pltpu.CompilerParams(
            dimension_semantics=("parallel",),
            vmem_limit_bytes=VMEM_LIMIT_BYTES),
    )(xpl, w1, b1p, w2, b2p, ws, bsp)

    out = out[:, :, :, :planes]                                   # drop lane pad
    return jnp.transpose(out, (0, 3, 1, 2)).astype(x_nchw.dtype)  # NHWC -> NCHW


# ---------------------------------------------------------------------------
# Pure-JAX reference (f32 lax.conv), mirroring the kernel's eval-mode BN fold
# and bf16 quantization points, for the correctness assert.
# ---------------------------------------------------------------------------
def _ref_forward(x_nchw, params, stride):
    def conv(x, w, s, pad):
        return jax.lax.conv_general_dilated(
            x, w, (s, s), ((pad, pad), (pad, pad)),
            dimension_numbers=("NCHW", "OIHW", "NCHW"),
            precision=jax.lax.Precision.HIGHEST)

    def q(t):
        return t.astype(jnp.bfloat16).astype(jnp.float32)

    planes = params["w1"].shape[0]
    s1, b1 = _fold_bn(params["bn1"])
    s2, b2 = _fold_bn(params["bn2"])
    x_q = q(x_nchw)
    w1 = q(params["w1"] * s1[:, None, None, None])
    w2 = q(params["w2"] * s2[:, None, None, None])

    out = jax.nn.relu(conv(x_q, w1, stride, 1) + b1[None, :, None, None])
    out = conv(q(out), w2, 1, 1) + b2[None, :, None, None]
    if stride != 1 or x_nchw.shape[1] != planes:
        ss, bs = _fold_bn(params["bns"])
        ws = q(params["ws"] * ss[:, None, None, None])
        sc = conv(x_q, ws, stride, 0) + bs[None, :, None, None]
    else:
        sc = x_q
    return jax.nn.relu(out + sc)


# ---------------------------------------------------------------------------
def _init_params(key, in_planes, planes, stride):
    ks = jax.random.split(key, 16)

    def bn_params(k):
        k1, k2, k3, k4 = jax.random.split(k, 4)
        return {
            "gamma": 0.5 + jax.random.uniform(k1, (planes,), jnp.float32),
            "beta": 0.1 * jax.random.normal(k2, (planes,), jnp.float32),
            "mean": 0.1 * jax.random.normal(k3, (planes,), jnp.float32),
            "var": 0.5 + jax.random.uniform(k4, (planes,), jnp.float32),
        }

    params = {
        "w1": 0.2 * jax.random.normal(ks[0], (planes, in_planes, 3, 3), jnp.float32),
        "bn1": bn_params(ks[1]),
        "w2": 0.2 * jax.random.normal(ks[2], (planes, planes, 3, 3), jnp.float32),
        "bn2": bn_params(ks[3]),
    }
    if stride != 1 or in_planes != planes:
        params["ws"] = 0.2 * jax.random.normal(ks[4], (planes, in_planes, 1, 1), jnp.float32)
        params["bns"] = bn_params(ks[5])
    return params


if __name__ == "__main__":
    key = jax.random.PRNGKey(0)

    configs = [
        (4, 8, 2),   # projection shortcut (stride 2, channel change)
        (8, 8, 1),   # identity shortcut
    ]
    for idx, (in_planes, planes, stride) in enumerate(configs):
        k_x, k_p = jax.random.split(jax.random.fold_in(key, idx))
        x = jax.random.normal(k_x, (2, in_planes, 16, 16), jnp.float32)  # NCHW
        params = _init_params(k_p, in_planes, planes, stride)

        out = jax.block_until_ready(basic_block_forward(x, params, stride))
        ref = jax.block_until_ready(_ref_forward(x, params, stride))

        Ho = (16 - 1) // stride + 1
        assert out.shape == ref.shape == (2, planes, Ho, Ho), out.shape
        max_err = float(jnp.max(jnp.abs(out - ref)))
        assert jnp.allclose(out, ref, atol=3e-2, rtol=2e-2), max_err

    print("KERNEL_OK")
</pallas_src>

<mosaic_0001>
module attributes {stable_mosaic.version = 11 : i64} {
  func.func @_basic_block_kernel(%arg0: i32, %arg1: memref<4x9x9x4xbf16, #tpu.memory_space<vmem>>, %arg2: memref<9x4x128xbf16, #tpu.memory_space<vmem>>, %arg3: memref<1x128xf32, #tpu.memory_space<vmem>>, %arg4: memref<9x128x128xbf16, #tpu.memory_space<vmem>>, %arg5: memref<1x128xf32, #tpu.memory_space<vmem>>, %arg6: memref<4x128xbf16, #tpu.memory_space<vmem>>, %arg7: memref<1x128xf32, #tpu.memory_space<vmem>>, %arg8: memref<1x8x8x128xf32, #tpu.memory_space<vmem>>, %arg9: memref<10x10x128xbf16, #tpu.memory_space<vmem>>, %arg10: memref<64x128xf32, #tpu.memory_space<vmem>>) attributes {dimension_semantics = [#tpu.dimension_semantics<parallel>], iteration_bounds = array<i64: 2>, scalar_prefetch = 0 : i64, scratch_operands = 2 : i64, tpu.core_type = #tpu.core_type<tc>, window_params = [{transform_indices = @transform_0, window_bounds = array<i64: 4, 9, 9, 4>}, {pipeline_mode = #tpu.pipeline_mode<synchronous>, transform_indices = @transform_1, window_bounds = array<i64: 9, 4, 128>}, {pipeline_mode = #tpu.pipeline_mode<synchronous>, transform_indices = @transform_2, window_bounds = array<i64: 1, 128>}, {pipeline_mode = #tpu.pipeline_mode<synchronous>, transform_indices = @transform_3, window_bounds = array<i64: 9, 128, 128>}, {pipeline_mode = #tpu.pipeline_mode<synchronous>, transform_indices = @transform_4, window_bounds = array<i64: 1, 128>}, {pipeline_mode = #tpu.pipeline_mode<synchronous>, transform_indices = @transform_5, window_bounds = array<i64: 4, 128>}, {pipeline_mode = #tpu.pipeline_mode<synchronous>, transform_indices = @transform_6, window_bounds = array<i64: 1, 128>}, {transform_indices = @transform_7, window_bounds = array<i64: 1, 8, 8, 128>}]} {
    %cst = arith.constant 0.000000e+00 : f32
    %0 = vector.broadcast %cst : f32 to vector<64x128xf32>
    %c0 = arith.constant 0 : index
    %c0_0 = arith.constant 0 : index
    %1 = vector.load %arg10[%c0, %c0_0] : memref<64x128xf32, #tpu.memory_space<vmem>>, vector<64x128xf32>
    tpu.vector_store %arg10[%c0, %c0_0], %0 {strides = array<i32>} : memref<64x128xf32, #tpu.memory_space<vmem>>, vector<64x128xf32>,
    %c0_1 = arith.constant 0 : index
    %c0_2 = arith.constant 0 : index
    %c0_3 = arith.constant 0 : index
    %c0_4 = arith.constant 0 : index
    %2 = vector.load %arg1[%c0_1, %c0_2, %c0_3, %c0_4] : memref<4x9x9x4xbf16, #tpu.memory_space<vmem>>, vector<1x8x8x4xbf16>
    %3 = vector.shape_cast %2 : vector<1x8x8x4xbf16> to vector<8x8x4xbf16>
    %4 = vector.shape_cast %3 : vector<8x8x4xbf16> to vector<64x4xbf16>
    %c0_5 = arith.constant 0 : index
    %c0_6 = arith.constant 0 : index
    %5 = vector.load %arg10[%c0_5, %c0_6] : memref<64x128xf32, #tpu.memory_space<vmem>>, vector<64x128xf32>
    %c0_7 = arith.constant 0 : index
    %c0_8 = arith.constant 0 : index
    %c0_9 = arith.constant 0 : index
    %6 = vector.load %arg2[%c0_7, %c0_8, %c0_9] : memref<9x4x128xbf16, #tpu.memory_space<vmem>>, vector<1x4x128xbf16>
    %7 = vector.shape_cast %6 : vector<1x4x128xbf16> to vector<4x128xbf16>
    %cst_10 = arith.constant dense<0.000000e+00> : vector<64x128xf32>
    %8 = tpu.matmul %4, %7, %cst_10 {dimension_numbers = #tpu.dot_dimension_numbers<[1], [0], [0], [1], [0, 0, 1, 1], [], []>} : vector<64x4xbf16>, vector<4x128xbf16>, vector<64x128xf32> -> vector<64x128xf32>
    %9 = arith.addf %5, %8 : vector<64x128xf32>
    %c0_11 = arith.constant 0 : index
    %c0_12 = arith.constant 0 : index
    %10 = vector.load %arg10[%c0_11, %c0_12] : memref<64x128xf32, #tpu.memory_space<vmem>>, vector<64x128xf32>
    tpu.vector_store %arg10[%c0_11, %c0_12], %9 {strides = array<i32>} : memref<64x128xf32, #tpu.memory_space<vmem>>, vector<64x128xf32>,
    %c1 = arith.constant 1 : index
    %c0_13 = arith.constant 0 : index
    %c0_14 = arith.constant 0 : index
    %c0_15 = arith.constant 0 : index
    %11 = vector.load %arg1[%c1, %c0_13, %c0_14, %c0_15] : memref<4x9x9x4xbf16, #tpu.memory_space<vmem>>, vector<1x8x8x4xbf16>
    %12 = vector.shape_cast %11 : vector<1x8x8x4xbf16> to vector<8x8x4xbf16>
    %13 = vector.shape_cast %12 : vector<8x8x4xbf16> to vector<64x4xbf16>
    %c0_16 = arith.constant 0 : index
    %c0_17 = arith.constant 0 : index
    %14 = vector.load %arg10[%c0_16, %c0_17] : memref<64x128xf32, #tpu.memory_space<vmem>>, vector<64x128xf32>
    %c1_18 = arith.constant 1 : index
    %c0_19 = arith.constant 0 : index
    %c0_20 = arith.constant 0 : index
    %15 = vector.load %arg2[%c1_18, %c0_19, %c0_20] : memref<9x4x128xbf16, #tpu.memory_space<vmem>>, vector<1x4x128xbf16>
    %16 = vector.shape_cast %15 : vector<1x4x128xbf16> to vector<4x128xbf16>
    %cst_21 = arith.constant dense<0.000000e+00> : vector<64x128xf32>
    %17 = tpu.matmul %13, %16, %cst_21 {dimension_numbers = #tpu.dot_dimension_numbers<[1], [0], [0], [1], [0, 0, 1, 1], [], []>} : vector<64x4xbf16>, vector<4x128xbf16>, vector<64x128xf32> -> vector<64x128xf32>
    %18 = arith.addf %14, %17 : vector<64x128xf32>
    %c0_22 = arith.constant 0 : index
    %c0_23 = arith.constant 0 : index
    %19 = vector.load %arg10[%c0_22, %c0_23] : memref<64x128xf32, #tpu.memory_space<vmem>>, vector<64x128xf32>
    tpu.vector_store %arg10[%c0_22, %c0_23], %18 {strides = array<i32>} : memref<64x128xf32, #tpu.memory_space<vmem>>, vector<64x128xf32>,
    %c0_24 = arith.constant 0 : index
    %c0_25 = arith.constant 0 : index
    %c1_26 = arith.constant 1 : index
    %c0_27 = arith.constant 0 : index
    %20 = vector.load %arg1[%c0_24, %c0_25, %c1_26, %c0_27] : memref<4x9x9x4xbf16, #tpu.memory_space<vmem>>, vector<1x8x8x4xbf16>
    %21 = vector.shape_cast %20 : vector<1x8x8x4xbf16> to vector<8x8x4xbf16>
    %22 = vector.shape_cast %21 : vector<8x8x4xbf16> to vector<64x4xbf16>
    %c0_28 = arith.constant 0 : index
    %c0_29 = arith.constant 0 : index
    %23 = vector.load %arg10[%c0_28, %c0_29] : memref<64x128xf32, #tpu.memory_space<vmem>>, vector<64x128xf32>
    %c2 = arith.constant 2 : index
    %c0_30 = arith.constant 0 : index
    %c0_31 = arith.constant 0 : index
    %24 = vector.load %arg2[%c2, %c0_30, %c0_31] : memref<9x4x128xbf16, #tpu.memory_space<vmem>>, vector<1x4x128xbf16>
    %25 = vector.shape_cast %24 : vector<1x4x128xbf16> to vector<4x128xbf16>
    %cst_32 = arith.constant dense<0.000000e+00> : vector<64x128xf32>
    %26 = tpu.matmul %22, %25, %cst_32 {dimension_numbers = #tpu.dot_dimension_numbers<[1], [0], [0], [1], [0, 0, 1, 1], [], []>} : vector<64x4xbf16>, vector<4x128xbf16>, vector<64x128xf32> -> vector<64x128xf32>
    %27 = arith.addf %23, %26 : vector<64x128xf32>
    %c0_33 = arith.constant 0 : index
    %c0_34 = arith.constant 0 : index
    %28 = vector.load %arg10[%c0_33, %c0_34] : memref<64x128xf32, #tpu.memory_space<vmem>>, vector<64x128xf32>
    tpu.vector_store %arg10[%c0_33, %c0_34], %27 {strides = array<i32>} : memref<64x128xf32, #tpu.memory_space<vmem>>, vector<64x128xf32>,
    %c2_35 = arith.constant 2 : index
    %c0_36 = arith.constant 0 : index
    %c0_37 = arith.constant 0 : index
    %c0_38 = arith.constant 0 : index
    %29 = vector.load %arg1[%c2_35, %c0_36, %c0_37, %c0_38] : memref<4x9x9x4xbf16, #tpu.memory_space<vmem>>, vector<1x8x8x4xbf16>
    %30 = vector.shape_cast %29 : vector<1x8x8x4xbf16> to vector<8x8x4xbf16>
    %31 = vector.shape_cast %30 : vector<8x8x4xbf16> to vector<64x4xbf16>
    %c0_39 = arith.constant 0 : index
    %c0_40 = arith.constant 0 : index
    %32 = vector.load %arg10[%c0_39, %c0_40] : memref<64x128xf32, #tpu.memory_space<vmem>>, vector<64x128xf32>
    %c3 = arith.constant 3 : index
    %c0_41 = arith.constant 0 : index
    %c0_42 = arith.constant 0 : index
    %33 = vector.load %arg2[%c3, %c0_41, %c0_42] : memref<9x4x128xbf16, #tpu.memory_space<vmem>>, vector<1x4x128xbf16>
    %34 = vector.shape_cast %33 : vector<1x4x128xbf16> to vector<4x128xbf16>
    %cst_43 = arith.constant dense<0.000000e+00> : vector<64x128xf32>
    %35 = tpu.matmul %31, %34, %cst_43 {dimension_numbers = #tpu.dot_dimension_numbers<[1], [0], [0], [1], [0, 0, 1, 1], [], []>} : vector<64x4xbf16>, vector<4x128xbf16>, vector<64x128xf32> -> vector<64x128xf32>
    %36 = arith.addf %32, %35 : vector<64x128xf32>
    %c0_44 = arith.constant 0 : index
    %c0_45 = arith.constant 0 : index
    %37 = vector.load %arg10[%c0_44, %c0_45] : memref<64x128xf32, #tpu.memory_space<vmem>>, vector<64x128xf32>
    tpu.vector_store %arg10[%c0_44, %c0_45], %36 {strides = array<i32>} : memref<64x128xf32, #tpu.memory_space<vmem>>, vector<64x128xf32>,
    %c3_46 = arith.constant 3 : index
    %c0_47 = arith.constant 0 : index
    %c0_48 = arith.constant 0 : index
    %c0_49 = arith.constant 0 : index
    %38 = vector.load %arg1[%c3_46, %c0_47, %c0_48, %c0_49] : memref<4x9x9x4xbf16, #tpu.memory_space<vmem>>, vector<1x8x8x4xbf16>
    %39 = vector.shape_cast %38 : vector<1x8x8x4xbf16> to vector<8x8x4xbf16>
    %40 = vector.shape_cast %39 : vector<8x8x4xbf16> to vector<64x4xbf16>
    %c0_50 = arith.constant 0 : index
    %c0_51 = arith.constant 0 : index
    %41 = vector.load %arg10[%c0_50, %c0_51] : memref<64x128xf32, #tpu.memory_space<vmem>>, vector<64x128xf32>
    %c4 = arith.constant 4 : index
    %c0_52 = arith.constant 0 : index
    %c0_53 = arith.constant 0 : index
    %42 = vector.load %arg2[%c4, %c0_52, %c0_53] : memref<9x4x128xbf16, #tpu.memory_space<vmem>>, vector<1x4x128xbf16>
    %43 = vector.shape_cast %42 : vector<1x4x128xbf16> to vector<4x128xbf16>
    %cst_54 = arith.constant dense<0.000000e+00> : vector<64x128xf32>
    %44 = tpu.matmul %40, %43, %cst_54 {dimension_numbers = #tpu.dot_dimension_numbers<[1], [0], [0], [1], [0, 0, 1, 1], [], []>} : vector<64x4xbf16>, vector<4x128xbf16>, vector<64x128xf32> -> vector<64x128xf32>
    %45 = arith.addf %41, %44 : vector<64x128xf32>
    %c0_55 = arith.constant 0 : index
    %c0_56 = arith.constant 0 : index
    %46 = vector.load %arg10[%c0_55, %c0_56] : memref<64x128xf32, #tpu.memory_space<vmem>>, vector<64x128xf32>
    tpu.vector_store %arg10[%c0_55, %c0_56], %45 {strides = array<i32>} : memref<64x128xf32, #tpu.memory_space<vmem>>, vector<64x128xf32>,
    %c2_57 = arith.constant 2 : index
    %c0_58 = arith.constant 0 : index
    %c1_59 = arith.constant 1 : index
    %c0_60 = arith.constant 0 : index
    %47 = vector.load %arg1[%c2_57, %c0_58, %c1_59, %c0_60] : memref<4x9x9x4xbf16, #tpu.memory_space<vmem>>, vector<1x8x8x4xbf16>
    %48 = vector.shape_cast %47 : vector<1x8x8x4xbf16> to vector<8x8x4xbf16>
    %49 = vector.shape_cast %48 : vector<8x8x4xbf16> to vector<64x4xbf16>
    %c0_61 = arith.constant 0 : index
    %c0_62 = arith.constant 0 : index
    %50 = vector.load %arg10[%c0_61, %c0_62] : memref<64x128xf32, #tpu.memory_space<vmem>>, vector<64x128xf32>
    %c5 = arith.constant 5 : index
    %c0_63 = arith.constant 0 : index
    %c0_64 = arith.constant 0 : index
    %51 = vector.load %arg2[%c5, %c0_63, %c0_64] : memref<9x4x128xbf16, #tpu.memory_space<vmem>>, vector<1x4x128xbf16>
    %52 = vector.shape_cast %51 : vector<1x4x128xbf16> to vector<4x128xbf16>
    %cst_65 = arith.constant dense<0.000000e+00> : vector<64x128xf32>
    %53 = tpu.matmul %49, %52, %cst_65 {dimension_numbers = #tpu.dot_dimension_numbers<[1], [0], [0], [1], [0, 0, 1, 1], [], []>} : vector<64x4xbf16>, vector<4x128xbf16>, vector<64x128xf32> -> vector<64x128xf32>
    %54 = arith.addf %50, %53 : vector<64x128xf32>
    %c0_66 = arith.constant 0 : index
    %c0_67 = arith.constant 0 : index
    %55 = vector.load %arg10[%c0_66, %c0_67] : memref<64x128xf32, #tpu.memory_space<vmem>>, vector<64x128xf32>
    tpu.vector_store %arg10[%c0_66, %c0_67], %54 {strides = array<i32>} : memref<64x128xf32, #tpu.memory_space<vmem>>, vector<64x128xf32>,
    %c0_68 = arith.constant 0 : index
    %c1_69 = arith.constant 1 : index
    %c0_70 = arith.constant 0 : index
    %c0_71 = arith.constant 0 : index
    %56 = vector.load %arg1[%c0_68, %c1_69, %c0_70, %c0_71] : memref<4x9x9x4xbf16, #tpu.memory_space<vmem>>, vector<1x8x8x4xbf16>
    %57 = vector.shape_cast %56 : vector<1x8x8x4xbf16> to vector<8x8x4xbf16>
    %58 = vector.shape_cast %57 : vector<8x8x4xbf16> to vector<64x4xbf16>
    %c0_72 = arith.constant 0 : index
    %c0_73 = arith.constant 0 : index
    %59 = vector.load %arg10[%c0_72, %c0_73] : memref<64x128xf32, #tpu.memory_space<vmem>>, vector<64x128xf32>
    %c6 = arith.constant 6 : index
    %c0_74 = arith.constant 0 : index
    %c0_75 = arith.constant 0 : index
    %60 = vector.load %arg2[%c6, %c0_74, %c0_75] : memref<9x4x128xbf16, #tpu.memory_space<vmem>>, vector<1x4x128xbf16>
    %61 = vector.shape_cast %60 : vector<1x4x128xbf16> to vector<4x128xbf16>
    %cst_76 = arith.constant dense<0.000000e+00> : vector<64x128xf32>
    %62 = tpu.matmul %58, %61, %cst_76 {dimension_numbers = #tpu.dot_dimension_numbers<[1], [0], [0], [1], [0, 0, 1, 1], [], []>} : vector<64x4xbf16>, vector<4x128xbf16>, vector<64x128xf32> -> vector<64x128xf32>
    %63 = arith.addf %59, %62 : vector<64x128xf32>
    %c0_77 = arith.constant 0 : index
    %c0_78 = arith.constant 0 : index
    %64 = vector.load %arg10[%c0_77, %c0_78] : memref<64x128xf32, #tpu.memory_space<vmem>>, vector<64x128xf32>
    tpu.vector_store %arg10[%c0_77, %c0_78], %63 {strides = array<i32>} : memref<64x128xf32, #tpu.memory_space<vmem>>, vector<64x128xf32>,
    %c1_79 = arith.constant 1 : index
    %c1_80 = arith.constant 1 : index
    %c0_81 = arith.constant 0 : index
    %c0_82 = arith.constant 0 : index
    %65 = vector.load %arg1[%c1_79, %c1_80, %c0_81, %c0_82] : memref<4x9x9x4xbf16, #tpu.memory_space<vmem>>, vector<1x8x8x4xbf16>
    %66 = vector.shape_cast %65 : vector<1x8x8x4xbf16> to vector<8x8x4xbf16>
    %67 = vector.shape_cast %66 : vector<8x8x4xbf16> to vector<64x4xbf16>
    %c0_83 = arith.constant 0 : index
    %c0_84 = arith.constant 0 : index
    %68 = vector.load %arg10[%c0_83, %c0_84] : memref<64x128xf32, #tpu.memory_space<vmem>>, vector<64x128xf32>
    %c7 = arith.constant 7 : index
    %c0_85 = arith.constant 0 : index
    %c0_86 = arith.constant 0 : index
    %69 = vector.load %arg2[%c7, %c0_85, %c0_86] : memref<9x4x128xbf16, #tpu.memory_space<vmem>>, vector<1x4x128xbf16>
    %70 = vector.shape_cast %69 : vector<1x4x128xbf16> to vector<4x128xbf16>
    %cst_87 = arith.constant dense<0.000000e+00> : vector<64x128xf32>
    %71 = tpu.matmul %67, %70, %cst_87 {dimension_numbers = #tpu.dot_dimension_numbers<[1], [0], [0], [1], [0, 0, 1, 1], [], []>} : vector<64x4xbf16>, vector<4x128xbf16>, vector<64x128xf32> -> vector<64x128xf32>
    %72 = arith.addf %68, %71 : vector<64x128xf32>
    %c0_88 = arith.constant 0 : index
    %c0_89 = arith.constant 0 : index
    %73 = vector.load %arg10[%c0_88, %c0_89] : memref<64x128xf32, #tpu.memory_space<vmem>>, vector<64x128xf32>
    tpu.vector_store %arg10[%c0_88, %c0_89], %72 {strides = array<i32>} : memref<64x128xf32, #tpu.memory_space<vmem>>, vector<64x128xf32>,
    %c0_90 = arith.constant 0 : index
    %c1_91 = arith.constant 1 : index
    %c1_92 = arith.constant 1 : index
    %c0_93 = arith.constant 0 : index
    %74 = vector.load %arg1[%c0_90, %c1_91, %c1_92, %c0_93] : memref<4x9x9x4xbf16, #tpu.memory_space<vmem>>, vector<1x8x8x4xbf16>
    %75 = vector.shape_cast %74 : vector<1x8x8x4xbf16> to vector<8x8x4xbf16>
    %76 = vector.shape_cast %75 : vector<8x8x4xbf16> to vector<64x4xbf16>
    %c0_94 = arith.constant 0 : index
    %c0_95 = arith.constant 0 : index
    %77 = vector.load %arg10[%c0_94, %c0_95] : memref<64x128xf32, #tpu.memory_space<vmem>>, vector<64x128xf32>
    %c8 = arith.constant 8 : index
    %c0_96 = arith.constant 0 : index
    %c0_97 = arith.constant 0 : index
    %78 = vector.load %arg2[%c8, %c0_96, %c0_97] : memref<9x4x128xbf16, #tpu.memory_space<vmem>>, vector<1x4x128xbf16>
    %79 = vector.shape_cast %78 : vector<1x4x128xbf16> to vector<4x128xbf16>
    %cst_98 = arith.constant dense<0.000000e+00> : vector<64x128xf32>
    %80 = tpu.matmul %76, %79, %cst_98 {dimension_numbers = #tpu.dot_dimension_numbers<[1], [0], [0], [1], [0, 0, 1, 1], [], []>} : vector<64x4xbf16>, vector<4x128xbf16>, vector<64x128xf32> -> vector<64x128xf32>
    %81 = arith.addf %77, %80 : vector<64x128xf32>
    %c0_99 = arith.constant 0 : index
    %c0_100 = arith.constant 0 : index
    %82 = vector.load %arg10[%c0_99, %c0_100] : memref<64x128xf32, #tpu.memory_space<vmem>>, vector<64x128xf32>
    tpu.vector_store %arg10[%c0_99, %c0_100], %81 {strides = array<i32>} : memref<64x128xf32, #tpu.memory_space<vmem>>, vector<64x128xf32>,
    %c0_101 = arith.constant 0 : index
    %c0_102 = arith.constant 0 : index
    %83 = vector.load %arg10[%c0_101, %c0_102] : memref<64x128xf32, #tpu.memory_space<vmem>>, vector<64x128xf32>
    %c0_103 = arith.constant 0 : index
    %c0_104 = arith.constant 0 : index
    %84 = vector.load %arg3[%c0_103, %c0_104] : memref<1x128xf32, #tpu.memory_space<vmem>>, vector<1x128xf32>
    %85 = vector.broadcast %84 : vector<1x128xf32> to vector<64x128xf32>
    %86 = arith.addf %83, %85 : vector<64x128xf32>
    %cst_105 = arith.constant 0.000000e+00 : f32
    %87 = vector.broadcast %cst_105 : f32 to vector<64x128xf32>
    %88 = arith.maximumf %86, %87 : vector<64x128xf32>
    %cst_106 = arith.constant 0.000000e+00 : bf16
    %89 = vector.broadcast %cst_106 : bf16 to vector<10x10x128xbf16>
    %c0_107 = arith.constant 0 : index
    %c0_108 = arith.constant 0 : index
    %c0_109 = arith.constant 0 : index
    %90 = vector.load %arg9[%c0_107, %c0_108, %c0_109] : memref<10x10x128xbf16, #tpu.memory_space<vmem>>, vector<10x10x128xbf16>
    tpu.vector_store %arg9[%c0_107, %c0_108, %c0_109], %89 {strides = array<i32>} : memref<10x10x128xbf16, #tpu.memory_space<vmem>>, vector<10x10x128xbf16>,
    %91 = vector.shape_cast %88 : vector<64x128xf32> to vector<8x8x128xf32>
    %92 = arith.truncf %91 : vector<8x8x128xf32> to vector<8x8x128xbf16>
    %c1_110 = arith.constant 1 : index
    %c1_111 = arith.constant 1 : index
    %c0_112 = arith.constant 0 : index
    %93 = vector.load %arg9[%c1_110, %c1_111, %c0_112] : memref<10x10x128xbf16, #tpu.memory_space<vmem>>, vector<8x8x128xbf16>
    tpu.vector_store %arg9[%c1_110, %c1_111, %c0_112], %92 {strides = array<i32>} : memref<10x10x128xbf16, #tpu.memory_space<vmem>>, vector<8x8x128xbf16>,
    %cst_113 = arith.constant 0.000000e+00 : f32
    %94 = vector.broadcast %cst_113 : f32 to vector<64x128xf32>
    %c0_114 = arith.constant 0 : index
    %c0_115 = arith.constant 0 : index
    %95 = vector.load %arg10[%c0_114, %c0_115] : memref<64x128xf32, #tpu.memory_space<vmem>>, vector<64x128xf32>
    tpu.vector_store %arg10[%c0_114, %c0_115], %94 {strides = array<i32>} : memref<64x128xf32, #tpu.memory_space<vmem>>, vector<64x128xf32>,
    %c0_116 = arith.constant 0 : index
    %c0_117 = arith.constant 0 : index
    %c0_118 = arith.constant 0 : index
    %96 = vector.load %arg9[%c0_116, %c0_117, %c0_118] : memref<10x10x128xbf16, #tpu.memory_space<vmem>>, vector<8x8x128xbf16>
    %97 = vector.shape_cast %96 : vector<8x8x128xbf16> to vector<64x128xbf16>
    %c0_119 = arith.constant 0 : index
    %c0_120 = arith.constant 0 : index
    %98 = vector.load %arg10[%c0_119, %c0_120] : memref<64x128xf32, #tpu.memory_space<vmem>>, vector<64x128xf32>
    %c0_121 = arith.constant 0 : index
    %c0_122 = arith.constant 0 : index
    %c0_123 = arith.constant 0 : index
    %99 = vector.load %arg4[%c0_121, %c0_122, %c0_123] : memref<9x128x128xbf16, #tpu.memory_space<vmem>>, vector<1x128x128xbf16>
    %100 = vector.shape_cast %99 : vector<1x128x128xbf16> to vector<128x128xbf16>
    %cst_124 = arith.constant dense<0.000000e+00> : vector<64x128xf32>
    %101 = tpu.matmul %97, %100, %cst_124 {dimension_numbers = #tpu.dot_dimension_numbers<[1], [0], [0], [1], [0, 0, 1, 1], [], []>} : vector<64x128xbf16>, vector<128x128xbf16>, vector<64x128xf32> -> vector<64x128xf32>
    %102 = arith.addf %98, %101 : vector<64x128xf32>
    %c0_125 = arith.constant 0 : index
    %c0_126 = arith.constant 0 : index
    %103 = vector.load %arg10[%c0_125, %c0_126] : memref<64x128xf32, #tpu.memory_space<vmem>>, vector<64x128xf32>
    tpu.vector_store %arg10[%c0_125, %c0_126], %102 {strides = array<i32>} : memref<64x128xf32, #tpu.memory_space<vmem>>, vector<64x128xf32>,
    %c0_127 = arith.constant 0 : index
    %c1_128 = arith.constant 1 : index
    %c0_129 = arith.constant 0 : index
    %104 = vector.load %arg9[%c0_127, %c1_128, %c0_129] : memref<10x10x128xbf16, #tpu.memory_space<vmem>>, vector<8x8x128xbf16>
    %105 = vector.shape_cast %104 : vector<8x8x128xbf16> to vector<64x128xbf16>
    %c0_130 = arith.constant 0 : index
    %c0_131 = arith.constant 0 : index
    %106 = vector.load %arg10[%c0_130, %c0_131] : memref<64x128xf32, #tpu.memory_space<vmem>>, vector<64x128xf32>
    %c1_132 = arith.constant 1 : index
    %c0_133 = arith.constant 0 : index
    %c0_134 = arith.constant 0 : index
    %107 = vector.load %arg4[%c1_132, %c0_133, %c0_134] : memref<9x128x128xbf16, #tpu.memory_space<vmem>>, vector<1x128x128xbf16>
    %108 = vector.shape_cast %107 : vector<1x128x128xbf16> to vector<128x128xbf16>
    %cst_135 = arith.constant dense<0.000000e+00> : vector<64x128xf32>
    %109 = tpu.matmul %105, %108, %cst_135 {dimension_numbers = #tpu.dot_dimension_numbers<[1], [0], [0], [1], [0, 0, 1, 1], [], []>} : vector<64x128xbf16>, vector<128x128xbf16>, vector<64x128xf32> -> vector<64x128xf32>
    %110 = arith.addf %106, %109 : vector<64x128xf32>
    %c0_136 = arith.constant 0 : index
    %c0_137 = arith.constant 0 : index
    %111 = vector.load %arg10[%c0_136, %c0_137] : memref<64x128xf32, #tpu.memory_space<vmem>>, vector<64x128xf32>
    tpu.vector_store %arg10[%c0_136, %c0_137], %110 {strides = array<i32>} : memref<64x128xf32, #tpu.memory_space<vmem>>, vector<64x128xf32>,
    %c0_138 = arith.constant 0 : index
    %c2_139 = arith.constant 2 : index
    %c0_140 = arith.constant 0 : index
    %112 = vector.load %arg9[%c0_138, %c2_139, %c0_140] : memref<10x10x128xbf16, #tpu.memory_space<vmem>>, vector<8x8x128xbf16>
    %113 = vector.shape_cast %112 : vector<8x8x128xbf16> to vector<64x128xbf16>
    %c0_141 = arith.constant 0 : index
    %c0_142 = arith.constant 0 : index
    %114 = vector.load %arg10[%c0_141, %c0_142] : memref<64x128xf32, #tpu.memory_space<vmem>>, vector<64x128xf32>
    %c2_143 = arith.constant 2 : index
    %c0_144 = arith.constant 0 : index
    %c0_145 = arith.constant 0 : index
    %115 = vector.load %arg4[%c2_143, %c0_144, %c0_145] : memref<9x128x128xbf16, #tpu.memory_space<vmem>>, vector<1x128x128xbf16>
    %116 = vector.shape_cast %115 : vector<1x128x128xbf16> to vector<128x128xbf16>
    %cst_146 = arith.constant dense<0.000000e+00> : vector<64x128xf32>
    %117 = tpu.matmul %113, %116, %cst_146 {dimension_numbers = #tpu.dot_dimension_numbers<[1], [0], [0], [1], [0, 0, 1, 1], [], []>} : vector<64x128xbf16>, vector<128x128xbf16>, vector<64x128xf32> -> vector<64x128xf32>
    %118 = arith.addf %114, %117 : vector<64x128xf32>
    %c0_147 = arith.constant 0 : index
    %c0_148 = arith.constant 0 : index
    %119 = vector.load %arg10[%c0_147, %c0_148] : memref<64x128xf32, #tpu.memory_space<vmem>>, vector<64x128xf32>
    tpu.vector_store %arg10[%c0_147, %c0_148], %118 {strides = array<i32>} : memref<64x128xf32, #tpu.memory_space<vmem>>, vector<64x128xf32>,
    %c1_149 = arith.constant 1 : index
    %c0_150 = arith.constant 0 : index
    %c0_151 = arith.constant 0 : index
    %120 = vector.load %arg9[%c1_149, %c0_150, %c0_151] : memref<10x10x128xbf16, #tpu.memory_space<vmem>>, vector<8x8x128xbf16>
    %121 = vector.shape_cast %120 : vector<8x8x128xbf16> to vector<64x128xbf16>
    %c0_152 = arith.constant 0 : index
    %c0_153 = arith.constant 0 : index
    %122 = vector.load %arg10[%c0_152, %c0_153] : memref<64x128xf32, #tpu.memory_space<vmem>>, vector<64x128xf32>
    %c3_154 = arith.constant 3 : index
    %c0_155 = arith.constant 0 : index
    %c0_156 = arith.constant 0 : index
    %123 = vector.load %arg4[%c3_154, %c0_155, %c0_156] : memref<9x128x128xbf16, #tpu.memory_space<vmem>>, vector<1x128x128xbf16>
    %124 = vector.shape_cast %123 : vector<1x128x128xbf16> to vector<128x128xbf16>
    %cst_157 = arith.constant dense<0.000000e+00> : vector<64x128xf32>
    %125 = tpu.matmul %121, %124, %cst_157 {dimension_numbers = #tpu.dot_dimension_numbers<[1], [0], [0], [1], [0, 0, 1, 1], [], []>} : vector<64x128xbf16>, vector<128x128xbf16>, vector<64x128xf32> -> vector<64x128xf32>
    %126 = arith.addf %122, %125 : vector<64x128xf32>
    %c0_158 = arith.constant 0 : index
    %c0_159 = arith.constant 0 : index
    %127 = vector.load %arg10[%c0_158, %c0_159] : memref<64x128xf32, #tpu.memory_space<vmem>>, vector<64x128xf32>
    tpu.vector_store %arg10[%c0_158, %c0_159], %126 {strides = array<i32>} : memref<64x128xf32, #tpu.memory_space<vmem>>, vector<64x128xf32>,
    %c1_160 = arith.constant 1 : index
    %c1_161 = arith.constant 1 : index
    %c0_162 = arith.constant 0 : index
    %128 = vector.load %arg9[%c1_160, %c1_161, %c0_162] : memref<10x10x128xbf16, #tpu.memory_space<vmem>>, vector<8x8x128xbf16>
    %129 = vector.shape_cast %128 : vector<8x8x128xbf16> to vector<64x128xbf16>
    %c0_163 = arith.constant 0 : index
    %c0_164 = arith.constant 0 : index
    %130 = vector.load %arg10[%c0_163, %c0_164] : memref<64x128xf32, #tpu.memory_space<vmem>>, vector<64x128xf32>
    %c4_165 = arith.constant 4 : index
    %c0_166 = arith.constant 0 : index
    %c0_167 = arith.constant 0 : index
    %131 = vector.load %arg4[%c4_165, %c0_166, %c0_167] : memref<9x128x128xbf16, #tpu.memory_space<vmem>>, vector<1x128x128xbf16>
    %132 = vector.shape_cast %131 : vector<1x128x128xbf16> to vector<128x128xbf16>
    %cst_168 = arith.constant dense<0.000000e+00> : vector<64x128xf32>
    %133 = tpu.matmul %129, %132, %cst_168 {dimension_numbers = #tpu.dot_dimension_numbers<[1], [0], [0], [1], [0, 0, 1, 1], [], []>} : vector<64x128xbf16>, vector<128x128xbf16>, vector<64x128xf32> -> vector<64x128xf32>
    %134 = arith.addf %130, %133 : vector<64x128xf32>
    %c0_169 = arith.constant 0 : index
    %c0_170 = arith.constant 0 : index
    %135 = vector.load %arg10[%c0_169, %c0_170] : memref<64x128xf32, #tpu.memory_space<vmem>>, vector<64x128xf32>
    tpu.vector_store %arg10[%c0_169, %c0_170], %134 {strides = array<i32>} : memref<64x128xf32, #tpu.memory_space<vmem>>, vector<64x128xf32>,
    %c1_171 = arith.constant 1 : index
    %c2_172 = arith.constant 2 : index
    %c0_173 = arith.constant 0 : index
    %136 = vector.load %arg9[%c1_171, %c2_172, %c0_173] : memref<10x10x128xbf16, #tpu.memory_space<vmem>>, vector<8x8x128xbf16>
    %137 = vector.shape_cast %136 : vector<8x8x128xbf16> to vector<64x128xbf16>
    %c0_174 = arith.constant 0 : index
    %c0_175 = arith.constant 0 : index
    %138 = vector.load %arg10[%c0_174, %c0_175] : memref<64x128xf32, #tpu.memory_space<vmem>>, vector<64x128xf32>
    %c5_176 = arith.constant 5 : index
    %c0_177 = arith.constant 0 : index
    %c0_178 = arith.constant 0 : index
    %139 = vector.load %arg4[%c5_176, %c0_177, %c0_178] : memref<9x128x128xbf16, #tpu.memory_space<vmem>>, vector<1x128x128xbf16>
    %140 = vector.shape_cast %139 : vector<1x128x128xbf16> to vector<128x128xbf16>
    %cst_179 = arith.constant dense<0.000000e+00> : vector<64x128xf32>
    %141 = tpu.matmul %137, %140, %cst_179 {dimension_numbers = #tpu.dot_dimension_numbers<[1], [0], [0], [1], [0, 0, 1, 1], [], []>} : vector<64x128xbf16>, vector<128x128xbf16>, vector<64x128xf32> -> vector<64x128xf32>
    %142 = arith.addf %138, %141 : vector<64x128xf32>
    %c0_180 = arith.constant 0 : index
    %c0_181 = arith.constant 0 : index
    %143 = vector.load %arg10[%c0_180, %c0_181] : memref<64x128xf32, #tpu.memory_space<vmem>>, vector<64x128xf32>
    tpu.vector_store %arg10[%c0_180, %c0_181], %142 {strides = array<i32>} : memref<64x128xf32, #tpu.memory_space<vmem>>, vector<64x128xf32>,
    %c2_182 = arith.constant 2 : index
    %c0_183 = arith.constant 0 : index
    %c0_184 = arith.constant 0 : index
    %144 = vector.load %arg9[%c2_182, %c0_183, %c0_184] : memref<10x10x128xbf16, #tpu.memory_space<vmem>>, vector<8x8x128xbf16>
    %145 = vector.shape_cast %144 : vector<8x8x128xbf16> to vector<64x128xbf16>
    %c0_185 = arith.constant 0 : index
    %c0_186 = arith.constant 0 : index
    %146 = vector.load %arg10[%c0_185, %c0_186] : memref<64x128xf32, #tpu.memory_space<vmem>>, vector<64x128xf32>
    %c6_187 = arith.constant 6 : index
    %c0_188 = arith.constant 0 : index
    %c0_189 = arith.constant 0 : index
    %147 = vector.load %arg4[%c6_187, %c0_188, %c0_189] : memref<9x128x128xbf16, #tpu.memory_space<vmem>>, vector<1x128x128xbf16>
    %148 = vector.shape_cast %147 : vector<1x128x128xbf16> to vector<128x128xbf16>
    %cst_190 = arith.constant dense<0.000000e+00> : vector<64x128xf32>
    %149 = tpu.matmul %145, %148, %cst_190 {dimension_numbers = #tpu.dot_dimension_numbers<[1], [0], [0], [1], [0, 0, 1, 1], [], []>} : vector<64x128xbf16>, vector<128x128xbf16>, vector<64x128xf32> -> vector<64x128xf32>
    %150 = arith.addf %146, %149 : vector<64x128xf32>
    %c0_191 = arith.constant 0 : index
    %c0_192 = arith.constant 0 : index
    %151 = vector.load %arg10[%c0_191, %c0_192] : memref<64x128xf32, #tpu.memory_space<vmem>>, vector<64x128xf32>
    tpu.vector_store %arg10[%c0_191, %c0_192], %150 {strides = array<i32>} : memref<64x128xf32, #tpu.memory_space<vmem>>, vector<64x128xf32>,
    %c2_193 = arith.constant 2 : index
    %c1_194 = arith.constant 1 : index
    %c0_195 = arith.constant 0 : index
    %152 = vector.load %arg9[%c2_193, %c1_194, %c0_195] : memref<10x10x128xbf16, #tpu.memory_space<vmem>>, vector<8x8x128xbf16>
    %153 = vector.shape_cast %152 : vector<8x8x128xbf16> to vector<64x128xbf16>
    %c0_196 = arith.constant 0 : index
    %c0_197 = arith.constant 0 : index
    %154 = vector.load %arg10[%c0_196, %c0_197] : memref<64x128xf32, #tpu.memory_space<vmem>>, vector<64x128xf32>
    %c7_198 = arith.constant 7 : index
    %c0_199 = arith.constant 0 : index
    %c0_200 = arith.constant 0 : index
    %155 = vector.load %arg4[%c7_198, %c0_199, %c0_200] : memref<9x128x128xbf16, #tpu.memory_space<vmem>>, vector<1x128x128xbf16>
    %156 = vector.shape_cast %155 : vector<1x128x128xbf16> to vector<128x128xbf16>
    %cst_201 = arith.constant dense<0.000000e+00> : vector<64x128xf32>
    %157 = tpu.matmul %153, %156, %cst_201 {dimension_numbers = #tpu.dot_dimension_numbers<[1], [0], [0], [1], [0, 0, 1, 1], [], []>} : vector<64x128xbf16>, vector<128x128xbf16>, vector<64x128xf32> -> vector<64x128xf32>
    %158 = arith.addf %154, %157 : vector<64x128xf32>
    %c0_202 = arith.constant 0 : index
    %c0_203 = arith.constant 0 : index
    %159 = vector.load %arg10[%c0_202, %c0_203] : memref<64x128xf32, #tpu.memory_space<vmem>>, vector<64x128xf32>
    tpu.vector_store %arg10[%c0_202, %c0_203], %158 {strides = array<i32>} : memref<64x128xf32, #tpu.memory_space<vmem>>, vector<64x128xf32>,
    %c2_204 = arith.constant 2 : index
    %c2_205 = arith.constant 2 : index
    %c0_206 = arith.constant 0 : index
    %160 = vector.load %arg9[%c2_204, %c2_205, %c0_206] : memref<10x10x128xbf16, #tpu.memory_space<vmem>>, vector<8x8x128xbf16>
    %161 = vector.shape_cast %160 : vector<8x8x128xbf16> to vector<64x128xbf16>
    %c0_207 = arith.constant 0 : index
    %c0_208 = arith.constant 0 : index
    %162 = vector.load %arg10[%c0_207, %c0_208] : memref<64x128xf32, #tpu.memory_space<vmem>>, vector<64x128xf32>
    %c8_209 = arith.constant 8 : index
    %c0_210 = arith.constant 0 : index
    %c0_211 = arith.constant 0 : index
    %163 = vector.load %arg4[%c8_209, %c0_210, %c0_211] : memref<9x128x128xbf16, #tpu.memory_space<vmem>>, vector<1x128x128xbf16>
    %164 = vector.shape_cast %163 : vector<1x128x128xbf16> to vector<128x128xbf16>
    %cst_212 = arith.constant dense<0.000000e+00> : vector<64x128xf32>
    %165 = tpu.matmul %161, %164, %cst_212 {dimension_numbers = #tpu.dot_dimension_numbers<[1], [0], [0], [1], [0, 0, 1, 1], [], []>} : vector<64x128xbf16>, vector<128x128xbf16>, vector<64x128xf32> -> vector<64x128xf32>
    %166 = arith.addf %162, %165 : vector<64x128xf32>
    %c0_213 = arith.constant 0 : index
    %c0_214 = arith.constant 0 : index
    %167 = vector.load %arg10[%c0_213, %c0_214] : memref<64x128xf32, #tpu.memory_space<vmem>>, vector<64x128xf32>
    tpu.vector_store %arg10[%c0_213, %c0_214], %166 {strides = array<i32>} : memref<64x128xf32, #tpu.memory_space<vmem>>, vector<64x128xf32>,
    %c0_215 = arith.constant 0 : index
    %c0_216 = arith.constant 0 : index
    %168 = vector.load %arg10[%c0_215, %c0_216] : memref<64x128xf32, #tpu.memory_space<vmem>>, vector<64x128xf32>
    %c0_217 = arith.constant 0 : index
    %c0_218 = arith.constant 0 : index
    %169 = vector.load %arg5[%c0_217, %c0_218] : memref<1x128xf32, #tpu.memory_space<vmem>>, vector<1x128xf32>
    %170 = vector.broadcast %169 : vector<1x128xf32> to vector<64x128xf32>
    %171 = arith.addf %168, %170 : vector<64x128xf32>
    %c3_219 = arith.constant 3 : index
    %c0_220 = arith.constant 0 : index
    %c0_221 = arith.constant 0 : index
    %c0_222 = arith.constant 0 : index
    %172 = vector.load %arg1[%c3_219, %c0_220, %c0_221, %c0_222] : memref<4x9x9x4xbf16, #tpu.memory_space<vmem>>, vector<1x8x8x4xbf16>
    %173 = vector.shape_cast %172 : vector<1x8x8x4xbf16> to vector<8x8x4xbf16>
    %174 = vector.shape_cast %173 : vector<8x8x4xbf16> to vector<64x4xbf16>
    %c0_223 = arith.constant 0 : index
    %c0_224 = arith.constant 0 : index
    %175 = vector.load %arg6[%c0_223, %c0_224] : memref<4x128xbf16, #tpu.memory_space<vmem>>, vector<4x128xbf16>
    %cst_225 = arith.constant dense<0.000000e+00> : vector<64x128xf32>
    %176 = tpu.matmul %174, %175, %cst_225 {dimension_numbers = #tpu.dot_dimension_numbers<[1], [0], [0], [1], [0, 0, 1, 1], [], []>} : vector<64x4xbf16>, vector<4x128xbf16>, vector<64x128xf32> -> vector<64x128xf32>
    %c0_226 = arith.constant 0 : index
    %c0_227 = arith.constant 0 : index
    %177 = vector.load %arg7[%c0_226, %c0_227] : memref<1x128xf32, #tpu.memory_space<vmem>>, vector<1x128xf32>
    %178 = vector.broadcast %177 : vector<1x128xf32> to vector<64x128xf32>
    %179 = arith.addf %176, %178 : vector<64x128xf32>
    %180 = arith.addf %171, %179 : vector<64x128xf32>
    %cst_228 = arith.constant 0.000000e+00 : f32
    %181 = vector.broadcast %cst_228 : f32 to vector<64x128xf32>
    %182 = arith.maximumf %180, %181 : vector<64x128xf32>
    %183 = vector.shape_cast %182 : vector<64x128xf32> to vector<1x8x8x128xf32>
    %c0_229 = arith.constant 0 : index
    %c0_230 = arith.constant 0 : index
    %c0_231 = arith.constant 0 : index
    %c0_232 = arith.constant 0 : index
    %184 = vector.load %arg8[%c0_229, %c0_230, %c0_231, %c0_232] : memref<1x8x8x128xf32, #tpu.memory_space<vmem>>, vector<1x8x8x128xf32>
    tpu.vector_store %arg8[%c0_229, %c0_230, %c0_231, %c0_232], %183 {strides = array<i32>} : memref<1x8x8x128xf32, #tpu.memory_space<vmem>>, vector<1x8x8x128xf32>,
    return
  }
  func.func @transform_0(%arg0: i32) -> (i32, i32, i32, i32) {
    %c0_i32 = arith.constant 0 : i32
    %c0_i32_0 = arith.constant 0 : i32
    %c0_i32_1 = arith.constant 0 : i32
    %c0_i32_2 = arith.constant 0 : i32
    return %arg0, %c0_i32, %c0_i32_0, %c0_i32_1 : i32, i32, i32, i32
  }
  func.func @transform_1(%arg0: i32) -> (i32, i32, i32) {
    %c0_i32 = arith.constant 0 : i32
    %c0_i32_0 = arith.constant 0 : i32
    %c0_i32_1 = arith.constant 0 : i32
    %c0_i32_2 = arith.constant 0 : i32
    return %c0_i32, %c0_i32_0, %c0_i32_1 : i32, i32, i32
  }
  func.func @transform_2(%arg0: i32) -> (i32, i32) {
    %c0_i32 = arith.constant 0 : i32
    %c0_i32_0 = arith.constant 0 : i32
    %c0_i32_1 = arith.constant 0 : i32
    return %c0_i32, %c0_i32_0 : i32, i32
  }
  func.func @transform_3(%arg0: i32) -> (i32, i32, i32) {
    %c0_i32 = arith.constant 0 : i32
    %c0_i32_0 = arith.constant 0 : i32
    %c0_i32_1 = arith.constant 0 : i32
    %c0_i32_2 = arith.constant 0 : i32
    return %c0_i32, %c0_i32_0, %c0_i32_1 : i32, i32, i32
  }
  func.func @transform_4(%arg0: i32) -> (i32, i32) {
    %c0_i32 = arith.constant 0 : i32
    %c0_i32_0 = arith.constant 0 : i32
    %c0_i32_1 = arith.constant 0 : i32
    return %c0_i32, %c0_i32_0 : i32, i32
  }
  func.func @transform_5(%arg0: i32) -> (i32, i32) {
    %c0_i32 = arith.constant 0 : i32
    %c0_i32_0 = arith.constant 0 : i32
    %c0_i32_1 = arith.constant 0 : i32
    return %c0_i32, %c0_i32_0 : i32, i32
  }
  func.func @transform_6(%arg0: i32) -> (i32, i32) {
    %c0_i32 = arith.constant 0 : i32
    %c0_i32_0 = arith.constant 0 : i32
    %c0_i32_1 = arith.constant 0 : i32
    return %c0_i32, %c0_i32_0 : i32, i32
  }
  func.func @transform_7(%arg0: i32) -> (i32, i32, i32, i32) {
    %c0_i32 = arith.constant 0 : i32
    %c0_i32_0 = arith.constant 0 : i32
    %c0_i32_1 = arith.constant 0 : i32
    %c0_i32_2 = arith.constant 0 : i32
    return %arg0, %c0_i32, %c0_i32_0, %c0_i32_1 : i32, i32, i32, i32
  }
}

</mosaic_0001>

<llo_original>
// kernel: tpu_custom_call.1
$region0: #{tpu_custom_call.1}
  #allocation0 [shape = 'u32[]', space=smem, size = 0x4, offset = 0x4, fixed_abs, tag = 'smem constant byte address 0x4 - core index']
  #allocation1 [shape = 'u32[144,128]{1,0:T(1,128)}', space=vmem, size = 0x12000, scoped, tag = 'internal scratch']
  #allocation2 [shape = 'bf16[10,10,128]{2,1,0:T(8,128)(2,1)}', space=vmem, size = 0xa000, scoped, tag = 'scratch operand']
  #allocation3 [shape = 'f32[64,128]{1,0:T(8,128)}', space=vmem, size = 0x8000, scoped, tag = 'scratch operand']
  %s0 = inlined_call_operand.vmem [shape: bf16[8,9,9,4], index: 0, kind: input, shape index: {}]
  %s1 = inlined_call_operand.vmem [shape: bf16[9,4,128], index: 1, kind: input, shape index: {}]
  %s2 = inlined_call_operand.vmem [shape: f32[1,128], index: 2, kind: input, shape index: {}]
  %s3 = inlined_call_operand.vmem [shape: bf16[9,128,128], index: 3, kind: input, shape index: {}]
  %s4 = inlined_call_operand.vmem [shape: f32[1,128], index: 4, kind: input, shape index: {}]
  %s5 = inlined_call_operand.vmem [shape: bf16[4,128], index: 5, kind: input, shape index: {}]
  %s6 = inlined_call_operand.vmem [shape: f32[1,128], index: 6, kind: input, shape index: {}]
  %s7 = inlined_call_operand.hbm [shape: f32[2,8,8,128], index: 7, kind: output, shape index: {}]
  %s8 = sld [smem:[#allocation0]]
  $region61: #{tpu_custom_call.1} parent=0
    _
  %s10 = ssub.s32 1, %s8
  %s11 = scalar_select 0, %s10, %s8
  $region1: #{tpu_custom_call.1} parent=0
    #allocation4 [shape = 'u8[65536]{0}', space=vmem, size = 0x10000, scoped, tag = 'output window, operand 0']
    #allocation5 [shape = 's32[2]{0}', space=sflag, size = 0x8, scoped, tag = 'scoped memory for tpu_custom_call.1']
    %12 = vsyncpa [#allocation5], 0
    %s13 = scalar_lea.sflag [#allocation5], 1
    %14 = vsyncpa %s13, 0
    loop: start=0, step=1, limit=4
    $region2: #{tpu_custom_call.1} parent=1 // loop_pre_header
      _
    $region3: #{tpu_custom_call.1} parent=1 // loop_header
      %s16 = sphi 0, %s20
      %p17 = scmp.ge.s32.totalorder %s16, 4
      %s26 = sphi 0, %s28
      %s29 = sphi 0, %s26
      %s30 = sphi 0, %s29
      %s46 = sphi 0, %s30
      %s50 = sphi 0, %s50
      %s52 = sphi 0, %s50
      %s53 = sphi 0, %s52
      %s67 = sphi 0, %s53
      %s71 = sphi 0, %s71
      %s73 = sphi 0, %s71
      %s74 = sphi 0, %s73
      %s88 = sphi 0, %s74
      %s92 = sphi 0, %s92
      %s94 = sphi 0, %s92
      %s95 = sphi 0, %s94
      %s109 = sphi 0, %s95
      %s113 = sphi 0, %s113
      %s115 = sphi 0, %s113
      %s116 = sphi 0, %s115
      %s130 = sphi 0, %s116
      %s134 = sphi 0, %s134
      %s136 = sphi 0, %s134
      %s137 = sphi 0, %s136
      %s151 = sphi 0, %s137
      %s155 = sphi 0, %s155
      %s157 = sphi 0, %s155
      %s158 = sphi 0, %s157
      %s172 = sphi 0, %s158
      %s178 = sphi 0, %s180
      %s181 = sphi 0, %s178
      %s182 = sphi 0, %s181
      %s198 = sphi 0, %s182
    $region4: #{tpu_custom_call.1} parent=1 // loop_header_branch
      %19 = sbr.rel (%p17) target = $region8
    $region5: #{tpu_custom_call.1} parent=1 // loop_body
      %s21 = ssub.s32 %s16, 1
      %s22 = ssub.s32 %s16, 2
      %s23 = sadd.s32 %s16, 1
      %s24 = ssub.s32 %s16, %s23
      %p25 = scmp.eq.s32.totalorder %s24, 0
      %s27 = sadd.s32 %s26, 1
      %s28 = scalar_select %p25, %s26, %s27
      %p31 = pneg %p25
      %p32 = scmp.eq.s32.totalorder %s16, 1
      %p33 = por %p31, %p32
      %p34 = scmp.ne.s32.totalorder %s26, %s29
      %p35 = scmp.eq.s32.totalorder %s16, 0
      %p36 = por %p34, %p35
      %p37 = scmp.ne.s32.totalorder %s26, %s29
      %p38 = scmp.eq.s32.totalorder %s21, 1
      %p39 = por %p37, %p38
      %p40 = scmp.ne.s32.totalorder %s29, %s30
      %p41 = scmp.eq.s32.totalorder %s21, 0
      %p42 = por %p40, %p41
      %p43 = scmp.ne.s32.totalorder %s29, %s30
      %p44 = scmp.eq.s32.totalorder %s22, 1
      %p45 = por %p43, %p44
      %p47 = scmp.ne.s32.totalorder %s30, %s46
      %p48 = scmp.eq.s32.totalorder %s22, 0
      %p49 = por %p47, %p48
      %s51 = sadd.s32 %s50, 1
      %p54 = scmp.eq.s32.totalorder %s16, 1
      %p55 = scmp.ne.s32.totalorder %s50, %s52
      %p56 = scmp.eq.s32.totalorder %s16, 0
      %p57 = por %p55, %p56
      %p58 = scmp.ne.s32.totalorder %s50, %s52
      %p59 = scmp.eq.s32.totalorder %s21, 1
      %p60 = por %p58, %p59
      %p61 = scmp.ne.s32.totalorder %s52, %s53
      %p62 = scmp.eq.s32.totalorder %s21, 0
      %p63 = por %p61, %p62
      %p64 = scmp.ne.s32.totalorder %s52, %s53
      %p65 = scmp.eq.s32.totalorder %s22, 1
      %p66 = por %p64, %p65
      %p68 = scmp.ne.s32.totalorder %s53, %s67
      %p69 = scmp.eq.s32.totalorder %s22, 0
      %p70 = por %p68, %p69
      %s72 = sadd.s32 %s71, 1
      %p75 = scmp.eq.s32.totalorder %s16, 1
      %p76 = scmp.ne.s32.totalorder %s71, %s73
      %p77 = scmp.eq.s32.totalorder %s16, 0
      %p78 = por %p76, %p77
      %p79 = scmp.ne.s32.totalorder %s71, %s73
      %p80 = scmp.eq.s32.totalorder %s21, 1
      %p81 = por %p79, %p80
      %p82 = scmp.ne.s32.totalorder %s73, %s74
      %p83 = scmp.eq.s32.totalorder %s21, 0
      %p84 = por %p82, %p83
      %p85 = scmp.ne.s32.totalorder %s73, %s74
      %p86 = scmp.eq.s32.totalorder %s22, 1
      %p87 = por %p85, %p86
      %p89 = scmp.ne.s32.totalorder %s74, %s88
      %p90 = scmp.eq.s32.totalorder %s22, 0
      %p91 = por %p89, %p90
      %s93 = sadd.s32 %s92, 1
      %p96 = scmp.eq.s32.totalorder %s16, 1
      %p97 = scmp.ne.s32.totalorder %s92, %s94
      %p98 = scmp.eq.s32.totalorder %s16, 0
      %p99 = por %p97, %p98
      %p100 = scmp.ne.s32.totalorder %s92, %s94
      %p101 = scmp.eq.s32.totalorder %s21, 1
      %p102 = por %p100, %p101
      %p103 = scmp.ne.s32.totalorder %s94, %s95
      %p104 = scmp.eq.s32.totalorder %s21, 0
      %p105 = por %p103, %p104
      %p106 = scmp.ne.s32.totalorder %s94, %s95
      %p107 = scmp.eq.s32.totalorder %s22, 1
      %p108 = por %p106, %p107
      %p110 = scmp.ne.s32.totalorder %s95, %s109
      %p111 = scmp.eq.s32.totalorder %s22, 0
      %p112 = por %p110, %p111
      %s114 = sadd.s32 %s113, 1
      %p117 = scmp.eq.s32.totalorder %s16, 1
      %p118 = scmp.ne.s32.totalorder %s113, %s115
      %p119 = scmp.eq.s32.totalorder %s16, 0
      %p120 = por %p118, %p119
      %p121 = scmp.ne.s32.totalorder %s113, %s115
      %p122 = scmp.eq.s32.totalorder %s21, 1
      %p123 = por %p121, %p122
      %p124 = scmp.ne.s32.totalorder %s115, %s116
      %p125 = scmp.eq.s32.totalorder %s21, 0
      %p126 = por %p124, %p125
      %p127 = scmp.ne.s32.totalorder %s115, %s116
      %p128 = scmp.eq.s32.totalorder %s22, 1
      %p129 = por %p127, %p128
      %p131 = scmp.ne.s32.totalorder %s116, %s130
      %p132 = scmp.eq.s32.totalorder %s22, 0
      %p133 = por %p131, %p132
      %s135 = sadd.s32 %s134, 1
      %p138 = scmp.eq.s32.totalorder %s16, 1
      %p139 = scmp.ne.s32.totalorder %s134, %s136
      %p140 = scmp.eq.s32.totalorder %s16, 0
      %p141 = por %p139, %p140
      %p142 = scmp.ne.s32.totalorder %s134, %s136
      %p143 = scmp.eq.s32.totalorder %s21, 1
      %p144 = por %p142, %p143
      %p145 = scmp.ne.s32.totalorder %s136, %s137
      %p146 = scmp.eq.s32.totalorder %s21, 0
      %p147 = por %p145, %p146
      %p148 = scmp.ne.s32.totalorder %s136, %s137
      %p149 = scmp.eq.s32.totalorder %s22, 1
      %p150 = por %p148, %p149
      %p152 = scmp.ne.s32.totalorder %s137, %s151
      %p153 = scmp.eq.s32.totalorder %s22, 0
      %p154 = por %p152, %p153
      %s156 = sadd.s32 %s155, 1
      %p159 = scmp.eq.s32.totalorder %s16, 1
      %p160 = scmp.ne.s32.totalorder %s155, %s157
      %p161 = scmp.eq.s32.totalorder %s16, 0
      %p162 = por %p160, %p161
      %p163 = scmp.ne.s32.totalorder %s155, %s157
      %p164 = scmp.eq.s32.totalorder %s21, 1
      %p165 = por %p163, %p164
      %p166 = scmp.ne.s32.totalorder %s157, %s158
      %p167 = scmp.eq.s32.totalorder %s21, 0
      %p168 = por %p166, %p167
      %p169 = scmp.ne.s32.totalorder %s157, %s158
      %p170 = scmp.eq.s32.totalorder %s22, 1
      %p171 = por %p169, %p170
      %p173 = scmp.ne.s32.totalorder %s158, %s172
      %p174 = scmp.eq.s32.totalorder %s22, 0
      %p175 = por %p173, %p174
      %s176 = ssub.s32 %s16, %s23
      %p177 = scmp.eq.s32.totalorder %s176, 0
      %s179 = sadd.s32 %s178, 1
      %s180 = scalar_select %p177, %s178, %s179
      %p183 = pneg %p177
      %p184 = scmp.eq.s32.totalorder %s16, 1
      %p185 = por %p183, %p184
      %p186 = scmp.ne.s32.totalorder %s178, %s181
      %p187 = scmp.eq.s32.totalorder %s16, 0
      %p188 = por %p186, %p187
      %p189 = scmp.ne.s32.totalorder %s178, %s181
      %p190 = scmp.eq.s32.totalorder %s21, 1
      %p191 = por %p189, %p190
      %p192 = scmp.ne.s32.totalorder %s181, %s182
      %p193 = scmp.eq.s32.totalorder %s21, 0
      %p194 = por %p192, %p193
      %p195 = scmp.ne.s32.totalorder %s181, %s182
      %p196 = scmp.eq.s32.totalorder %s22, 1
      %p197 = por %p195, %p196
      %p199 = scmp.ne.s32.totalorder %s182, %s198
      %p200 = scmp.eq.s32.totalorder %s22, 0
      %p201 = por %p199, %p200
      %p202 = scmp.le.s32.totalorder 1, %s16
      %p203 = scmp.lt.s32.totalorder %s16, 3
      %p204 = pnand %p202, %p203
      %p205 = pneg %p204
      // Predicated region
      $region9: #{tpu_custom_call.1} parent=5 // pred_check
        _
      $region10: #{tpu_custom_call.1} parent=5 // pred_check_branch
        %207 = sbr.rel (%p204) target = $region12
      $region11: #{tpu_custom_call.1} parent=5 // pred_region
        %s208 = ssub.s32 %s16, 1
        // Predicated region
        $region13: #{tpu_custom_call.1} parent=11 // pred_check
          %p209 = pneg %p63
        $region14: #{tpu_custom_call.1} parent=11 // pred_check_branch
          %211 = sbr.rel (%p209) target = $region16
        $region15: #{tpu_custom_call.1} parent=11 // pred_region
          _
        $region16: #{tpu_custom_call.1} parent=11 // pred_fallthru
          _
        // Predicated region
        $region17: #{tpu_custom_call.1} parent=11 // pred_check
          %p212 = pneg %p84
        $region18: #{tpu_custom_call.1} parent=11 // pred_check_branch
          %214 = sbr.rel (%p212) target = $region20
        $region19: #{tpu_custom_call.1} parent=11 // pred_region
          _
        $region20: #{tpu_custom_call.1} parent=11 // pred_fallthru
          _
        // Predicated region
        $region21: #{tpu_custom_call.1} parent=11 // pred_check
          %p215 = pneg %p105
        $region22: #{tpu_custom_call.1} parent=11 // pred_check_branch
          %217 = sbr.rel (%p215) target = $region24
        $region23: #{tpu_custom_call.1} parent=11 // pred_region
          _
        $region24: #{tpu_custom_call.1} parent=11 // pred_fallthru
          _
        // Predicated region
        $region25: #{tpu_custom_call.1} parent=11 // pred_check
          %p218 = pneg %p126
        $region26: #{tpu_custom_call.1} parent=11 // pred_check_branch
          %220 = sbr.rel (%p218) target = $region28
        $region27: #{tpu_custom_call.1} parent=11 // pred_region
          _
        $region28: #{tpu_custom_call.1} parent=11 // pred_fallthru
          _
        // Predicated region
        $region29: #{tpu_custom_call.1} parent=11 // pred_check
          %p221 = pneg %p147
        $region30: #{tpu_custom_call.1} parent=11 // pred_check_branch
          %223 = sbr.rel (%p221) target = $region32
        $region31: #{tpu_custom_call.1} parent=11 // pred_region
          _
        $region32: #{tpu_custom_call.1} parent=11 // pred_fallthru
          _
        // Predicated region
        $region33: #{tpu_custom_call.1} parent=11 // pred_check
          %p224 = pneg %p168
        $region34: #{tpu_custom_call.1} parent=11 // pred_check_branch
          %226 = sbr.rel (%p224) target = $region36
        $region35: #{tpu_custom_call.1} parent=11 // pred_region
          _
        $region36: #{tpu_custom_call.1} parent=11 // pred_fallthru
          _
      $region12: #{tpu_custom_call.1} parent=5 // pred_fallthru
        _
      %p227 = scmp.lt.s32.totalorder %s16, 2
      // Predicated region
      $region37: #{tpu_custom_call.1} parent=5 // pred_check
        %p228 = pneg %p227
      $region38: #{tpu_custom_call.1} parent=5 // pred_check_branch
        %230 = sbr.rel (%p228) target = $region40
      $region39: #{tpu_custom_call.1} parent=5 // pred_region
        // Predicated region
        $region41: #{tpu_custom_call.1} parent=39 // pred_check
          %p231 = pneg %p36
        $region42: #{tpu_custom_call.1} parent=39 // pred_check_branch
          %233 = sbr.rel (%p231) target = $region44
        $region43: #{tpu_custom_call.1} parent=39 // pred_region
          %s234 = smul.u32 4, %s16
          %p235 = scmp.lt.s32.totalorder %s234, 7
          %s236 = scalar_select %p235, %s234, 7
          %s237 = smul.addr %s236, 18
          %s238 = smul.addr %s237, 4
          %s239 = scalar_lea.vmem %s0, %s238
          %s240 = smul.u32 4, %s16
        $region44: #{tpu_custom_call.1} parent=39 // pred_fallthru
          _
      $region40: #{tpu_custom_call.1} parent=5 // pred_fallthru
        _
      %p241 = scmp.le.s32.totalorder 1, %s16
      %p242 = scmp.lt.s32.totalorder %s16, 3
      %p243 = pnand %p241, %p242
      %p244 = pneg %p243
      // Predicated region
      $region45: #{tpu_custom_call.1} parent=5 // pred_check
        _
      $region46: #{tpu_custom_call.1} parent=5 // pred_check_branch
        %246 = sbr.rel (%p243) target = $region48
      $region47: #{tpu_custom_call.1} parent=5 // pred_region
        %s247 = ssub.s32 %s16, 1
        %s248 = smul.u32 4, %s21
        %p249 = scmp.lt.s32.totalorder %s248, 7
        %s250 = scalar_select %p249, %s248, 7
        %s251 = smul.addr %s250, 18
        %s252 = smul.addr %s251, 4
        %s253 = scalar_lea.vmem %s0, %s252
        %p254 = pneg %p42
        %p255 = pneg %p39
        %p256 = pneg %p63
        %p257 = pneg %p60
        %p258 = pneg %p84
        %p259 = pneg %p81
        %p260 = pneg %p105
        %p261 = pneg %p102
        %p262 = pneg %p126
        %p263 = pneg %p123
        %p264 = pneg %p147
        %p265 = pneg %p144
        %p266 = pneg %p168
        %p267 = pneg %p165
        %p268 = pneg %p194
        %p269 = pneg %p191
        %s270 = sand.u32 %s181, 1
        %s271 = scalar_lea.sflag [#allocation5], %s270
        %s272 = sand.u32 %s181, 1
        %s273 = smul.addr %s272, 64
        %s274 = scalar_lea.vmem [#allocation4], %s273
        %s275 = smul.u32 4, %s21
        %p276 = scmp.lt.s32.totalorder %s275, 7
        %s277 = scalar_select %p276, %s275, 7
        %s278 = smul.addr %s277, 18
        %s279 = smul.addr %s278, 4
        %s280 = scalar_lea.vmem %s0, %s279
        %s281 = smul.u32 4, %s21
        %283 = vst [vmem:[#allocation3] sm:$0xff] 0.0
        %284 = vst [vmem:[#allocation3 + $0x8] sm:$0xff] 0.0
        %285 = vst [vmem:[#allocation3 + $0x10] sm:$0xff] 0.0
        %286 = vst [vmem:[#allocation3 + $0x18] sm:$0xff] 0.0
        %287 = vst [vmem:[#allocation3 + $0x20] sm:$0xff] 0.0
        %288 = vst [vmem:[#allocation3 + $0x28] sm:$0xff] 0.0
        %289 = vst [vmem:[#allocation3 + $0x30] sm:$0xff] 0.0
        %290 = vst [vmem:[#allocation3 + $0x38] sm:$0xff] 0.0
        %v291 = vld [vmem:[%s280] sm:$0xf]
        %v292 = vld [vmem:[%s280 + $0x8] sm:$0xf]
        %v293 = vld [vmem:[%s280 + $0x10] sm:$0xf]
        %v294 = vld [vmem:[%s280 + $0x18] sm:$0xf]
        %v295 = vld [vmem:[%s280 + $0x20] sm:$0xf]
        %v296 = vld [vmem:[%s280 + $0x28] sm:$0xf]
        %v297 = vld [vmem:[%s280 + $0x30] sm:$0xf]
        %v298 = vld [vmem:[%s280 + $0x38] sm:$0xf]
        %v299 = vld [vmem:[#allocation3] sm:$0xff]
        %v300 = vld [vmem:[#allocation3 + $0x8] sm:$0xff]
        %v301 = vld [vmem:[#allocation3 + $0x10] sm:$0xff]
        %v302 = vld [vmem:[#allocation3 + $0x18] sm:$0xff]
        %v303 = vld [vmem:[#allocation3 + $0x20] sm:$0xff]
        %v304 = vld [vmem:[#allocation3 + $0x28] sm:$0xff]
        %v305 = vld [vmem:[#allocation3 + $0x30] sm:$0xff]
        %v306 = vld [vmem:[#allocation3 + $0x38] sm:$0xff]
        %v307 = vld [vmem:[%s1] sm:$0x3]
        %v316 = vunpack.c.l.b16 %v291
        %v317 = vunpack.c.l.b16 %v292
        %v318 = vunpack.c.l.b16 %v293
        %v319 = vunpack.c.l.b16 %v294
        %v320 = vunpack.c.l.b16 %v295
        %v321 = vunpack.c.l.b16 %v296
        %v322 = vunpack.c.l.b16 %v297
        %v323 = vunpack.c.l.b16 %v298
        %v324 = vpack.c.b16 %v317, %v316
        %v325 = vpack.c.b16 %v319, %v318
        %v326 = vpack.c.b16 %v321, %v320
        %v327 = vpack.c.b16 %v323, %v322
        %vm328 = vcmask 31744
        %v330 = vsel %vm328, %v324, 0
        %v333 = vsel %vm328, %v325, 0
        %v336 = vsel %vm328, %v326, 0
        %v339 = vsel %vm328, %v327, 0
        %vm341 = vcmask 1041408
        %v343 = vsel %vm341, %v307, 0
        %345 = vmatprep.subr.bf16.mxu0 0
        %346 = vmatpush1.bf16.msra.mxu0 %v343
        %347 = vmatprep.subr.bf16.mxu0 0
        %348 = vmatpush1.bf16.msra.mxu0 0
        %349 = vmatprep.subr.bf16.mxu0 0
        %350 = vmatpush1.bf16.msra.mxu0 0
        %351 = vmatprep.subr.bf16.mxu0 0
        %352 = vmatpush1.bf16.msra.mxu0 0
        %353 = vmatprep.subr.bf16.mxu0 0
        %354 = vmatpush1.bf16.msra.mxu0 0
        %355 = vmatprep.subr.bf16.mxu0 0
        %356 = vmatpush1.bf16.msra.mxu0 0
        %357 = vmatprep.subr.bf16.mxu0 0
        %358 = vmatpush1.bf16.msra.mxu0 0
        %359 = vmatprep.subr.bf16.mxu0 0
        %360 = vmatpush1.bf16.msra.mxu0 0
        %361 = vmatprep.subr.bf16.mxu0 0
        %362 = vmatpush1.bf16.msra.mxu0 0
        %363 = vmatprep.subr.bf16.mxu0 0
        %364 = vmatpush1.bf16.msra.mxu0 0
        %365 = vmatprep.subr.bf16.mxu0 0
        %366 = vmatpush1.bf16.msra.mxu0 0
        %367 = vmatprep.subr.bf16.mxu0 0
        %368 = vmatpush1.bf16.msra.mxu0 0
        %369 = vmatprep.subr.bf16.mxu0 0
        %370 = vmatpush1.bf16.msra.mxu0 0
        %371 = vmatprep.subr.bf16.mxu0 0
        %372 = vmatpush1.bf16.msra.mxu0 0
        %373 = vmatprep.subr.bf16.mxu0 0
        %374 = vmatpush1.bf16.msra.mxu0 0
        %375 = vmatprep.subr.bf16.mxu0 0
        %376 = vmatpush1.bf16.msra.mxu0 0
        %377 = vmatprep.mubr.bf16.mxu0 0
        %378 = vmatmul.mubr.bf16.gmra.mrb[0].mxu0 %v330
        %v379 = vpop.f32.mrb[0].mxu0
        %v380 = vadd.f32 0.0, %v379
        %v381 = vpop.f32.mrb[0].mxu0
        %v382 = vpop.f32.mrb[0].mxu0
        %v383 = vadd.f32 0.0, %v382
        %v384 = vpop.f32.mrb[0].mxu0
        %385 = vmatprep.mubr.bf16.mxu0 0
        %386 = vmatmul.mubr.bf16.gmra.mrb[0].mxu0 %v333
        %v387 = vpop.f32.mrb[0].mxu0
        %v388 = vadd.f32 0.0, %v387
        %v389 = vpop.f32.mrb[0].mxu0
        %v390 = vpop.f32.mrb[0].mxu0
        %v391 = vadd.f32 0.0, %v390
        %v392 = vpop.f32.mrb[0].mxu0
        %393 = vmatprep.mubr.bf16.mxu0 0
        %394 = vmatmul.mubr.bf16.gmra.mrb[0].mxu0 %v336
        %v395 = vpop.f32.mrb[0].mxu0
        %v396 = vadd.f32 0.0, %v395
        %v397 = vpop.f32.mrb[0].mxu0
        %v398 = vpop.f32.mrb[0].mxu0
        %v399 = vadd.f32 0.0, %v398
        %v400 = vpop.f32.mrb[0].mxu0
        %401 = vmatprep.mubr.bf16.mxu0 0
        %402 = vmatmul.mubr.bf16.gmra.mrb[0].mxu0 %v339
        %v403 = vpop.f32.mrb[0].mxu0
        %v404 = vadd.f32 0.0, %v403
        %v405 = vpop.f32.mrb[0].mxu0
        %v406 = vpop.f32.mrb[0].mxu0
        %v407 = vadd.f32 0.0, %v406
        %v408 = vpop.f32.mrb[0].mxu0
        %409 = vdwg.mxu0
        %v410 = vadd.f32 %v299, %v380
        %v411 = vadd.f32 %v300, %v383
        %v412 = vadd.f32 %v301, %v388
        %v413 = vadd.f32 %v302, %v391
        %v414 = vadd.f32 %v303, %v396
        %v415 = vadd.f32 %v304, %v399
        %v416 = vadd.f32 %v305, %v404
        %v417 = vadd.f32 %v306, %v407
        %418 = vst [vmem:[#allocation3] sm:$0xff] %v410
        %419 = vst [vmem:[#allocation3 + $0x8] sm:$0xff] %v411
        %420 = vst [vmem:[#allocation3 + $0x10] sm:$0xff] %v412
        %421 = vst [vmem:[#allocation3 + $0x18] sm:$0xff] %v413
        %422 = vst [vmem:[#allocation3 + $0x20] sm:$0xff] %v414
        %423 = vst [vmem:[#allocation3 + $0x28] sm:$0xff] %v415
        %424 = vst [vmem:[#allocation3 + $0x30] sm:$0xff] %v416
        %425 = vst [vmem:[#allocation3 + $0x38] sm:$0xff] %v417
        %s426 = scalar_lea.vmem %s280, 72
        %v427 = vld [vmem:[%s426] sm:$0xf]
        %v428 = vld [vmem:[%s426 + $0x8] sm:$0xf]
        %v429 = vld [vmem:[%s426 + $0x10] sm:$0xf]
        %v430 = vld [vmem:[%s426 + $0x18] sm:$0xf]
        %v431 = vld [vmem:[%s426 + $0x20] sm:$0xf]
        %v432 = vld [vmem:[%s426 + $0x28] sm:$0xf]
        %v433 = vld [vmem:[%s426 + $0x30] sm:$0xf]
        %v434 = vld [vmem:[%s426 + $0x38] sm:$0xf]
        %v435 = vld [vmem:[#allocation3] sm:$0xff]
        %v436 = vld [vmem:[#allocation3 + $0x8] sm:$0xff]
        %v437 = vld [vmem:[#allocation3 + $0x10] sm:$0xff]
        %v438 = vld [vmem:[#allocation3 + $0x18] sm:$0xff]
        %v439 = vld [vmem:[#allocation3 + $0x20] sm:$0xff]
        %v440 = vld [vmem:[#allocation3 + $0x28] sm:$0xff]
        %v441 = vld [vmem:[#allocation3 + $0x30] sm:$0xff]
        %v442 = vld [vmem:[#allocation3 + $0x38] sm:$0xff]
        %s443 = scalar_lea.vmem %s1, 2
        %v444 = vld [vmem:[%s443] sm:$0x3]
        %v453 = vunpack.c.l.b16 %v427
        %v454 = vunpack.c.l.b16 %v428
        %v455 = vunpack.c.l.b16 %v429
        %v456 = vunpack.c.l.b16 %v430
        %v457 = vunpack.c.l.b16 %v431
        %v458 = vunpack.c.l.b16 %v432
        %v459 = vunpack.c.l.b16 %v433
        %v460 = vunpack.c.l.b16 %v434
        %v461 = vpack.c.b16 %v454, %v453
        %v462 = vpack.c.b16 %v456, %v455
        %v463 = vpack.c.b16 %v458, %v457
        %v464 = vpack.c.b16 %v460, %v459
        %v466 = vsel %vm328, %v461, 0
        %v469 = vsel %vm328, %v462, 0
        %v472 = vsel %vm328, %v463, 0
        %v475 = vsel %vm328, %v464, 0
        %v478 = vsel %vm341, %v444, 0
        %480 = vmatprep.subr.bf16.mxu0 0
        %481 = vmatpush1.bf16.msra.mxu0 %v478
        %482 = vmatprep.subr.bf16.mxu0 0
        %483 = vmatpush1.bf16.msra.mxu0 0
        %484 = vmatprep.subr.bf16.mxu0 0
        %485 = vmatpush1.bf16.msra.mxu0 0
        %486 = vmatprep.subr.bf16.mxu0 0
        %487 = vmatpush1.bf16.msra.mxu0 0
        %488 = vmatprep.subr.bf16.mxu0 0
        %489 = vmatpush1.bf16.msra.mxu0 0
        %490 = vmatprep.subr.bf16.mxu0 0
        %491 = vmatpush1.bf16.msra.mxu0 0
        %492 = vmatprep.subr.bf16.mxu0 0
        %493 = vmatpush1.bf16.msra.mxu0 0
        %494 = vmatprep.subr.bf16.mxu0 0
        %495 = vmatpush1.bf16.msra.mxu0 0
        %496 = vmatprep.subr.bf16.mxu0 0
        %497 = vmatpush1.bf16.msra.mxu0 0
        %498 = vmatprep.subr.bf16.mxu0 0
        %499 = vmatpush1.bf16.msra.mxu0 0
        %500 = vmatprep.subr.bf16.mxu0 0
        %501 = vmatpush1.bf16.msra.mxu0 0
        %502 = vmatprep.subr.bf16.mxu0 0
        %503 = vmatpush1.bf16.msra.mxu0 0
        %504 = vmatprep.subr.bf16.mxu0 0
        %505 = vmatpush1.bf16.msra.mxu0 0
        %506 = vmatprep.subr.bf16.mxu0 0
        %507 = vmatpush1.bf16.msra.mxu0 0
        %508 = vmatprep.subr.bf16.mxu0 0
        %509 = vmatpush1.bf16.msra.mxu0 0
        %510 = vmatprep.subr.bf16.mxu0 0
        %511 = vmatpush1.bf16.msra.mxu0 0
        %512 = vmatprep.mubr.bf16.mxu0 0
        %513 = vmatmul.mubr.bf16.gmra.mrb[0].mxu0 %v466
        %v514 = vpop.f32.mrb[0].mxu0
        %v515 = vadd.f32 0.0, %v514
        %v516 = vpop.f32.mrb[0].mxu0
        %v517 = vpop.f32.mrb[0].mxu0
        %v518 = vadd.f32 0.0, %v517
        %v519 = vpop.f32.mrb[0].mxu0
        %520 = vmatprep.mubr.bf16.mxu0 0
        %521 = vmatmul.mubr.bf16.gmra.mrb[0].mxu0 %v469
        %v522 = vpop.f32.mrb[0].mxu0
        %v523 = vadd.f32 0.0, %v522
        %v524 = vpop.f32.mrb[0].mxu0
        %v525 = vpop.f32.mrb[0].mxu0
        %v526 = vadd.f32 0.0, %v525
        %v527 = vpop.f32.mrb[0].mxu0
        %528 = vmatprep.mubr.bf16.mxu0 0
        %529 = vmatmul.mubr.bf16.gmra.mrb[0].mxu0 %v472
        %v530 = vpop.f32.mrb[0].mxu0
        %v531 = vadd.f32 0.0, %v530
        %v532 = vpop.f32.mrb[0].mxu0
        %v533 = vpop.f32.mrb[0].mxu0
        %v534 = vadd.f32 0.0, %v533
        %v535 = vpop.f32.mrb[0].mxu0
        %536 = vmatprep.mubr.bf16.mxu0 0
        %537 = vmatmul.mubr.bf16.gmra.mrb[0].mxu0 %v475
        %v538 = vpop.f32.mrb[0].mxu0
        %v539 = vadd.f32 0.0, %v538
        %v540 = vpop.f32.mrb[0].mxu0
        %v541 = vpop.f32.mrb[0].mxu0
        %v542 = vadd.f32 0.0, %v541
        %v543 = vpop.f32.mrb[0].mxu0
        %544 = vdwg.mxu0
        %v545 = vadd.f32 %v435, %v515
        %v546 = vadd.f32 %v436, %v518
        %v547 = vadd.f32 %v437, %v523
        %v548 = vadd.f32 %v438, %v526
        %v549 = vadd.f32 %v439, %v531
        %v550 = vadd.f32 %v440, %v534
        %v551 = vadd.f32 %v441, %v539
        %v552 = vadd.f32 %v442, %v542
        %553 = vst [vmem:[#allocation3] sm:$0xff] %v545
        %554 = vst [vmem:[#allocation3 + $0x8] sm:$0xff] %v546
        %555 = vst [vmem:[#allocation3 + $0x10] sm:$0xff] %v547
        %556 = vst [vmem:[#allocation3 + $0x18] sm:$0xff] %v548
        %557 = vst [vmem:[#allocation3 + $0x20] sm:$0xff] %v549
        %558 = vst [vmem:[#allocation3 + $0x28] sm:$0xff] %v550
        %559 = vst [vmem:[#allocation3 + $0x30] sm:$0xff] %v551
        %560 = vst [vmem:[#allocation3 + $0x38] sm:$0xff] %v552
        %v561 = vld [vmem:[%s280] sm:$0xf]
        %v562 = vld [vmem:[%s280 + $0x4] sm:$0x1]
        %v563 = vld [vmem:[%s280 + $0x8] sm:$0xf]
        %v564 = vld [vmem:[%s280 + $0xc] sm:$0x1]
        %v565 = vld [vmem:[%s280 + $0x10] sm:$0xf]
        %v566 = vld [vmem:[%s280 + $0x14] sm:$0x1]
        %v567 = vld [vmem:[%s280 + $0x18] sm:$0xf]
        %v568 = vld [vmem:[%s280 + $0x1c] sm:$0x1]
        %v569 = vld [vmem:[%s280 + $0x20] sm:$0xf]
        %v570 = vld [vmem:[%s280 + $0x24] sm:$0x1]
        %v571 = vld [vmem:[%s280 + $0x28] sm:$0xf]
        %v572 = vld [vmem:[%s280 + $0x2c] sm:$0x1]
        %v573 = vld [vmem:[%s280 + $0x30] sm:$0xf]
        %v574 = vld [vmem:[%s280 + $0x34] sm:$0x1]
        %v575 = vld [vmem:[%s280 + $0x38] sm:$0xf]
        %v576 = vld [vmem:[%s280 + $0x3c] sm:$0x1]
        %vm577 = vsmask.f32 3328
        %vm578 = vsmask.f32 7440
        %vm579 = vmor %vm577, %vm578
        %v581 = vshrl.u32 %v561, 16
        %v583 = vrot.slane %v581, 4
        %v584 = vshll.u32 %v561, 16
        %v586 = vrot.slane %v584, 5
        %v587 = vor.u32 %v583, %v586
        %v588 = vrot.slane %v587, 4
        %v590 = vshll.u32 %v562, 16
        %v592 = vrot.slane %v590, 5
        %v593 = vsel %vm579, %v588, %v592
        %v595 = vshrl.u32 %v563, 16
        %v597 = vrot.slane %v595, 4
        %v598 = vshll.u32 %v563, 16
        %v600 = vrot.slane %v598, 5
        %v601 = vor.u32 %v597, %v600
        %v602 = vrot.slane %v601, 4
        %v604 = vshll.u32 %v564, 16
        %v606 = vrot.slane %v604, 5
        %v607 = vsel %vm579, %v602, %v606
        %v609 = vshrl.u32 %v565, 16
        %v611 = vrot.slane %v609, 4
        %v612 = vshll.u32 %v565, 16
        %v614 = vrot.slane %v612, 5
        %v615 = vor.u32 %v611, %v614
        %v616 = vrot.slane %v615, 4
        %v618 = vshll.u32 %v566, 16
        %v620 = vrot.slane %v618, 5
        %v621 = vsel %vm579, %v616, %v620
        %v623 = vshrl.u32 %v567, 16
        %v625 = vrot.slane %v623, 4
        %v626 = vshll.u32 %v567, 16
        %v628 = vrot.slane %v626, 5
        %v629 = vor.u32 %v625, %v628
        %v630 = vrot.slane %v629, 4
        %v632 = vshll.u32 %v568, 16
        %v634 = vrot.slane %v632, 5
        %v635 = vsel %vm579, %v630, %v634
        %v637 = vshrl.u32 %v569, 16
        %v639 = vrot.slane %v637, 4
        %v640 = vshll.u32 %v569, 16
        %v642 = vrot.slane %v640, 5
        %v643 = vor.u32 %v639, %v642
        %v644 = vrot.slane %v643, 4
        %v646 = vshll.u32 %v570, 16
        %v648 = vrot.slane %v646, 5
        %v649 = vsel %vm579, %v644, %v648
        %v651 = vshrl.u32 %v571, 16
        %v653 = vrot.slane %v651, 4
        %v654 = vshll.u32 %v571, 16
        %v656 = vrot.slane %v654, 5
        %v657 = vor.u32 %v653, %v656
        %v658 = vrot.slane %v657, 4
        %v660 = vshll.u32 %v572, 16
        %v662 = vrot.slane %v660, 5
        %v663 = vsel %vm579, %v658, %v662
        %v665 = vshrl.u32 %v573, 16
        %v667 = vrot.slane %v665, 4
        %v668 = vshll.u32 %v573, 16
        %v670 = vrot.slane %v668, 5
        %v671 = vor.u32 %v667, %v670
        %v672 = vrot.slane %v671, 4
        %v674 = vshll.u32 %v574, 16
        %v676 = vrot.slane %v674, 5
        %v677 = vsel %vm579, %v672, %v676
        %v679 = vshrl.u32 %v575, 16
        %v681 = vrot.slane %v679, 4
        %v682 = vshll.u32 %v575, 16
        %v684 = vrot.slane %v682, 5
        %v685 = vor.u32 %v681, %v684
        %v686 = vrot.slane %v685, 4
        %v688 = vshll.u32 %v576, 16
        %v690 = vrot.slane %v688, 5
        %v691 = vsel %vm579, %v686, %v690
        %v692 = vld [vmem:[#allocation3] sm:$0xff]
        %v693 = vld [vmem:[#allocation3 + $0x8] sm:$0xff]
        %v694 = vld [vmem:[#allocation3 + $0x10] sm:$0xff]
        %v695 = vld [vmem:[#allocation3 + $0x18] sm:$0xff]
        %v696 = vld [vmem:[#allocation3 + $0x20] sm:$0xff]
        %v697 = vld [vmem:[#allocation3 + $0x28] sm:$0xff]
        %v698 = vld [vmem:[#allocation3 + $0x30] sm:$0xff]
        %v699 = vld [vmem:[#allocation3 + $0x38] sm:$0xff]
        %s700 = scalar_lea.vmem %s1, 4
        %v701 = vld [vmem:[%s700] sm:$0x3]
        %v702 = vunpack.c.l.b16 %v593
        %v703 = vunpack.c.l.b16 %v607
        %v704 = vunpack.c.l.b16 %v621
        %v705 = vunpack.c.l.b16 %v635
        %v706 = vunpack.c.l.b16 %v649
        %v707 = vunpack.c.l.b16 %v663
        %v708 = vunpack.c.l.b16 %v677
        %v709 = vunpack.c.l.b16 %v691
        %v710 = vpack.c.b16 %v703, %v702
        %v711 = vpack.c.b16 %v705, %v704
        %v712 = vpack.c.b16 %v707, %v706
        %v713 = vpack.c.b16 %v709, %v708
        %v715 = vsel %vm328, %v710, 0
        %v718 = vsel %vm328, %v711, 0
        %v721 = vsel %vm328, %v712, 0
        %v724 = vsel %vm328, %v713, 0
        %v727 = vsel %vm341, %v701, 0
        %729 = vmatprep.subr.bf16.mxu0 0
        %730 = vmatpush1.bf16.msra.mxu0 %v727
        %731 = vmatprep.subr.bf16.mxu0 0
        %732 = vmatpush1.bf16.msra.mxu0 0
        %733 = vmatprep.subr.bf16.mxu0 0
        %734 = vmatpush1.bf16.msra.mxu0 0
        %735 = vmatprep.subr.bf16.mxu0 0
        %736 = vmatpush1.bf16.msra.mxu0 0
        %737 = vmatprep.subr.bf16.mxu0 0
        %738 = vmatpush1.bf16.msra.mxu0 0
        %739 = vmatprep.subr.bf16.mxu0 0
        %740 = vmatpush1.bf16.msra.mxu0 0
        %741 = vmatprep.subr.bf16.mxu0 0
        %742 = vmatpush1.bf16.msra.mxu0 0
        %743 = vmatprep.subr.bf16.mxu0 0
        %744 = vmatpush1.bf16.msra.mxu0 0
        %745 = vmatprep.subr.bf16.mxu0 0
        %746 = vmatpush1.bf16.msra.mxu0 0
        %747 = vmatprep.subr.bf16.mxu0 0
        %748 = vmatpush1.bf16.msra.mxu0 0
        %749 = vmatprep.subr.bf16.mxu0 0
        %750 = vmatpush1.bf16.msra.mxu0 0
        %751 = vmatprep.subr.bf16.mxu0 0
        %752 = vmatpush1.bf16.msra.mxu0 0
        %753 = vmatprep.subr.bf16.mxu0 0
        %754 = vmatpush1.bf16.msra.mxu0 0
        %755 = vmatprep.subr.bf16.mxu0 0
        %756 = vmatpush1.bf16.msra.mxu0 0
        %757 = vmatprep.subr.bf16.mxu0 0
        %758 = vmatpush1.bf16.msra.mxu0 0
        %759 = vmatprep.subr.bf16.mxu0 0
        %760 = vmatpush1.bf16.msra.mxu0 0
        %761 = vmatprep.mubr.bf16.mxu0 0
        %762 = vmatmul.mubr.bf16.gmra.mrb[0].mxu0 %v715
        %v763 = vpop.f32.mrb[0].mxu0
        %v764 = vadd.f32 0.0, %v763
        %v765 = vpop.f32.mrb[0].mxu0
        %v766 = vpop.f32.mrb[0].mxu0
        %v767 = vadd.f32 0.0, %v766
        %v768 = vpop.f32.mrb[0].mxu0
        %769 = vmatprep.mubr.bf16.mxu0 0
        %770 = vmatmul.mubr.bf16.gmra.mrb[0].mxu0 %v718
        %v771 = vpop.f32.mrb[0].mxu0
        %v772 = vadd.f32 0.0, %v771
        %v773 = vpop.f32.mrb[0].mxu0
        %v774 = vpop.f32.mrb[0].mxu0
        %v775 = vadd.f32 0.0, %v774
        %v776 = vpop.f32.mrb[0].mxu0
        %777 = vmatprep.mubr.bf16.mxu0 0
        %778 = vmatmul.mubr.bf16.gmra.mrb[0].mxu0 %v721
        %v779 = vpop.f32.mrb[0].mxu0
        %v780 = vadd.f32 0.0, %v779
        %v781 = vpop.f32.mrb[0].mxu0
        %v782 = vpop.f32.mrb[0].mxu0
        %v783 = vadd.f32 0.0, %v782
        %v784 = vpop.f32.mrb[0].mxu0
        %785 = vmatprep.mubr.bf16.mxu0 0
        %786 = vmatmul.mubr.bf16.gmra.mrb[0].mxu0 %v724
        %v787 = vpop.f32.mrb[0].mxu0
        %v788 = vadd.f32 0.0, %v787
        %v789 = vpop.f32.mrb[0].mxu0
        %v790 = vpop.f32.mrb[0].mxu0
        %v791 = vadd.f32 0.0, %v790
        %v792 = vpop.f32.mrb[0].mxu0
        %793 = vdwg.mxu0
        %v794 = vadd.f32 %v692, %v764
        %v795 = vadd.f32 %v693, %v767
        %v796 = vadd.f32 %v694, %v772
        %v797 = vadd.f32 %v695, %v775
        %v798 = vadd.f32 %v696, %v780
        %v799 = vadd.f32 %v697, %v783
        %v800 = vadd.f32 %v698, %v788
        %v801 = vadd.f32 %v699, %v791
        %802 = vst [vmem:[#allocation3] sm:$0xff] %v794
        %803 = vst [vmem:[#allocation3 + $0x8] sm:$0xff] %v795
        %804 = vst [vmem:[#allocation3 + $0x10] sm:$0xff] %v796
        %805 = vst [vmem:[#allocation3 + $0x18] sm:$0xff] %v797
        %806 = vst [vmem:[#allocation3 + $0x20] sm:$0xff] %v798
        %807 = vst [vmem:[#allocation3 + $0x28] sm:$0xff] %v799
        %808 = vst [vmem:[#allocation3 + $0x30] sm:$0xff] %v800
        %809 = vst [vmem:[#allocation3 + $0x38] sm:$0xff] %v801
        %s810 = scalar_lea.vmem %s280, 144
        %v811 = vld [vmem:[%s810] sm:$0xf]
        %v812 = vld [vmem:[%s810 + $0x8] sm:$0xf]
        %v813 = vld [vmem:[%s810 + $0x10] sm:$0xf]
        %v814 = vld [vmem:[%s810 + $0x18] sm:$0xf]
        %v815 = vld [vmem:[%s810 + $0x20] sm:$0xf]
        %v816 = vld [vmem:[%s810 + $0x28] sm:$0xf]
        %v817 = vld [vmem:[%s810 + $0x30] sm:$0xf]
        %v818 = vld [vmem:[%s810 + $0x38] sm:$0xf]
        %v819 = vld [vmem:[#allocation3] sm:$0xff]
        %v820 = vld [vmem:[#allocation3 + $0x8] sm:$0xff]
        %v821 = vld [vmem:[#allocation3 + $0x10] sm:$0xff]
        %v822 = vld [vmem:[#allocation3 + $0x18] sm:$0xff]
        %v823 = vld [vmem:[#allocation3 + $0x20] sm:$0xff]
        %v824 = vld [vmem:[#allocation3 + $0x28] sm:$0xff]
        %v825 = vld [vmem:[#allocation3 + $0x30] sm:$0xff]
        %v826 = vld [vmem:[#allocation3 + $0x38] sm:$0xff]
        %s827 = scalar_lea.vmem %s1, 6
        %v828 = vld [vmem:[%s827] sm:$0x3]
        %v837 = vunpack.c.l.b16 %v811
        %v838 = vunpack.c.l.b16 %v812
        %v839 = vunpack.c.l.b16 %v813
        %v840 = vunpack.c.l.b16 %v814
        %v841 = vunpack.c.l.b16 %v815
        %v842 = vunpack.c.l.b16 %v816
        %v843 = vunpack.c.l.b16 %v817
        %v844 = vunpack.c.l.b16 %v818
        %v845 = vpack.c.b16 %v838, %v837
        %v846 = vpack.c.b16 %v840, %v839
        %v847 = vpack.c.b16 %v842, %v841
        %v848 = vpack.c.b16 %v844, %v843
        %v850 = vsel %vm328, %v845, 0
        %v853 = vsel %vm328, %v846, 0
        %v856 = vsel %vm328, %v847, 0
        %v859 = vsel %vm328, %v848, 0
        %v862 = vsel %vm341, %v828, 0
        %864 = vmatprep.subr.bf16.mxu0 0
        %865 = vmatpush1.bf16.msra.mxu0 %v862
        %866 = vmatprep.subr.bf16.mxu0 0
        %867 = vmatpush1.bf16.msra.mxu0 0
        %868 = vmatprep.subr.bf16.mxu0 0
        %869 = vmatpush1.bf16.msra.mxu0 0
        %870 = vmatprep.subr.bf16.mxu0 0
        %871 = vmatpush1.bf16.msra.mxu0 0
        %872 = vmatprep.subr.bf16.mxu0 0
        %873 = vmatpush1.bf16.msra.mxu0 0
        %874 = vmatprep.subr.bf16.mxu0 0
        %875 = vmatpush1.bf16.msra.mxu0 0
        %876 = vmatprep.subr.bf16.mxu0 0
        %877 = vmatpush1.bf16.msra.mxu0 0
        %878 = vmatprep.subr.bf16.mxu0 0
        %879 = vmatpush1.bf16.msra.mxu0 0
        %880 = vmatprep.subr.bf16.mxu0 0
        %881 = vmatpush1.bf16.msra.mxu0 0
        %882 = vmatprep.subr.bf16.mxu0 0
        %883 = vmatpush1.bf16.msra.mxu0 0
        %884 = vmatprep.subr.bf16.mxu0 0
        %885 = vmatpush1.bf16.msra.mxu0 0
        %886 = vmatprep.subr.bf16.mxu0 0
        %887 = vmatpush1.bf16.msra.mxu0 0
        %888 = vmatprep.subr.bf16.mxu0 0
        %889 = vmatpush1.bf16.msra.mxu0 0
        %890 = vmatprep.subr.bf16.mxu0 0
        %891 = vmatpush1.bf16.msra.mxu0 0
        %892 = vmatprep.subr.bf16.mxu0 0
        %893 = vmatpush1.bf16.msra.mxu0 0
        %894 = vmatprep.subr.bf16.mxu0 0
        %895 = vmatpush1.bf16.msra.mxu0 0
        %896 = vmatprep.mubr.bf16.mxu0 0
        %897 = vmatmul.mubr.bf16.gmra.mrb[0].mxu0 %v850
        %v898 = vpop.f32.mrb[0].mxu0
        %v899 = vadd.f32 0.0, %v898
        %v900 = vpop.f32.mrb[0].mxu0
        %v901 = vpop.f32.mrb[0].mxu0
        %v902 = vadd.f32 0.0, %v901
        %v903 = vpop.f32.mrb[0].mxu0
        %904 = vmatprep.mubr.bf16.mxu0 0
        %905 = vmatmul.mubr.bf16.gmra.mrb[0].mxu0 %v853
        %v906 = vpop.f32.mrb[0].mxu0
        %v907 = vadd.f32 0.0, %v906
        %v908 = vpop.f32.mrb[0].mxu0
        %v909 = vpop.f32.mrb[0].mxu0
        %v910 = vadd.f32 0.0, %v909
        %v911 = vpop.f32.mrb[0].mxu0
        %912 = vmatprep.mubr.bf16.mxu0 0
        %913 = vmatmul.mubr.bf16.gmra.mrb[0].mxu0 %v856
        %v914 = vpop.f32.mrb[0].mxu0
        %v915 = vadd.f32 0.0, %v914
        %v916 = vpop.f32.mrb[0].mxu0
        %v917 = vpop.f32.mrb[0].mxu0
        %v918 = vadd.f32 0.0, %v917
        %v919 = vpop.f32.mrb[0].mxu0
        %920 = vmatprep.mubr.bf16.mxu0 0
        %921 = vmatmul.mubr.bf16.gmra.mrb[0].mxu0 %v859
        %v922 = vpop.f32.mrb[0].mxu0
        %v923 = vadd.f32 0.0, %v922
        %v924 = vpop.f32.mrb[0].mxu0
        %v925 = vpop.f32.mrb[0].mxu0
        %v926 = vadd.f32 0.0, %v925
        %v927 = vpop.f32.mrb[0].mxu0
        %928 = vdwg.mxu0
        %v929 = vadd.f32 %v819, %v899
        %v930 = vadd.f32 %v820, %v902
        %v931 = vadd.f32 %v821, %v907
        %v932 = vadd.f32 %v822, %v910
        %v933 = vadd.f32 %v823, %v915
        %v934 = vadd.f32 %v824, %v918
        %v935 = vadd.f32 %v825, %v923
        %v936 = vadd.f32 %v826, %v926
        %937 = vst [vmem:[#allocation3] sm:$0xff] %v929
        %938 = vst [vmem:[#allocation3 + $0x8] sm:$0xff] %v930
        %939 = vst [vmem:[#allocation3 + $0x10] sm:$0xff] %v931
        %940 = vst [vmem:[#allocation3 + $0x18] sm:$0xff] %v932
        %941 = vst [vmem:[#allocation3 + $0x20] sm:$0xff] %v933
        %942 = vst [vmem:[#allocation3 + $0x28] sm:$0xff] %v934
        %943 = vst [vmem:[#allocation3 + $0x30] sm:$0xff] %v935
        %944 = vst [vmem:[#allocation3 + $0x38] sm:$0xff] %v936
        %s945 = scalar_lea.vmem %s280, 216
        %v946 = vld [vmem:[%s945] sm:$0xf]
        %v947 = vld [vmem:[%s945 + $0x8] sm:$0xf]
        %v948 = vld [vmem:[%s945 + $0x10] sm:$0xf]
        %v949 = vld [vmem:[%s945 + $0x18] sm:$0xf]
        %v950 = vld [vmem:[%s945 + $0x20] sm:$0xf]
        %v951 = vld [vmem:[%s945 + $0x28] sm:$0xf]
        %v952 = vld [vmem:[%s945 + $0x30] sm:$0xf]
        %v953 = vld [vmem:[%s945 + $0x38] sm:$0xf]
        %v954 = vld [vmem:[#allocation3] sm:$0xff]
        %v955 = vld [vmem:[#allocation3 + $0x8] sm:$0xff]
        %v956 = vld [vmem:[#allocation3 + $0x10] sm:$0xff]
        %v957 = vld [vmem:[#allocation3 + $0x18] sm:$0xff]
        %v958 = vld [vmem:[#allocation3 + $0x20] sm:$0xff]
        %v959 = vld [vmem:[#allocation3 + $0x28] sm:$0xff]
        %v960 = vld [vmem:[#allocation3 + $0x30] sm:$0xff]
        %v961 = vld [vmem:[#allocation3 + $0x38] sm:$0xff]
        %s962 = scalar_lea.vmem %s1, 8
        %v963 = vld [vmem:[%s962] sm:$0x3]
        %v972 = vunpack.c.l.b16 %v946
        %v973 = vunpack.c.l.b16 %v947
        %v974 = vunpack.c.l.b16 %v948
        %v975 = vunpack.c.l.b16 %v949
        %v976 = vunpack.c.l.b16 %v950
        %v977 = vunpack.c.l.b16 %v951
        %v978 = vunpack.c.l.b16 %v952
        %v979 = vunpack.c.l.b16 %v953
        %v980 = vpack.c.b16 %v973, %v972
        %v981 = vpack.c.b16 %v975, %v974
        %v982 = vpack.c.b16 %v977, %v976
        %v983 = vpack.c.b16 %v979, %v978
        %v985 = vsel %vm328, %v980, 0
        %v988 = vsel %vm328, %v981, 0
        %v991 = vsel %vm328, %v982, 0
        %v994 = vsel %vm328, %v983, 0
        %v997 = vsel %vm341, %v963, 0
        %999 = vmatprep.subr.bf16.mxu0 0
        %1000 = vmatpush1.bf16.msra.mxu0 %v997
        %1001 = vmatprep.subr.bf16.mxu0 0
        %1002 = vmatpush1.bf16.msra.mxu0 0
        %1003 = vmatprep.subr.bf16.mxu0 0
        %1004 = vmatpush1.bf16.msra.mxu0 0
        %1005 = vmatprep.subr.bf16.mxu0 0
        %1006 = vmatpush1.bf16.msra.mxu0 0
        %1007 = vmatprep.subr.bf16.mxu0 0
        %1008 = vmatpush1.bf16.msra.mxu0 0
        %1009 = vmatprep.subr.bf16.mxu0 0
        %1010 = vmatpush1.bf16.msra.mxu0 0
        %1011 = vmatprep.subr.bf16.mxu0 0
        %1012 = vmatpush1.bf16.msra.mxu0 0
        %1013 = vmatprep.subr.bf16.mxu0 0
        %1014 = vmatpush1.bf16.msra.mxu0 0
        %1015 = vmatprep.subr.bf16.mxu0 0
        %1016 = vmatpush1.bf16.msra.mxu0 0
        %1017 = vmatprep.subr.bf16.mxu0 0
        %1018 = vmatpush1.bf16.msra.mxu0 0
        %1019 = vmatprep.subr.bf16.mxu0 0
        %1020 = vmatpush1.bf16.msra.mxu0 0
        %1021 = vmatprep.subr.bf16.mxu0 0
        %1022 = vmatpush1.bf16.msra.mxu0 0
        %1023 = vmatprep.subr.bf16.mxu0 0
        %1024 = vmatpush1.bf16.msra.mxu0 0
        %1025 = vmatprep.subr.bf16.mxu0 0
        %1026 = vmatpush1.bf16.msra.mxu0 0
        %1027 = vmatprep.subr.bf16.mxu0 0
        %1028 = vmatpush1.bf16.msra.mxu0 0
        %1029 = vmatprep.subr.bf16.mxu0 0
        %1030 = vmatpush1.bf16.msra.mxu0 0
        %1031 = vmatprep.mubr.bf16.mxu0 0
        %1032 = vmatmul.mubr.bf16.gmra.mrb[0].mxu0 %v985
        %v1033 = vpop.f32.mrb[0].mxu0
        %v1034 = vadd.f32 0.0, %v1033
        %v1035 = vpop.f32.mrb[0].mxu0
        %v1036 = vpop.f32.mrb[0].mxu0
        %v1037 = vadd.f32 0.0, %v1036
        %v1038 = vpop.f32.mrb[0].mxu0
        %1039 = vmatprep.mubr.bf16.mxu0 0
        %1040 = vmatmul.mubr.bf16.gmra.mrb[0].mxu0 %v988
        %v1041 = vpop.f32.mrb[0].mxu0
        %v1042 = vadd.f32 0.0, %v1041
        %v1043 = vpop.f32.mrb[0].mxu0
        %v1044 = vpop.f32.mrb[0].mxu0
        %v1045 = vadd.f32 0.0, %v1044
        %v1046 = vpop.f32.mrb[0].mxu0
        %1047 = vmatprep.mubr.bf16.mxu0 0
        %1048 = vmatmul.mubr.bf16.gmra.mrb[0].mxu0 %v991
        %v1049 = vpop.f32.mrb[0].mxu0
        %v1050 = vadd.f32 0.0, %v1049
        %v1051 = vpop.f32.mrb[0].mxu0
        %v1052 = vpop.f32.mrb[0].mxu0
        %v1053 = vadd.f32 0.0, %v1052
        %v1054 = vpop.f32.mrb[0].mxu0
        %1055 = vmatprep.mubr.bf16.mxu0 0
        %1056 = vmatmul.mubr.bf16.gmra.mrb[0].mxu0 %v994
        %v1057 = vpop.f32.mrb[0].mxu0
        %v1058 = vadd.f32 0.0, %v1057
        %v1059 = vpop.f32.mrb[0].mxu0
        %v1060 = vpop.f32.mrb[0].mxu0
        %v1061 = vadd.f32 0.0, %v1060
        %v1062 = vpop.f32.mrb[0].mxu0
        %1063 = vdwg.mxu0
        %v1064 = vadd.f32 %v954, %v1034
        %v1065 = vadd.f32 %v955, %v1037
        %v1066 = vadd.f32 %v956, %v1042
        %v1067 = vadd.f32 %v957, %v1045
        %v1068 = vadd.f32 %v958, %v1050
        %v1069 = vadd.f32 %v959, %v1053
        %v1070 = vadd.f32 %v960, %v1058
        %v1071 = vadd.f32 %v961, %v1061
        %1072 = vst [vmem:[#allocation3] sm:$0xff] %v1064
        %1073 = vst [vmem:[#allocation3 + $0x8] sm:$0xff] %v1065
        %1074 = vst [vmem:[#allocation3 + $0x10] sm:$0xff] %v1066
        %1075 = vst [vmem:[#allocation3 + $0x18] sm:$0xff] %v1067
        %1076 = vst [vmem:[#allocation3 + $0x20] sm:$0xff] %v1068
        %1077 = vst [vmem:[#allocation3 + $0x28] sm:$0xff] %v1069
        %1078 = vst [vmem:[#allocation3 + $0x30] sm:$0xff] %v1070
        %1079 = vst [vmem:[#allocation3 + $0x38] sm:$0xff] %v1071
        %v1080 = vld [vmem:[%s810] sm:$0xf]
        %v1081 = vld [vmem:[%s810 + $0x4] sm:$0x1]
        %v1082 = vld [vmem:[%s810 + $0x8] sm:$0xf]
        %v1083 = vld [vmem:[%s810 + $0xc] sm:$0x1]
        %v1084 = vld [vmem:[%s810 + $0x10] sm:$0xf]
        %v1085 = vld [vmem:[%s810 + $0x14] sm:$0x1]
        %v1086 = vld [vmem:[%s810 + $0x18] sm:$0xf]
        %v1087 = vld [vmem:[%s810 + $0x1c] sm:$0x1]
        %v1088 = vld [vmem:[%s810 + $0x20] sm:$0xf]
        %v1089 = vld [vmem:[%s810 + $0x24] sm:$0x1]
        %v1090 = vld [vmem:[%s810 + $0x28] sm:$0xf]
        %v1091 = vld [vmem:[%s810 + $0x2c] sm:$0x1]
        %v1092 = vld [vmem:[%s810 + $0x30] sm:$0xf]
        %v1093 = vld [vmem:[%s810 + $0x34] sm:$0x1]
        %v1094 = vld [vmem:[%s810 + $0x38] sm:$0xf]
        %v1095 = vld [vmem:[%s810 + $0x3c] sm:$0x1]
        %v1097 = vshrl.u32 %v1080, 16
        %v1099 = vrot.slane %v1097, 4
        %v1100 = vshll.u32 %v1080, 16
        %v1102 = vrot.slane %v1100, 5
        %v1103 = vor.u32 %v1099, %v1102
        %v1104 = vrot.slane %v1103, 4
        %v1106 = vshll.u32 %v1081, 16
        %v1108 = vrot.slane %v1106, 5
        %v1109 = vsel %vm579, %v1104, %v1108
        %v1111 = vshrl.u32 %v1082, 16
        %v1113 = vrot.slane %v1111, 4
        %v1114 = vshll.u32 %v1082, 16
        %v1116 = vrot.slane %v1114, 5
        %v1117 = vor.u32 %v1113, %v1116
        %v1118 = vrot.slane %v1117, 4
        %v1120 = vshll.u32 %v1083, 16
        %v1122 = vrot.slane %v1120, 5
        %v1123 = vsel %vm579, %v1118, %v1122
        %v1125 = vshrl.u32 %v1084, 16
        %v1127 = vrot.slane %v1125, 4
        %v1128 = vshll.u32 %v1084, 16
        %v1130 = vrot.slane %v1128, 5
        %v1131 = vor.u32 %v1127, %v1130
        %v1132 = vrot.slane %v1131, 4
        %v1134 = vshll.u32 %v1085, 16
        %v1136 = vrot.slane %v1134, 5
        %v1137 = vsel %vm579, %v1132, %v1136
        %v1139 = vshrl.u32 %v1086, 16
        %v1141 = vrot.slane %v1139, 4
        %v1142 = vshll.u32 %v1086, 16
        %v1144 = vrot.slane %v1142, 5
        %v1145 = vor.u32 %v1141, %v1144
        %v1146 = vrot.slane %v1145, 4
        %v1148 = vshll.u32 %v1087, 16
        %v1150 = vrot.slane %v1148, 5
        %v1151 = vsel %vm579, %v1146, %v1150
        %v1153 = vshrl.u32 %v1088, 16
        %v1155 = vrot.slane %v1153, 4
        %v1156 = vshll.u32 %v1088, 16
        %v1158 = vrot.slane %v1156, 5
        %v1159 = vor.u32 %v1155, %v1158
        %v1160 = vrot.slane %v1159, 4
        %v1162 = vshll.u32 %v1089, 16
        %v1164 = vrot.slane %v1162, 5
        %v1165 = vsel %vm579, %v1160, %v1164
        %v1167 = vshrl.u32 %v1090, 16
        %v1169 = vrot.slane %v1167, 4
        %v1170 = vshll.u32 %v1090, 16
        %v1172 = vrot.slane %v1170, 5
        %v1173 = vor.u32 %v1169, %v1172
        %v1174 = vrot.slane %v1173, 4
        %v1176 = vshll.u32 %v1091, 16
        %v1178 = vrot.slane %v1176, 5
        %v1179 = vsel %vm579, %v1174, %v1178
        %v1181 = vshrl.u32 %v1092, 16
        %v1183 = vrot.slane %v1181, 4
        %v1184 = vshll.u32 %v1092, 16
        %v1186 = vrot.slane %v1184, 5
        %v1187 = vor.u32 %v1183, %v1186
        %v1188 = vrot.slane %v1187, 4
        %v1190 = vshll.u32 %v1093, 16
        %v1192 = vrot.slane %v1190, 5
        %v1193 = vsel %vm579, %v1188, %v1192
        %v1195 = vshrl.u32 %v1094, 16
        %v1197 = vrot.slane %v1195, 4
        %v1198 = vshll.u32 %v1094, 16
        %v1200 = vrot.slane %v1198, 5
        %v1201 = vor.u32 %v1197, %v1200
        %v1202 = vrot.slane %v1201, 4
        %v1204 = vshll.u32 %v1095, 16
        %v1206 = vrot.slane %v1204, 5
        %v1207 = vsel %vm579, %v1202, %v1206
        %v1208 = vld [vmem:[#allocation3] sm:$0xff]
        %v1209 = vld [vmem:[#allocation3 + $0x8] sm:$0xff]
        %v1210 = vld [vmem:[#allocation3 + $0x10] sm:$0xff]
        %v1211 = vld [vmem:[#allocation3 + $0x18] sm:$0xff]
        %v1212 = vld [vmem:[#allocation3 + $0x20] sm:$0xff]
        %v1213 = vld [vmem:[#allocation3 + $0x28] sm:$0xff]
        %v1214 = vld [vmem:[#allocation3 + $0x30] sm:$0xff]
        %v1215 = vld [vmem:[#allocation3 + $0x38] sm:$0xff]
        %s1216 = scalar_lea.vmem %s1, 10
        %v1217 = vld [vmem:[%s1216] sm:$0x3]
        %v1218 = vunpack.c.l.b16 %v1109
        %v1219 = vunpack.c.l.b16 %v1123
        %v1220 = vunpack.c.l.b16 %v1137
        %v1221 = vunpack.c.l.b16 %v1151
        %v1222 = vunpack.c.l.b16 %v1165
        %v1223 = vunpack.c.l.b16 %v1179
        %v1224 = vunpack.c.l.b16 %v1193
        %v1225 = vunpack.c.l.b16 %v1207
        %v1226 = vpack.c.b16 %v1219, %v1218
        %v1227 = vpack.c.b16 %v1221, %v1220
        %v1228 = vpack.c.b16 %v1223, %v1222
        %v1229 = vpack.c.b16 %v1225, %v1224
        %v1231 = vsel %vm328, %v1226, 0
        %v1234 = vsel %vm328, %v1227, 0
        %v1237 = vsel %vm328, %v1228, 0
        %v1240 = vsel %vm328, %v1229, 0
        %v1243 = vsel %vm341, %v1217, 0
        %1245 = vmatprep.subr.bf16.mxu0 0
        %1246 = vmatpush1.bf16.msra.mxu0 %v1243
        %1247 = vmatprep.subr.bf16.mxu0 0
        %1248 = vmatpush1.bf16.msra.mxu0 0
        %1249 = vmatprep.subr.bf16.mxu0 0
        %1250 = vmatpush1.bf16.msra.mxu0 0
        %1251 = vmatprep.subr.bf16.mxu0 0
        %1252 = vmatpush1.bf16.msra.mxu0 0
        %1253 = vmatprep.subr.bf16.mxu0 0
        %1254 = vmatpush1.bf16.msra.mxu0 0
        %1255 = vmatprep.subr.bf16.mxu0 0
        %1256 = vmatpush1.bf16.msra.mxu0 0
        %1257 = vmatprep.subr.bf16.mxu0 0
        %1258 = vmatpush1.bf16.msra.mxu0 0
        %1259 = vmatprep.subr.bf16.mxu0 0
        %1260 = vmatpush1.bf16.msra.mxu0 0
        %1261 = vmatprep.subr.bf16.mxu0 0
        %1262 = vmatpush1.bf16.msra.mxu0 0
        %1263 = vmatprep.subr.bf16.mxu0 0
        %1264 = vmatpush1.bf16.msra.mxu0 0
        %1265 = vmatprep.subr.bf16.mxu0 0
        %1266 = vmatpush1.bf16.msra.mxu0 0
        %1267 = vmatprep.subr.bf16.mxu0 0
        %1268 = vmatpush1.bf16.msra.mxu0 0
        %1269 = vmatprep.subr.bf16.mxu0 0
        %1270 = vmatpush1.bf16.msra.mxu0 0
        %1271 = vmatprep.subr.bf16.mxu0 0
        %1272 = vmatpush1.bf16.msra.mxu0 0
        %1273 = vmatprep.subr.bf16.mxu0 0
        %1274 = vmatpush1.bf16.msra.mxu0 0
        %1275 = vmatprep.subr.bf16.mxu0 0
        %1276 = vmatpush1.bf16.msra.mxu0 0
        %1277 = vmatprep.mubr.bf16.mxu0 0
        %1278 = vmatmul.mubr.bf16.gmra.mrb[0].mxu0 %v1231
        %v1279 = vpop.f32.mrb[0].mxu0
        %v1280 = vadd.f32 0.0, %v1279
        %v1281 = vpop.f32.mrb[0].mxu0
        %v1282 = vpop.f32.mrb[0].mxu0
        %v1283 = vadd.f32 0.0, %v1282
        %v1284 = vpop.f32.mrb[0].mxu0
        %1285 = vmatprep.mubr.bf16.mxu0 0
        %1286 = vmatmul.mubr.bf16.gmra.mrb[0].mxu0 %v1234
        %v1287 = vpop.f32.mrb[0].mxu0
        %v1288 = vadd.f32 0.0, %v1287
        %v1289 = vpop.f32.mrb[0].mxu0
        %v1290 = vpop.f32.mrb[0].mxu0
        %v1291 = vadd.f32 0.0, %v1290
        %v1292 = vpop.f32.mrb[0].mxu0
        %1293 = vmatprep.mubr.bf16.mxu0 0
        %1294 = vmatmul.mubr.bf16.gmra.mrb[0].mxu0 %v1237
        %v1295 = vpop.f32.mrb[0].mxu0
        %v1296 = vadd.f32 0.0, %v1295
        %v1297 = vpop.f32.mrb[0].mxu0
        %v1298 = vpop.f32.mrb[0].mxu0
        %v1299 = vadd.f32 0.0, %v1298
        %v1300 = vpop.f32.mrb[0].mxu0
        %1301 = vmatprep.mubr.bf16.mxu0 0
        %1302 = vmatmul.mubr.bf16.gmra.mrb[0].mxu0 %v1240
        %v1303 = vpop.f32.mrb[0].mxu0
        %v1304 = vadd.f32 0.0, %v1303
        %v1305 = vpop.f32.mrb[0].mxu0
        %v1306 = vpop.f32.mrb[0].mxu0
        %v1307 = vadd.f32 0.0, %v1306
        %v1308 = vpop.f32.mrb[0].mxu0
        %1309 = vdwg.mxu0
        %v1310 = vadd.f32 %v1208, %v1280
        %v1311 = vadd.f32 %v1209, %v1283
        %v1312 = vadd.f32 %v1210, %v1288
        %v1313 = vadd.f32 %v1211, %v1291
        %v1314 = vadd.f32 %v1212, %v1296
        %v1315 = vadd.f32 %v1213, %v1299
        %v1316 = vadd.f32 %v1214, %v1304
        %v1317 = vadd.f32 %v1215, %v1307
        %1318 = vst [vmem:[#allocation3] sm:$0xff] %v1310
        %1319 = vst [vmem:[#allocation3 + $0x8] sm:$0xff] %v1311
        %1320 = vst [vmem:[#allocation3 + $0x10] sm:$0xff] %v1312
        %1321 = vst [vmem:[#allocation3 + $0x18] sm:$0xff] %v1313
        %1322 = vst [vmem:[#allocation3 + $0x20] sm:$0xff] %v1314
        %1323 = vst [vmem:[#allocation3 + $0x28] sm:$0xff] %v1315
        %1324 = vst [vmem:[#allocation3 + $0x30] sm:$0xff] %v1316
        %1325 = vst [vmem:[#allocation3 + $0x38] sm:$0xff] %v1317
        %s1326 = scalar_lea.vmem %s280, 8
        %v1327 = vld [vmem:[%s1326] sm:$0xf]
        %v1328 = vld [vmem:[%s1326 + $0x8] sm:$0xf]
        %v1329 = vld [vmem:[%s1326 + $0x10] sm:$0xf]
        %v1330 = vld [vmem:[%s1326 + $0x18] sm:$0xf]
        %v1331 = vld [vmem:[%s1326 + $0x20] sm:$0xf]
        %v1332 = vld [vmem:[%s1326 + $0x28] sm:$0xf]
        %v1333 = vld [vmem:[%s1326 + $0x30] sm:$0xf]
        %v1334 = vld [vmem:[%s1326 + $0x38] sm:$0xf]
        %v1335 = vld [vmem:[#allocation3] sm:$0xff]
        %v1336 = vld [vmem:[#allocation3 + $0x8] sm:$0xff]
        %v1337 = vld [vmem:[#allocation3 + $0x10] sm:$0xff]
        %v1338 = vld [vmem:[#allocation3 + $0x18] sm:$0xff]
        %v1339 = vld [vmem:[#allocation3 + $0x20] sm:$0xff]
        %v1340 = vld [vmem:[#allocation3 + $0x28] sm:$0xff]
        %v1341 = vld [vmem:[#allocation3 + $0x30] sm:$0xff]
        %v1342 = vld [vmem:[#allocation3 + $0x38] sm:$0xff]
        %s1343 = scalar_lea.vmem %s1, 12
        %v1344 = vld [vmem:[%s1343] sm:$0x3]
        %v1353 = vunpack.c.l.b16 %v1327
        %v1354 = vunpack.c.l.b16 %v1328
        %v1355 = vunpack.c.l.b16 %v1329
        %v1356 = vunpack.c.l.b16 %v1330
        %v1357 = vunpack.c.l.b16 %v1331
        %v1358 = vunpack.c.l.b16 %v1332
        %v1359 = vunpack.c.l.b16 %v1333
        %v1360 = vunpack.c.l.b16 %v1334
        %v1361 = vpack.c.b16 %v1354, %v1353
        %v1362 = vpack.c.b16 %v1356, %v1355
        %v1363 = vpack.c.b16 %v1358, %v1357
        %v1364 = vpack.c.b16 %v1360, %v1359
        %v1366 = vsel %vm328, %v1361, 0
        %v1369 = vsel %vm328, %v1362, 0
        %v1372 = vsel %vm328, %v1363, 0
        %v1375 = vsel %vm328, %v1364, 0
        %v1378 = vsel %vm341, %v1344, 0
        %1380 = vmatprep.subr.bf16.mxu0 0
        %1381 = vmatpush1.bf16.msra.mxu0 %v1378
        %1382 = vmatprep.subr.bf16.mxu0 0
        %1383 = vmatpush1.bf16.msra.mxu0 0
        %1384 = vmatprep.subr.bf16.mxu0 0
        %1385 = vmatpush1.bf16.msra.mxu0 0
        %1386 = vmatprep.subr.bf16.mxu0 0
        %1387 = vmatpush1.bf16.msra.mxu0 0
        %1388 = vmatprep.subr.bf16.mxu0 0
        %1389 = vmatpush1.bf16.msra.mxu0 0
        %1390 = vmatprep.subr.bf16.mxu0 0
        %1391 = vmatpush1.bf16.msra.mxu0 0
        %1392 = vmatprep.subr.bf16.mxu0 0
        %1393 = vmatpush1.bf16.msra.mxu0 0
        %1394 = vmatprep.subr.bf16.mxu0 0
        %1395 = vmatpush1.bf16.msra.mxu0 0
        %1396 = vmatprep.subr.bf16.mxu0 0
        %1397 = vmatpush1.bf16.msra.mxu0 0
        %1398 = vmatprep.subr.bf16.mxu0 0
        %1399 = vmatpush1.bf16.msra.mxu0 0
        %1400 = vmatprep.subr.bf16.mxu0 0
        %1401 = vmatpush1.bf16.msra.mxu0 0
        %1402 = vmatprep.subr.bf16.mxu0 0
        %1403 = vmatpush1.bf16.msra.mxu0 0
        %1404 = vmatprep.subr.bf16.mxu0 0
        %1405 = vmatpush1.bf16.msra.mxu0 0
        %1406 = vmatprep.subr.bf16.mxu0 0
        %1407 = vmatpush1.bf16.msra.mxu0 0
        %1408 = vmatprep.subr.bf16.mxu0 0
        %1409 = vmatpush1.bf16.msra.mxu0 0
        %1410 = vmatprep.subr.bf16.mxu0 0
        %1411 = vmatpush1.bf16.msra.mxu0 0
        %1412 = vmatprep.mubr.bf16.mxu0 0
        %1413 = vmatmul.mubr.bf16.gmra.mrb[0].mxu0 %v1366
        %v1414 = vpop.f32.mrb[0].mxu0
        %v1415 = vadd.f32 0.0, %v1414
        %v1416 = vpop.f32.mrb[0].mxu0
        %v1417 = vpop.f32.mrb[0].mxu0
        %v1418 = vadd.f32 0.0, %v1417
        %v1419 = vpop.f32.mrb[0].mxu0
        %1420 = vmatprep.mubr.bf16.mxu0 0
        %1421 = vmatmul.mubr.bf16.gmra.mrb[0].mxu0 %v1369
        %v1422 = vpop.f32.mrb[0].mxu0
        %v1423 = vadd.f32 0.0, %v1422
        %v1424 = vpop.f32.mrb[0].mxu0
        %v1425 = vpop.f32.mrb[0].mxu0
        %v1426 = vadd.f32 0.0, %v1425
        %v1427 = vpop.f32.mrb[0].mxu0
        %1428 = vmatprep.mubr.bf16.mxu0 0
        %1429 = vmatmul.mubr.bf16.gmra.mrb[0].mxu0 %v1372
        %v1430 = vpop.f32.mrb[0].mxu0
        %v1431 = vadd.f32 0.0, %v1430
        %v1432 = vpop.f32.mrb[0].mxu0
        %v1433 = vpop.f32.mrb[0].mxu0
        %v1434 = vadd.f32 0.0, %v1433
        %v1435 = vpop.f32.mrb[0].mxu0
        %1436 = vmatprep.mubr.bf16.mxu0 0
        %1437 = vmatmul.mubr.bf16.gmra.mrb[0].mxu0 %v1375
        %v1438 = vpop.f32.mrb[0].mxu0
        %v1439 = vadd.f32 0.0, %v1438
        %v1440 = vpop.f32.mrb[0].mxu0
        %v1441 = vpop.f32.mrb[0].mxu0
        %v1442 = vadd.f32 0.0, %v1441
        %v1443 = vpop.f32.mrb[0].mxu0
        %1444 = vdwg.mxu0
        %v1445 = vadd.f32 %v1335, %v1415
        %v1446 = vadd.f32 %v1336, %v1418
        %v1447 = vadd.f32 %v1337, %v1423
        %v1448 = vadd.f32 %v1338, %v1426
        %v1449 = vadd.f32 %v1339, %v1431
        %v1450 = vadd.f32 %v1340, %v1434
        %v1451 = vadd.f32 %v1341, %v1439
        %v1452 = vadd.f32 %v1342, %v1442
        %1453 = vst [vmem:[#allocation3] sm:$0xff] %v1445
        %1454 = vst [vmem:[#allocation3 + $0x8] sm:$0xff] %v1446
        %1455 = vst [vmem:[#allocation3 + $0x10] sm:$0xff] %v1447
        %1456 = vst [vmem:[#allocation3 + $0x18] sm:$0xff] %v1448
        %1457 = vst [vmem:[#allocation3 + $0x20] sm:$0xff] %v1449
        %1458 = vst [vmem:[#allocation3 + $0x28] sm:$0xff] %v1450
        %1459 = vst [vmem:[#allocation3 + $0x30] sm:$0xff] %v1451
        %1460 = vst [vmem:[#allocation3 + $0x38] sm:$0xff] %v1452
        %s1461 = scalar_lea.vmem %s280, 80
        %v1462 = vld [vmem:[%s1461] sm:$0xf]
        %v1463 = vld [vmem:[%s1461 + $0x8] sm:$0xf]
        %v1464 = vld [vmem:[%s1461 + $0x10] sm:$0xf]
        %v1465 = vld [vmem:[%s1461 + $0x18] sm:$0xf]
        %v1466 = vld [vmem:[%s1461 + $0x20] sm:$0xf]
        %v1467 = vld [vmem:[%s1461 + $0x28] sm:$0xf]
        %v1468 = vld [vmem:[%s1461 + $0x30] sm:$0xf]
        %v1469 = vld [vmem:[%s1461 + $0x38] sm:$0xf]
        %v1470 = vld [vmem:[#allocation3] sm:$0xff]
        %v1471 = vld [vmem:[#allocation3 + $0x8] sm:$0xff]
        %v1472 = vld [vmem:[#allocation3 + $0x10] sm:$0xff]
        %v1473 = vld [vmem:[#allocation3 + $0x18] sm:$0xff]
        %v1474 = vld [vmem:[#allocation3 + $0x20] sm:$0xff]
        %v1475 = vld [vmem:[#allocation3 + $0x28] sm:$0xff]
        %v1476 = vld [vmem:[#allocation3 + $0x30] sm:$0xff]
        %v1477 = vld [vmem:[#allocation3 + $0x38] sm:$0xff]
        %s1478 = scalar_lea.vmem %s1, 14
        %v1479 = vld [vmem:[%s1478] sm:$0x3]
        %v1488 = vunpack.c.l.b16 %v1462
        %v1489 = vunpack.c.l.b16 %v1463
        %v1490 = vunpack.c.l.b16 %v1464
        %v1491 = vunpack.c.l.b16 %v1465
        %v1492 = vunpack.c.l.b16 %v1466
        %v1493 = vunpack.c.l.b16 %v1467
        %v1494 = vunpack.c.l.b16 %v1468
        %v1495 = vunpack.c.l.b16 %v1469
        %v1496 = vpack.c.b16 %v1489, %v1488
        %v1497 = vpack.c.b16 %v1491, %v1490
        %v1498 = vpack.c.b16 %v1493, %v1492
        %v1499 = vpack.c.b16 %v1495, %v1494
        %v1501 = vsel %vm328, %v1496, 0
        %v1504 = vsel %vm328, %v1497, 0
        %v1507 = vsel %vm328, %v1498, 0
        %v1510 = vsel %vm328, %v1499, 0
        %v1513 = vsel %vm341, %v1479, 0
        %1515 = vmatprep.subr.bf16.mxu0 0
        %1516 = vmatpush1.bf16.msra.mxu0 %v1513
        %1517 = vmatprep.subr.bf16.mxu0 0
        %1518 = vmatpush1.bf16.msra.mxu0 0
        %1519 = vmatprep.subr.bf16.mxu0 0
        %1520 = vmatpush1.bf16.msra.mxu0 0
        %1521 = vmatprep.subr.bf16.mxu0 0
        %1522 = vmatpush1.bf16.msra.mxu0 0
        %1523 = vmatprep.subr.bf16.mxu0 0
        %1524 = vmatpush1.bf16.msra.mxu0 0
        %1525 = vmatprep.subr.bf16.mxu0 0
        %1526 = vmatpush1.bf16.msra.mxu0 0
        %1527 = vmatprep.subr.bf16.mxu0 0
        %1528 = vmatpush1.bf16.msra.mxu0 0
        %1529 = vmatprep.subr.bf16.mxu0 0
        %1530 = vmatpush1.bf16.msra.mxu0 0
        %1531 = vmatprep.subr.bf16.mxu0 0
        %1532 = vmatpush1.bf16.msra.mxu0 0
        %1533 = vmatprep.subr.bf16.mxu0 0
        %1534 = vmatpush1.bf16.msra.mxu0 0
        %1535 = vmatprep.subr.bf16.mxu0 0
        %1536 = vmatpush1.bf16.msra.mxu0 0
        %1537 = vmatprep.subr.bf16.mxu0 0
        %1538 = vmatpush1.bf16.msra.mxu0 0
        %1539 = vmatprep.subr.bf16.mxu0 0
        %1540 = vmatpush1.bf16.msra.mxu0 0
        %1541 = vmatprep.subr.bf16.mxu0 0
        %1542 = vmatpush1.bf16.msra.mxu0 0
        %1543 = vmatprep.subr.bf16.mxu0 0
        %1544 = vmatpush1.bf16.msra.mxu0 0
        %1545 = vmatprep.subr.bf16.mxu0 0
        %1546 = vmatpush1.bf16.msra.mxu0 0
        %1547 = vmatprep.mubr.bf16.mxu0 0
        %1548 = vmatmul.mubr.bf16.gmra.mrb[0].mxu0 %v1501
        %v1549 = vpop.f32.mrb[0].mxu0
        %v1550 = vadd.f32 0.0, %v1549
        %v1551 = vpop.f32.mrb[0].mxu0
        %v1552 = vpop.f32.mrb[0].mxu0
        %v1553 = vadd.f32 0.0, %v1552
        %v1554 = vpop.f32.mrb[0].mxu0
        %1555 = vmatprep.mubr.bf16.mxu0 0
        %1556 = vmatmul.mubr.bf16.gmra.mrb[0].mxu0 %v1504
        %v1557 = vpop.f32.mrb[0].mxu0
        %v1558 = vadd.f32 0.0, %v1557
        %v1559 = vpop.f32.mrb[0].mxu0
        %v1560 = vpop.f32.mrb[0].mxu0
        %v1561 = vadd.f32 0.0, %v1560
        %v1562 = vpop.f32.mrb[0].mxu0
        %1563 = vmatprep.mubr.bf16.mxu0 0
        %1564 = vmatmul.mubr.bf16.gmra.mrb[0].mxu0 %v1507
        %v1565 = vpop.f32.mrb[0].mxu0
        %v1566 = vadd.f32 0.0, %v1565
        %v1567 = vpop.f32.mrb[0].mxu0
        %v1568 = vpop.f32.mrb[0].mxu0
        %v1569 = vadd.f32 0.0, %v1568
        %v1570 = vpop.f32.mrb[0].mxu0
        %1571 = vmatprep.mubr.bf16.mxu0 0
        %1572 = vmatmul.mubr.bf16.gmra.mrb[0].mxu0 %v1510
        %v1573 = vpop.f32.mrb[0].mxu0
        %v1574 = vadd.f32 0.0, %v1573
        %v1575 = vpop.f32.mrb[0].mxu0
        %v1576 = vpop.f32.mrb[0].mxu0
        %v1577 = vadd.f32 0.0, %v1576
        %v1578 = vpop.f32.mrb[0].mxu0
        %1579 = vdwg.mxu0
        %v1580 = vadd.f32 %v1470, %v1550
        %v1581 = vadd.f32 %v1471, %v1553
        %v1582 = vadd.f32 %v1472, %v1558
        %v1583 = vadd.f32 %v1473, %v1561
        %v1584 = vadd.f32 %v1474, %v1566
        %v1585 = vadd.f32 %v1475, %v1569
        %v1586 = vadd.f32 %v1476, %v1574
        %v1587 = vadd.f32 %v1477, %v1577
        %1588 = vst [vmem:[#allocation3] sm:$0xff] %v1580
        %1589 = vst [vmem:[#allocation3 + $0x8] sm:$0xff] %v1581
        %1590 = vst [vmem:[#allocation3 + $0x10] sm:$0xff] %v1582
        %1591 = vst [vmem:[#allocation3 + $0x18] sm:$0xff] %v1583
        %1592 = vst [vmem:[#allocation3 + $0x20] sm:$0xff] %v1584
        %1593 = vst [vmem:[#allocation3 + $0x28] sm:$0xff] %v1585
        %1594 = vst [vmem:[#allocation3 + $0x30] sm:$0xff] %v1586
        %1595 = vst [vmem:[#allocation3 + $0x38] sm:$0xff] %v1587
        %v1596 = vld [vmem:[%s1326] sm:$0xf]
        %v1597 = vld [vmem:[%s1326 + $0x4] sm:$0x1]
        %v1598 = vld [vmem:[%s1326 + $0x8] sm:$0xf]
        %v1599 = vld [vmem:[%s1326 + $0xc] sm:$0x1]
        %v1600 = vld [vmem:[%s1326 + $0x10] sm:$0xf]
        %v1601 = vld [vmem:[%s1326 + $0x14] sm:$0x1]
        %v1602 = vld [vmem:[%s1326 + $0x18] sm:$0xf]
        %v1603 = vld [vmem:[%s1326 + $0x1c] sm:$0x1]
        %v1604 = vld [vmem:[%s1326 + $0x20] sm:$0xf]
        %v1605 = vld [vmem:[%s1326 + $0x24] sm:$0x1]
        %v1606 = vld [vmem:[%s1326 + $0x28] sm:$0xf]
        %v1607 = vld [vmem:[%s1326 + $0x2c] sm:$0x1]
        %v1608 = vld [vmem:[%s1326 + $0x30] sm:$0xf]
        %v1609 = vld [vmem:[%s1326 + $0x34] sm:$0x1]
        %v1610 = vld [vmem:[%s1326 + $0x38] sm:$0xf]
        %v1611 = vld [vmem:[%s1326 + $0x3c] sm:$0x1]
        %v1613 = vshrl.u32 %v1596, 16
        %v1615 = vrot.slane %v1613, 4
        %v1616 = vshll.u32 %v1596, 16
        %v1618 = vrot.slane %v1616, 5
        %v1619 = vor.u32 %v1615, %v1618
        %v1620 = vrot.slane %v1619, 4
        %v1622 = vshll.u32 %v1597, 16
        %v1624 = vrot.slane %v1622, 5
        %v1625 = vsel %vm579, %v1620, %v1624
        %v1627 = vshrl.u32 %v1598, 16
        %v1629 = vrot.slane %v1627, 4
        %v1630 = vshll.u32 %v1598, 16
        %v1632 = vrot.slane %v1630, 5
        %v1633 = vor.u32 %v1629, %v1632
        %v1634 = vrot.slane %v1633, 4
        %v1636 = vshll.u32 %v1599, 16
        %v1638 = vrot.slane %v1636, 5
        %v1639 = vsel %vm579, %v1634, %v1638
        %v1641 = vshrl.u32 %v1600, 16
        %v1643 = vrot.slane %v1641, 4
        %v1644 = vshll.u32 %v1600, 16
        %v1646 = vrot.slane %v1644, 5
        %v1647 = vor.u32 %v1643, %v1646
        %v1648 = vrot.slane %v1647, 4
        %v1650 = vshll.u32 %v1601, 16
        %v1652 = vrot.slane %v1650, 5
        %v1653 = vsel %vm579, %v1648, %v1652
        %v1655 = vshrl.u32 %v1602, 16
        %v1657 = vrot.slane %v1655, 4
        %v1658 = vshll.u32 %v1602, 16
        %v1660 = vrot.slane %v1658, 5
        %v1661 = vor.u32 %v1657, %v1660
        %v1662 = vrot.slane %v1661, 4
        %v1664 = vshll.u32 %v1603, 16
        %v1666 = vrot.slane %v1664, 5
        %v1667 = vsel %vm579, %v1662, %v1666
        %v1669 = vshrl.u32 %v1604, 16
        %v1671 = vrot.slane %v1669, 4
        %v1672 = vshll.u32 %v1604, 16
        %v1674 = vrot.slane %v1672, 5
        %v1675 = vor.u32 %v1671, %v1674
        %v1676 = vrot.slane %v1675, 4
        %v1678 = vshll.u32 %v1605, 16
        %v1680 = vrot.slane %v1678, 5
        %v1681 = vsel %vm579, %v1676, %v1680
        %v1683 = vshrl.u32 %v1606, 16
        %v1685 = vrot.slane %v1683, 4
        %v1686 = vshll.u32 %v1606, 16
        %v1688 = vrot.slane %v1686, 5
        %v1689 = vor.u32 %v1685, %v1688
        %v1690 = vrot.slane %v1689, 4
        %v1692 = vshll.u32 %v1607, 16
        %v1694 = vrot.slane %v1692, 5
        %v1695 = vsel %vm579, %v1690, %v1694
        %v1697 = vshrl.u32 %v1608, 16
        %v1699 = vrot.slane %v1697, 4
        %v1700 = vshll.u32 %v1608, 16
        %v1702 = vrot.slane %v1700, 5
        %v1703 = vor.u32 %v1699, %v1702
        %v1704 = vrot.slane %v1703, 4
        %v1706 = vshll.u32 %v1609, 16
        %v1708 = vrot.slane %v1706, 5
        %v1709 = vsel %vm579, %v1704, %v1708
        %v1711 = vshrl.u32 %v1610, 16
        %v1713 = vrot.slane %v1711, 4
        %v1714 = vshll.u32 %v1610, 16
        %v1716 = vrot.slane %v1714, 5
        %v1717 = vor.u32 %v1713, %v1716
        %v1718 = vrot.slane %v1717, 4
        %v1720 = vshll.u32 %v1611, 16
        %v1722 = vrot.slane %v1720, 5
        %v1723 = vsel %vm579, %v1718, %v1722
        %v1724 = vld [vmem:[#allocation3] sm:$0xff]
        %v1725 = vld [vmem:[#allocation3 + $0x8] sm:$0xff]
        %v1726 = vld [vmem:[#allocation3 + $0x10] sm:$0xff]
        %v1727 = vld [vmem:[#allocation3 + $0x18] sm:$0xff]
        %v1728 = vld [vmem:[#allocation3 + $0x20] sm:$0xff]
        %v1729 = vld [vmem:[#allocation3 + $0x28] sm:$0xff]
        %v1730 = vld [vmem:[#allocation3 + $0x30] sm:$0xff]
        %v1731 = vld [vmem:[#allocation3 + $0x38] sm:$0xff]
        %s1732 = scalar_lea.vmem %s1, 16
        %v1733 = vld [vmem:[%s1732] sm:$0x3]
        %v1734 = vunpack.c.l.b16 %v1625
        %v1735 = vunpack.c.l.b16 %v1639
        %v1736 = vunpack.c.l.b16 %v1653
        %v1737 = vunpack.c.l.b16 %v1667
        %v1738 = vunpack.c.l.b16 %v1681
        %v1739 = vunpack.c.l.b16 %v1695
        %v1740 = vunpack.c.l.b16 %v1709
        %v1741 = vunpack.c.l.b16 %v1723
        %v1742 = vpack.c.b16 %v1735, %v1734
        %v1743 = vpack.c.b16 %v1737, %v1736
        %v1744 = vpack.c.b16 %v1739, %v1738
        %v1745 = vpack.c.b16 %v1741, %v1740
        %v1747 = vsel %vm328, %v1742, 0
        %v1750 = vsel %vm328, %v1743, 0
        %v1753 = vsel %vm328, %v1744, 0
        %v1756 = vsel %vm328, %v1745, 0
        %v1759 = vsel %vm341, %v1733, 0
        %1761 = vmatprep.subr.bf16.mxu0 0
        %1762 = vmatpush1.bf16.msra.mxu0 %v1759
        %1763 = vmatprep.subr.bf16.mxu0 0
        %1764 = vmatpush1.bf16.msra.mxu0 0
        %1765 = vmatprep.subr.bf16.mxu0 0
        %1766 = vmatpush1.bf16.msra.mxu0 0
        %1767 = vmatprep.subr.bf16.mxu0 0
        %1768 = vmatpush1.bf16.msra.mxu0 0
        %1769 = vmatprep.subr.bf16.mxu0 0
        %1770 = vmatpush1.bf16.msra.mxu0 0
        %1771 = vmatprep.subr.bf16.mxu0 0
        %1772 = vmatpush1.bf16.msra.mxu0 0
        %1773 = vmatprep.subr.bf16.mxu0 0
        %1774 = vmatpush1.bf16.msra.mxu0 0
        %1775 = vmatprep.subr.bf16.mxu0 0
        %1776 = vmatpush1.bf16.msra.mxu0 0
        %1777 = vmatprep.subr.bf16.mxu0 0
        %1778 = vmatpush1.bf16.msra.mxu0 0
        %1779 = vmatprep.subr.bf16.mxu0 0
        %1780 = vmatpush1.bf16.msra.mxu0 0
        %1781 = vmatprep.subr.bf16.mxu0 0
        %1782 = vmatpush1.bf16.msra.mxu0 0
        %1783 = vmatprep.subr.bf16.mxu0 0
        %1784 = vmatpush1.bf16.msra.mxu0 0
        %1785 = vmatprep.subr.bf16.mxu0 0
        %1786 = vmatpush1.bf16.msra.mxu0 0
        %1787 = vmatprep.subr.bf16.mxu0 0
        %1788 = vmatpush1.bf16.msra.mxu0 0
        %1789 = vmatprep.subr.bf16.mxu0 0
        %1790 = vmatpush1.bf16.msra.mxu0 0
        %1791 = vmatprep.subr.bf16.mxu0 0
        %1792 = vmatpush1.bf16.msra.mxu0 0
        %1793 = vmatprep.mubr.bf16.mxu0 0
        %1794 = vmatmul.mubr.bf16.gmra.mrb[0].mxu0 %v1747
        %v1795 = vpop.f32.mrb[0].mxu0
        %v1796 = vadd.f32 0.0, %v1795
        %v1797 = vpop.f32.mrb[0].mxu0
        %v1798 = vpop.f32.mrb[0].mxu0
        %v1799 = vadd.f32 0.0, %v1798
        %v1800 = vpop.f32.mrb[0].mxu0
        %1801 = vmatprep.mubr.bf16.mxu0 0
        %1802 = vmatmul.mubr.bf16.gmra.mrb[0].mxu0 %v1750
        %v1803 = vpop.f32.mrb[0].mxu0
        %v1804 = vadd.f32 0.0, %v1803
        %v1805 = vpop.f32.mrb[0].mxu0
        %v1806 = vpop.f32.mrb[0].mxu0
        %v1807 = vadd.f32 0.0, %v1806
        %v1808 = vpop.f32.mrb[0].mxu0
        %1809 = vmatprep.mubr.bf16.mxu0 0
        %1810 = vmatmul.mubr.bf16.gmra.mrb[0].mxu0 %v1753
        %v1811 = vpop.f32.mrb[0].mxu0
        %v1812 = vadd.f32 0.0, %v1811
        %v1813 = vpop.f32.mrb[0].mxu0
        %v1814 = vpop.f32.mrb[0].mxu0
        %v1815 = vadd.f32 0.0, %v1814
        %v1816 = vpop.f32.mrb[0].mxu0
        %1817 = vmatprep.mubr.bf16.mxu0 0
        %1818 = vmatmul.mubr.bf16.gmra.mrb[0].mxu0 %v1756
        %v1819 = vpop.f32.mrb[0].mxu0
        %v1820 = vadd.f32 0.0, %v1819
        %v1821 = vpop.f32.mrb[0].mxu0
        %v1822 = vpop.f32.mrb[0].mxu0
        %v1823 = vadd.f32 0.0, %v1822
        %v1824 = vpop.f32.mrb[0].mxu0
        %1825 = vdwg.mxu0
        %v1826 = vadd.f32 %v1724, %v1796
        %v1827 = vadd.f32 %v1725, %v1799
        %v1828 = vadd.f32 %v1726, %v1804
        %v1829 = vadd.f32 %v1727, %v1807
        %v1830 = vadd.f32 %v1728, %v1812
        %v1831 = vadd.f32 %v1729, %v1815
        %v1832 = vadd.f32 %v1730, %v1820
        %v1833 = vadd.f32 %v1731, %v1823
        %1834 = vst [vmem:[#allocation3] sm:$0xff] %v1826
        %1835 = vst [vmem:[#allocation3 + $0x8] sm:$0xff] %v1827
        %1836 = vst [vmem:[#allocation3 + $0x10] sm:$0xff] %v1828
        %1837 = vst [vmem:[#allocation3 + $0x18] sm:$0xff] %v1829
        %1838 = vst [vmem:[#allocation3 + $0x20] sm:$0xff] %v1830
        %1839 = vst [vmem:[#allocation3 + $0x28] sm:$0xff] %v1831
        %1840 = vst [vmem:[#allocation3 + $0x30] sm:$0xff] %v1832
        %1841 = vst [vmem:[#allocation3 + $0x38] sm:$0xff] %v1833
        %v1842 = vld [vmem:[#allocation3] sm:$0xff]
        %v1843 = vld [vmem:[#allocation3 + $0x8] sm:$0xff]
        %v1844 = vld [vmem:[#allocation3 + $0x10] sm:$0xff]
        %v1845 = vld [vmem:[#allocation3 + $0x18] sm:$0xff]
        %v1846 = vld [vmem:[#allocation3 + $0x20] sm:$0xff]
        %v1847 = vld [vmem:[#allocation3 + $0x28] sm:$0xff]
        %v1848 = vld [vmem:[#allocation3 + $0x30] sm:$0xff]
        %v1849 = vld [vmem:[#allocation3 + $0x38] sm:$0xff]
        %v1850 = vld [vmem:[%s2] sm:$0x1]
        %v1852 = vlaneseq
        %v1853 = vshrl.u32 %v1852, 7
        %v1854 = vsub.s32 0, %v1853
        %v1855 = vrot.slane %v1850, %v1854
        %v1857 = vadd.f32 %v1842, %v1855
        %v1858 = vadd.f32 %v1843, %v1855
        %v1859 = vadd.f32 %v1844, %v1855
        %v1860 = vadd.f32 %v1845, %v1855
        %v1861 = vadd.f32 %v1846, %v1855
        %v1862 = vadd.f32 %v1847, %v1855
        %v1863 = vadd.f32 %v1848, %v1855
        %v1864 = vadd.f32 %v1849, %v1855
        %v1865 = vmax.f32 %v1857, 0.0
        %v1866 = vmax.f32 %v1858, 0.0
        %v1867 = vmax.f32 %v1859, 0.0
        %v1868 = vmax.f32 %v1860, 0.0
        %v1869 = vmax.f32 %v1861, 0.0
        %v1870 = vmax.f32 %v1862, 0.0
        %v1871 = vmax.f32 %v1863, 0.0
        %v1872 = vmax.f32 %v1864, 0.0
        %1873 = vst [vmem:[#allocation2] sm:$0xf] 0
        %1874 = vst [vmem:[#allocation2 + $0x4] sm:$0x1] 0
        %1875 = vst [vmem:[#allocation2 + $0x8] sm:$0xf] 0
        %1876 = vst [vmem:[#allocation2 + $0xc] sm:$0x1] 0
        %1877 = vst [vmem:[#allocation2 + $0x10] sm:$0xf] 0
        %1878 = vst [vmem:[#allocation2 + $0x14] sm:$0x1] 0
        %1879 = vst [vmem:[#allocation2 + $0x18] sm:$0xf] 0
        %1880 = vst [vmem:[#allocation2 + $0x1c] sm:$0x1] 0
        %1881 = vst [vmem:[#allocation2 + $0x20] sm:$0xf] 0
        %1882 = vst [vmem:[#allocation2 + $0x24] sm:$0x1] 0
        %1883 = vst [vmem:[#allocation2 + $0x28] sm:$0xf] 0
        %1884 = vst [vmem:[#allocation2 + $0x2c] sm:$0x1] 0
        %1885 = vst [vmem:[#allocation2 + $0x30] sm:$0xf] 0
        %1886 = vst [vmem:[#allocation2 + $0x34] sm:$0x1] 0
        %1887 = vst [vmem:[#allocation2 + $0x38] sm:$0xf] 0
        %1888 = vst [vmem:[#allocation2 + $0x3c] sm:$0x1] 0
        %1889 = vst [vmem:[#allocation2 + $0x40] sm:$0xf] 0
        %1890 = vst [vmem:[#allocation2 + $0x44] sm:$0x1] 0
        %1891 = vst [vmem:[#allocation2 + $0x48] sm:$0xf] 0
        %1892 = vst [vmem:[#allocation2 + $0x4c] sm:$0x1] 0
        %v1893 = vpack.c.bf16 %v1865, %v1865
        %v1894 = vpack.c.bf16 %v1866, %v1866
        %v1895 = vpack.c.bf16 %v1867, %v1867
        %v1896 = vpack.c.bf16 %v1868, %v1868
        %v1897 = vpack.c.bf16 %v1869, %v1869
        %v1898 = vpack.c.bf16 %v1870, %v1870
        %v1899 = vpack.c.bf16 %v1871, %v1871
        %v1900 = vpack.c.bf16 %v1872, %v1872
        %v1909 = vunpack.c.l.b16 %v1893
        %v1910 = vunpack.c.l.b16 %v1894
        %v1911 = vunpack.c.l.b16 %v1895
        %v1912 = vunpack.c.l.b16 %v1896
        %v1913 = vunpack.c.l.b16 %v1897
        %v1914 = vunpack.c.l.b16 %v1898
        %v1915 = vunpack.c.l.b16 %v1899
        %v1916 = vunpack.c.l.b16 %v1900
        %v1917 = vpack.c.b16 %v1909, %v1909
        %v1918 = vpack.c.b16 %v1910, %v1910
        %v1919 = vpack.c.b16 %v1911, %v1911
        %v1920 = vpack.c.b16 %v1912, %v1912
        %v1921 = vpack.c.b16 %v1913, %v1913
        %v1922 = vpack.c.b16 %v1914, %v1914
        %v1923 = vpack.c.b16 %v1915, %v1915
        %v1924 = vpack.c.b16 %v1916, %v1916
        %v1926 = vshrl.u32 %v1917, 16
        %v1928 = vrot.slane %v1926, 7
        %v1929 = vshll.u32 %v1917, 16
        %v1931 = vor.u32 %v1928, %v1929
        %v1932 = vrot.slane %v1928, 4
        %v1934 = vshrl.u32 %v1918, 16
        %v1936 = vrot.slane %v1934, 7
        %v1937 = vshll.u32 %v1918, 16
        %v1939 = vor.u32 %v1936, %v1937
        %v1940 = vrot.slane %v1936, 4
        %v1942 = vshrl.u32 %v1919, 16
        %v1944 = vrot.slane %v1942, 7
        %v1945 = vshll.u32 %v1919, 16
        %v1947 = vor.u32 %v1944, %v1945
        %v1948 = vrot.slane %v1944, 4
        %v1950 = vshrl.u32 %v1920, 16
        %v1952 = vrot.slane %v1950, 7
        %v1953 = vshll.u32 %v1920, 16
        %v1955 = vor.u32 %v1952, %v1953
        %v1956 = vrot.slane %v1952, 4
        %v1958 = vshrl.u32 %v1921, 16
        %v1960 = vrot.slane %v1958, 7
        %v1961 = vshll.u32 %v1921, 16
        %v1963 = vor.u32 %v1960, %v1961
        %v1964 = vrot.slane %v1960, 4
        %v1966 = vshrl.u32 %v1922, 16
        %v1968 = vrot.slane %v1966, 7
        %v1969 = vshll.u32 %v1922, 16
        %v1971 = vor.u32 %v1968, %v1969
        %v1972 = vrot.slane %v1968, 4
        %v1974 = vshrl.u32 %v1923, 16
        %v1976 = vrot.slane %v1974, 7
        %v1977 = vshll.u32 %v1923, 16
        %v1979 = vor.u32 %v1976, %v1977
        %v1980 = vrot.slane %v1976, 4
        %v1982 = vshrl.u32 %v1924, 16
        %v1984 = vrot.slane %v1982, 7
        %v1985 = vshll.u32 %v1924, 16
        %v1987 = vor.u32 %v1984, %v1985
        %v1988 = vrot.slane %v1984, 4
        %s2005 = scalar_lea.vmem [#allocation2], 8
        %vm2006 = vcmask 1043456
        %vm2007 = vsmask.f32 7938
        %vm2008 = vmand %vm2006, %vm2007
        %v2009 = vld [vmem:[%s2005] sm:$0xf]
        %v2010 = vsel %vm2008, %v1931, %v2009
        %2011 = vst [vmem:[%s2005] sm:$0xf] %v2010
        %vm2012 = vcmask 1040384
        %vm2013 = vsmask.f32 256
        %vm2014 = vmand %vm2012, %vm2013
        %v2015 = vld [vmem:[%s2005 + $0x4] sm:$0x1]
        %v2016 = vsel %vm2014, %v1932, %v2015
        %2017 = vst [vmem:[%s2005 + $0x4] sm:$0x1] %v2016
        %v2018 = vld [vmem:[%s2005 + $0x8] sm:$0xf]
        %v2019 = vsel %vm2008, %v1939, %v2018
        %2020 = vst [vmem:[%s2005 + $0x8] sm:$0xf] %v2019
        %v2021 = vld [vmem:[%s2005 + $0xc] sm:$0x1]
        %v2022 = vsel %vm2014, %v1940, %v2021
        %2023 = vst [vmem:[%s2005 + $0xc] sm:$0x1] %v2022
        %v2024 = vld [vmem:[%s2005 + $0x10] sm:$0xf]
        %v2025 = vsel %vm2008, %v1947, %v2024
        %2026 = vst [vmem:[%s2005 + $0x10] sm:$0xf] %v2025
        %v2027 = vld [vmem:[%s2005 + $0x14] sm:$0x1]
        %v2028 = vsel %vm2014, %v1948, %v2027
        %2029 = vst [vmem:[%s2005 + $0x14] sm:$0x1] %v2028
        %v2030 = vld [vmem:[%s2005 + $0x18] sm:$0xf]
        %v2031 = vsel %vm2008, %v1955, %v2030
        %2032 = vst [vmem:[%s2005 + $0x18] sm:$0xf] %v2031
        %v2033 = vld [vmem:[%s2005 + $0x1c] sm:$0x1]
        %v2034 = vsel %vm2014, %v1956, %v2033
        %2035 = vst [vmem:[%s2005 + $0x1c] sm:$0x1] %v2034
        %v2036 = vld [vmem:[%s2005 + $0x20] sm:$0xf]
        %v2037 = vsel %vm2008, %v1963, %v2036
        %2038 = vst [vmem:[%s2005 + $0x20] sm:$0xf] %v2037
        %v2039 = vld [vmem:[%s2005 + $0x24] sm:$0x1]
        %v2040 = vsel %vm2014, %v1964, %v2039
        %2041 = vst [vmem:[%s2005 + $0x24] sm:$0x1] %v2040
        %v2042 = vld [vmem:[%s2005 + $0x28] sm:$0xf]
        %v2043 = vsel %vm2008, %v1971, %v2042
        %2044 = vst [vmem:[%s2005 + $0x28] sm:$0xf] %v2043
        %v2045 = vld [vmem:[%s2005 + $0x2c] sm:$0x1]
        %v2046 = vsel %vm2014, %v1972, %v2045
        %2047 = vst [vmem:[%s2005 + $0x2c] sm:$0x1] %v2046
        %v2048 = vld [vmem:[%s2005 + $0x30] sm:$0xf]
        %v2049 = vsel %vm2008, %v1979, %v2048
        %2050 = vst [vmem:[%s2005 + $0x30] sm:$0xf] %v2049
        %v2051 = vld [vmem:[%s2005 + $0x34] sm:$0x1]
        %v2052 = vsel %vm2014, %v1980, %v2051
        %2053 = vst [vmem:[%s2005 + $0x34] sm:$0x1] %v2052
        %v2054 = vld [vmem:[%s2005 + $0x38] sm:$0xf]
        %v2055 = vsel %vm2008, %v1987, %v2054
        %2056 = vst [vmem:[%s2005 + $0x38] sm:$0xf] %v2055
        %v2057 = vld [vmem:[%s2005 + $0x3c] sm:$0x1]
        %v2058 = vsel %vm2014, %v1988, %v2057
        %2059 = vst [vmem:[%s2005 + $0x3c] sm:$0x1] %v2058
        %2060 = vst [vmem:[#allocation3] sm:$0xff] 0.0
        %2061 = vst [vmem:[#allocation3 + $0x8] sm:$0xff] 0.0
        %2062 = vst [vmem:[#allocation3 + $0x10] sm:$0xff] 0.0
        %2063 = vst [vmem:[#allocation3 + $0x18] sm:$0xff] 0.0
        %2064 = vst [vmem:[#allocation3 + $0x20] sm:$0xff] 0.0
        %2065 = vst [vmem:[#allocation3 + $0x28] sm:$0xff] 0.0
        %2066 = vst [vmem:[#allocation3 + $0x30] sm:$0xff] 0.0
        %2067 = vst [vmem:[#allocation3 + $0x38] sm:$0xff] 0.0
        %v2068 = vld [vmem:[#allocation2] sm:$0xf]
        %v2069 = vld [vmem:[#allocation2 + $0x8] sm:$0xf]
        %v2070 = vld [vmem:[#allocation2 + $0x10] sm:$0xf]
        %v2071 = vld [vmem:[#allocation2 + $0x18] sm:$0xf]
        %v2072 = vld [vmem:[#allocation2 + $0x20] sm:$0xf]
        %v2073 = vld [vmem:[#allocation2 + $0x28] sm:$0xf]
        %v2074 = vld [vmem:[#allocation2 + $0x30] sm:$0xf]
        %v2075 = vld [vmem:[#allocation2 + $0x38] sm:$0xf]
        %v2076 = vld [vmem:[#allocation3] sm:$0xff]
        %v2077 = vld [vmem:[#allocation3 + $0x8] sm:$0xff]
        %v2078 = vld [vmem:[#allocation3 + $0x10] sm:$0xff]
        %v2079 = vld [vmem:[#allocation3 + $0x18] sm:$0xff]
        %v2080 = vld [vmem:[#allocation3 + $0x20] sm:$0xff]
        %v2081 = vld [vmem:[#allocation3 + $0x28] sm:$0xff]
        %v2082 = vld [vmem:[#allocation3 + $0x30] sm:$0xff]
        %v2083 = vld [vmem:[#allocation3 + $0x38] sm:$0xff]
        %v2084 = vld [vmem:[%s3] sm:$0xf]
        %v2085 = vld [vmem:[%s3 + $0x4] sm:$0xf]
        %v2086 = vld [vmem:[%s3 + $0x8] sm:$0xf]
        %v2087 = vld [vmem:[%s3 + $0xc] sm:$0xf]
        %v2088 = vld [vmem:[%s3 + $0x10] sm:$0xf]
        %v2089 = vld [vmem:[%s3 + $0x14] sm:$0xf]
        %v2090 = vld [vmem:[%s3 + $0x18] sm:$0xf]
        %v2091 = vld [vmem:[%s3 + $0x1c] sm:$0xf]
        %v2092 = vld [vmem:[%s3 + $0x20] sm:$0xf]
        %v2093 = vld [vmem:[%s3 + $0x24] sm:$0xf]
        %v2094 = vld [vmem:[%s3 + $0x28] sm:$0xf]
        %v2095 = vld [vmem:[%s3 + $0x2c] sm:$0xf]
        %v2096 = vld [vmem:[%s3 + $0x30] sm:$0xf]
        %v2097 = vld [vmem:[%s3 + $0x34] sm:$0xf]
        %v2098 = vld [vmem:[%s3 + $0x38] sm:$0xf]
        %v2099 = vld [vmem:[%s3 + $0x3c] sm:$0xf]
        %v2108 = vunpack.c.l.b16 %v2068
        %v2109 = vunpack.c.l.b16 %v2069
        %v2110 = vunpack.c.l.b16 %v2070
        %v2111 = vunpack.c.l.b16 %v2071
        %v2112 = vunpack.c.l.b16 %v2072
        %v2113 = vunpack.c.l.b16 %v2073
        %v2114 = vunpack.c.l.b16 %v2074
        %v2115 = vunpack.c.l.b16 %v2075
        %v2116 = vpack.c.b16 %v2109, %v2108
        %v2117 = vpack.c.b16 %v2111, %v2110
        %v2118 = vpack.c.b16 %v2113, %v2112
        %v2119 = vpack.c.b16 %v2115, %v2114
        %v2140 = vunpack.c.l.b16 %v2084
        %v2141 = vunpack.c.l.b16 %v2085
        %v2142 = vunpack.c.l.b16 %v2086
        %v2143 = vunpack.c.l.b16 %v2087
        %v2144 = vunpack.c.l.b16 %v2088
        %v2145 = vunpack.c.l.b16 %v2089
        %v2146 = vunpack.c.l.b16 %v2090
        %v2147 = vunpack.c.l.b16 %v2091
        %v2148 = vunpack.c.l.b16 %v2092
        %v2149 = vunpack.c.l.b16 %v2093
        %v2150 = vunpack.c.l.b16 %v2094
        %v2151 = vunpack.c.l.b16 %v2095
        %v2152 = vunpack.c.l.b16 %v2096
        %v2153 = vunpack.c.l.b16 %v2097
        %v2154 = vunpack.c.l.b16 %v2098
        %v2155 = vunpack.c.l.b16 %v2099
        %v2156 = vpack.c.b16 %v2141, %v2140
        %v2157 = vpack.c.b16 %v2143, %v2142
        %v2158 = vpack.c.b16 %v2145, %v2144
        %v2159 = vpack.c.b16 %v2147, %v2146
        %v2160 = vpack.c.b16 %v2149, %v2148
        %v2161 = vpack.c.b16 %v2151, %v2150
        %v2162 = vpack.c.b16 %v2153, %v2152
        %v2163 = vpack.c.b16 %v2155, %v2154
        %2172 = vmatprep.subr.bf16.mxu0 0
        %2173 = vmatpush1.bf16.msra.mxu0 %v2156
        %2174 = vmatprep.subr.bf16.mxu0 0
        %2175 = vmatpush1.bf16.msra.mxu0 %v2157
        %2176 = vmatprep.subr.bf16.mxu0 0
        %2177 = vmatpush1.bf16.msra.mxu0 %v2158
        %2178 = vmatprep.subr.bf16.mxu0 0
        %2179 = vmatpush1.bf16.msra.mxu0 %v2159
        %2180 = vmatprep.subr.bf16.mxu0 0
        %2181 = vmatpush1.bf16.msra.mxu0 %v2160
        %2182 = vmatprep.subr.bf16.mxu0 0
        %2183 = vmatpush1.bf16.msra.mxu0 %v2161
        %2184 = vmatprep.subr.bf16.mxu0 0
        %2185 = vmatpush1.bf16.msra.mxu0 %v2162
        %2186 = vmatprep.subr.bf16.mxu0 0
        %2187 = vmatpush1.bf16.msra.mxu0 %v2163
        %2188 = vmatprep.subr.bf16.mxu0 0
        %2189 = vmatpush1.bf16.msra.mxu0 0
        %2190 = vmatprep.subr.bf16.mxu0 0
        %2191 = vmatpush1.bf16.msra.mxu0 0
        %2192 = vmatprep.subr.bf16.mxu0 0
        %2193 = vmatpush1.bf16.msra.mxu0 0
        %2194 = vmatprep.subr.bf16.mxu0 0
        %2195 = vmatpush1.bf16.msra.mxu0 0
        %2196 = vmatprep.subr.bf16.mxu0 0
        %2197 = vmatpush1.bf16.msra.mxu0 0
        %2198 = vmatprep.subr.bf16.mxu0 0
        %2199 = vmatpush1.bf16.msra.mxu0 0
        %2200 = vmatprep.subr.bf16.mxu0 0
        %2201 = vmatpush1.bf16.msra.mxu0 0
        %2202 = vmatprep.subr.bf16.mxu0 0
        %2203 = vmatpush1.bf16.msra.mxu0 0
        %2204 = vmatprep.mubr.bf16.mxu0 0
        %2205 = vmatmul.mubr.bf16.gmra.mrb[0].mxu0 %v2116
        %v2206 = vpop.f32.mrb[0].mxu0
        %v2207 = vadd.f32 0.0, %v2206
        %v2208 = vpop.f32.mrb[0].mxu0
        %v2209 = vpop.f32.mrb[0].mxu0
        %v2210 = vadd.f32 0.0, %v2209
        %v2211 = vpop.f32.mrb[0].mxu0
        %2212 = vmatprep.mubr.bf16.mxu0 0
        %2213 = vmatmul.mubr.bf16.gmra.mrb[0].mxu0 %v2117
        %v2214 = vpop.f32.mrb[0].mxu0
        %v2215 = vadd.f32 0.0, %v2214
        %v2216 = vpop.f32.mrb[0].mxu0
        %v2217 = vpop.f32.mrb[0].mxu0
        %v2218 = vadd.f32 0.0, %v2217
        %v2219 = vpop.f32.mrb[0].mxu0
        %2220 = vmatprep.mubr.bf16.mxu0 0
        %2221 = vmatmul.mubr.bf16.gmra.mrb[0].mxu0 %v2118
        %v2222 = vpop.f32.mrb[0].mxu0
        %v2223 = vadd.f32 0.0, %v2222
        %v2224 = vpop.f32.mrb[0].mxu0
        %v2225 = vpop.f32.mrb[0].mxu0
        %v2226 = vadd.f32 0.0, %v2225
        %v2227 = vpop.f32.mrb[0].mxu0
        %2228 = vmatprep.mubr.bf16.mxu0 0
        %2229 = vmatmul.mubr.bf16.gmra.mrb[0].mxu0 %v2119
        %v2230 = vpop.f32.mrb[0].mxu0
        %v2231 = vadd.f32 0.0, %v2230
        %v2232 = vpop.f32.mrb[0].mxu0
        %v2233 = vpop.f32.mrb[0].mxu0
        %v2234 = vadd.f32 0.0, %v2233
        %v2235 = vpop.f32.mrb[0].mxu0
        %2236 = vdwg.mxu0
        %v2237 = vadd.f32 %v2076, %v2207
        %v2238 = vadd.f32 %v2077, %v2210
        %v2239 = vadd.f32 %v2078, %v2215
        %v2240 = vadd.f32 %v2079, %v2218
        %v2241 = vadd.f32 %v2080, %v2223
        %v2242 = vadd.f32 %v2081, %v2226
        %v2243 = vadd.f32 %v2082, %v2231
        %v2244 = vadd.f32 %v2083, %v2234
        %2245 = vst [vmem:[#allocation3] sm:$0xff] %v2237
        %2246 = vst [vmem:[#allocation3 + $0x8] sm:$0xff] %v2238
        %2247 = vst [vmem:[#allocation3 + $0x10] sm:$0xff] %v2239
        %2248 = vst [vmem:[#allocation3 + $0x18] sm:$0xff] %v2240
        %2249 = vst [vmem:[#allocation3 + $0x20] sm:$0xff] %v2241
        %2250 = vst [vmem:[#allocation3 + $0x28] sm:$0xff] %v2242
        %2251 = vst [vmem:[#allocation3 + $0x30] sm:$0xff] %v2243
        %2252 = vst [vmem:[#allocation3 + $0x38] sm:$0xff] %v2244
        %v2253 = vld [vmem:[#allocation2] sm:$0xf]
        %v2254 = vld [vmem:[#allocation2 + $0x4] sm:$0x1]
        %v2255 = vld [vmem:[#allocation2 + $0x8] sm:$0xf]
        %v2256 = vld [vmem:[#allocation2 + $0xc] sm:$0x1]
        %v2257 = vld [vmem:[#allocation2 + $0x10] sm:$0xf]
        %v2258 = vld [vmem:[#allocation2 + $0x14] sm:$0x1]
        %v2259 = vld [vmem:[#allocation2 + $0x18] sm:$0xf]
        %v2260 = vld [vmem:[#allocation2 + $0x1c] sm:$0x1]
        %v2261 = vld [vmem:[#allocation2 + $0x20] sm:$0xf]
        %v2262 = vld [vmem:[#allocation2 + $0x24] sm:$0x1]
        %v2263 = vld [vmem:[#allocation2 + $0x28] sm:$0xf]
        %v2264 = vld [vmem:[#allocation2 + $0x2c] sm:$0x1]
        %v2265 = vld [vmem:[#allocation2 + $0x30] sm:$0xf]
        %v2266 = vld [vmem:[#allocation2 + $0x34] sm:$0x1]
        %v2267 = vld [vmem:[#allocation2 + $0x38] sm:$0xf]
        %v2268 = vld [vmem:[#allocation2 + $0x3c] sm:$0x1]
        %v2270 = vshrl.u32 %v2253, 16
        %v2272 = vrot.slane %v2270, 4
        %v2273 = vshll.u32 %v2253, 16
        %v2275 = vrot.slane %v2273, 5
        %v2276 = vor.u32 %v2272, %v2275
        %v2277 = vrot.slane %v2276, 4
        %v2279 = vshll.u32 %v2254, 16
        %v2281 = vrot.slane %v2279, 5
        %v2282 = vsel %vm579, %v2277, %v2281
        %v2284 = vshrl.u32 %v2255, 16
        %v2286 = vrot.slane %v2284, 4
        %v2287 = vshll.u32 %v2255, 16
        %v2289 = vrot.slane %v2287, 5
        %v2290 = vor.u32 %v2286, %v2289
        %v2291 = vrot.slane %v2290, 4
        %v2293 = vshll.u32 %v2256, 16
        %v2295 = vrot.slane %v2293, 5
        %v2296 = vsel %vm579, %v2291, %v2295
        %v2298 = vshrl.u32 %v2257, 16
        %v2300 = vrot.slane %v2298, 4
        %v2301 = vshll.u32 %v2257, 16
        %v2303 = vrot.slane %v2301, 5
        %v2304 = vor.u32 %v2300, %v2303
        %v2305 = vrot.slane %v2304, 4
        %v2307 = vshll.u32 %v2258, 16
        %v2309 = vrot.slane %v2307, 5
        %v2310 = vsel %vm579, %v2305, %v2309
        %v2312 = vshrl.u32 %v2259, 16
        %v2314 = vrot.slane %v2312, 4
        %v2315 = vshll.u32 %v2259, 16
        %v2317 = vrot.slane %v2315, 5
        %v2318 = vor.u32 %v2314, %v2317
        %v2319 = vrot.slane %v2318, 4
        %v2321 = vshll.u32 %v2260, 16
        %v2323 = vrot.slane %v2321, 5
        %v2324 = vsel %vm579, %v2319, %v2323
        %v2326 = vshrl.u32 %v2261, 16
        %v2328 = vrot.slane %v2326, 4
        %v2329 = vshll.u32 %v2261, 16
        %v2331 = vrot.slane %v2329, 5
        %v2332 = vor.u32 %v2328, %v2331
        %v2333 = vrot.slane %v2332, 4
        %v2335 = vshll.u32 %v2262, 16
        %v2337 = vrot.slane %v2335, 5
        %v2338 = vsel %vm579, %v2333, %v2337
        %v2340 = vshrl.u32 %v2263, 16
        %v2342 = vrot.slane %v2340, 4
        %v2343 = vshll.u32 %v2263, 16
        %v2345 = vrot.slane %v2343, 5
        %v2346 = vor.u32 %v2342, %v2345
        %v2347 = vrot.slane %v2346, 4
        %v2349 = vshll.u32 %v2264, 16
        %v2351 = vrot.slane %v2349, 5
        %v2352 = vsel %vm579, %v2347, %v2351
        %v2354 = vshrl.u32 %v2265, 16
        %v2356 = vrot.slane %v2354, 4
        %v2357 = vshll.u32 %v2265, 16
        %v2359 = vrot.slane %v2357, 5
        %v2360 = vor.u32 %v2356, %v2359
        %v2361 = vrot.slane %v2360, 4
        %v2363 = vshll.u32 %v2266, 16
        %v2365 = vrot.slane %v2363, 5
        %v2366 = vsel %vm579, %v2361, %v2365
        %v2368 = vshrl.u32 %v2267, 16
        %v2370 = vrot.slane %v2368, 4
        %v2371 = vshll.u32 %v2267, 16
        %v2373 = vrot.slane %v2371, 5
        %v2374 = vor.u32 %v2370, %v2373
        %v2375 = vrot.slane %v2374, 4
        %v2377 = vshll.u32 %v2268, 16
        %v2379 = vrot.slane %v2377, 5
        %v2380 = vsel %vm579, %v2375, %v2379
        %v2381 = vld [vmem:[#allocation3] sm:$0xff]
        %v2382 = vld [vmem:[#allocation3 + $0x8] sm:$0xff]
        %v2383 = vld [vmem:[#allocation3 + $0x10] sm:$0xff]
        %v2384 = vld [vmem:[#allocation3 + $0x18] sm:$0xff]
        %v2385 = vld [vmem:[#allocation3 + $0x20] sm:$0xff]
        %v2386 = vld [vmem:[#allocation3 + $0x28] sm:$0xff]
        %v2387 = vld [vmem:[#allocation3 + $0x30] sm:$0xff]
        %v2388 = vld [vmem:[#allocation3 + $0x38] sm:$0xff]
        %s2389 = scalar_lea.vmem %s3, 64
        %v2390 = vld [vmem:[%s2389] sm:$0xf]
        %v2391 = vld [vmem:[%s2389 + $0x4] sm:$0xf]
        %v2392 = vld [vmem:[%s2389 + $0x8] sm:$0xf]
        %v2393 = vld [vmem:[%s2389 + $0xc] sm:$0xf]
        %v2394 = vld [vmem:[%s2389 + $0x10] sm:$0xf]
        %v2395 = vld [vmem:[%s2389 + $0x14] sm:$0xf]
        %v2396 = vld [vmem:[%s2389 + $0x18] sm:$0xf]
        %v2397 = vld [vmem:[%s2389 + $0x1c] sm:$0xf]
        %v2398 = vld [vmem:[%s2389 + $0x20] sm:$0xf]
        %v2399 = vld [vmem:[%s2389 + $0x24] sm:$0xf]
        %v2400 = vld [vmem:[%s2389 + $0x28] sm:$0xf]
        %v2401 = vld [vmem:[%s2389 + $0x2c] sm:$0xf]
        %v2402 = vld [vmem:[%s2389 + $0x30] sm:$0xf]
        %v2403 = vld [vmem:[%s2389 + $0x34] sm:$0xf]
        %v2404 = vld [vmem:[%s2389 + $0x38] sm:$0xf]
        %v2405 = vld [vmem:[%s2389 + $0x3c] sm:$0xf]
        %v2406 = vunpack.c.l.b16 %v2282
        %v2407 = vunpack.c.l.b16 %v2296
        %v2408 = vunpack.c.l.b16 %v2310
        %v2409 = vunpack.c.l.b16 %v2324
        %v2410 = vunpack.c.l.b16 %v2338
        %v2411 = vunpack.c.l.b16 %v2352
        %v2412 = vunpack.c.l.b16 %v2366
        %v2413 = vunpack.c.l.b16 %v2380
        %v2414 = vpack.c.b16 %v2407, %v2406
        %v2415 = vpack.c.b16 %v2409, %v2408
        %v2416 = vpack.c.b16 %v2411, %v2410
        %v2417 = vpack.c.b16 %v2413, %v2412
        %v2438 = vunpack.c.l.b16 %v2390
        %v2439 = vunpack.c.l.b16 %v2391
        %v2440 = vunpack.c.l.b16 %v2392
        %v2441 = vunpack.c.l.b16 %v2393
        %v2442 = vunpack.c.l.b16 %v2394
        %v2443 = vunpack.c.l.b16 %v2395
        %v2444 = vunpack.c.l.b16 %v2396
        %v2445 = vunpack.c.l.b16 %v2397
        %v2446 = vunpack.c.l.b16 %v2398
        %v2447 = vunpack.c.l.b16 %v2399
        %v2448 = vunpack.c.l.b16 %v2400
        %v2449 = vunpack.c.l.b16 %v2401
        %v2450 = vunpack.c.l.b16 %v2402
        %v2451 = vunpack.c.l.b16 %v2403
        %v2452 = vunpack.c.l.b16 %v2404
        %v2453 = vunpack.c.l.b16 %v2405
        %v2454 = vpack.c.b16 %v2439, %v2438
        %v2455 = vpack.c.b16 %v2441, %v2440
        %v2456 = vpack.c.b16 %v2443, %v2442
        %v2457 = vpack.c.b16 %v2445, %v2444
        %v2458 = vpack.c.b16 %v2447, %v2446
        %v2459 = vpack.c.b16 %v2449, %v2448
        %v2460 = vpack.c.b16 %v2451, %v2450
        %v2461 = vpack.c.b16 %v2453, %v2452
        %2470 = vmatprep.subr.bf16.mxu0 0
        %2471 = vmatpush1.bf16.msra.mxu0 %v2454
        %2472 = vmatprep.subr.bf16.mxu0 0
        %2473 = vmatpush1.bf16.msra.mxu0 %v2455
        %2474 = vmatprep.subr.bf16.mxu0 0
        %2475 = vmatpush1.bf16.msra.mxu0 %v2456
        %2476 = vmatprep.subr.bf16.mxu0 0
        %2477 = vmatpush1.bf16.msra.mxu0 %v2457
        %2478 = vmatprep.subr.bf16.mxu0 0
        %2479 = vmatpush1.bf16.msra.mxu0 %v2458
        %2480 = vmatprep.subr.bf16.mxu0 0
        %2481 = vmatpush1.bf16.msra.mxu0 %v2459
        %2482 = vmatprep.subr.bf16.mxu0 0
        %2483 = vmatpush1.bf16.msra.mxu0 %v2460
        %2484 = vmatprep.subr.bf16.mxu0 0
        %2485 = vmatpush1.bf16.msra.mxu0 %v2461
        %2486 = vmatprep.subr.bf16.mxu0 0
        %2487 = vmatpush1.bf16.msra.mxu0 0
        %2488 = vmatprep.subr.bf16.mxu0 0
        %2489 = vmatpush1.bf16.msra.mxu0 0
        %2490 = vmatprep.subr.bf16.mxu0 0
        %2491 = vmatpush1.bf16.msra.mxu0 0
        %2492 = vmatprep.subr.bf16.mxu0 0
        %2493 = vmatpush1.bf16.msra.mxu0 0
        %2494 = vmatprep.subr.bf16.mxu0 0
        %2495 = vmatpush1.bf16.msra.mxu0 0
        %2496 = vmatprep.subr.bf16.mxu0 0
        %2497 = vmatpush1.bf16.msra.mxu0 0
        %2498 = vmatprep.subr.bf16.mxu0 0
        %2499 = vmatpush1.bf16.msra.mxu0 0
        %2500 = vmatprep.subr.bf16.mxu0 0
        %2501 = vmatpush1.bf16.msra.mxu0 0
        %2502 = vmatprep.mubr.bf16.mxu0 0
        %2503 = vmatmul.mubr.bf16.gmra.mrb[0].mxu0 %v2414
        %v2504 = vpop.f32.mrb[0].mxu0
        %v2505 = vadd.f32 0.0, %v2504
        %v2506 = vpop.f32.mrb[0].mxu0
        %v2507 = vpop.f32.mrb[0].mxu0
        %v2508 = vadd.f32 0.0, %v2507
        %v2509 = vpop.f32.mrb[0].mxu0
        %2510 = vmatprep.mubr.bf16.mxu0 0
        %2511 = vmatmul.mubr.bf16.gmra.mrb[0].mxu0 %v2415
        %v2512 = vpop.f32.mrb[0].mxu0
        %v2513 = vadd.f32 0.0, %v2512
        %v2514 = vpop.f32.mrb[0].mxu0
        %v2515 = vpop.f32.mrb[0].mxu0
        %v2516 = vadd.f32 0.0, %v2515
        %v2517 = vpop.f32.mrb[0].mxu0
        %2518 = vmatprep.mubr.bf16.mxu0 0
        %2519 = vmatmul.mubr.bf16.gmra.mrb[0].mxu0 %v2416
        %v2520 = vpop.f32.mrb[0].mxu0
        %v2521 = vadd.f32 0.0, %v2520
        %v2522 = vpop.f32.mrb[0].mxu0
        %v2523 = vpop.f32.mrb[0].mxu0
        %v2524 = vadd.f32 0.0, %v2523
        %v2525 = vpop.f32.mrb[0].mxu0
        %2526 = vmatprep.mubr.bf16.mxu0 0
        %2527 = vmatmul.mubr.bf16.gmra.mrb[0].mxu0 %v2417
        %v2528 = vpop.f32.mrb[0].mxu0
        %v2529 = vadd.f32 0.0, %v2528
        %v2530 = vpop.f32.mrb[0].mxu0
        %v2531 = vpop.f32.mrb[0].mxu0
        %v2532 = vadd.f32 0.0, %v2531
        %v2533 = vpop.f32.mrb[0].mxu0
        %2534 = vdwg.mxu0
        %v2535 = vadd.f32 %v2381, %v2505
        %v2536 = vadd.f32 %v2382, %v2508
        %v2537 = vadd.f32 %v2383, %v2513
        %v2538 = vadd.f32 %v2384, %v2516
        %v2539 = vadd.f32 %v2385, %v2521
        %v2540 = vadd.f32 %v2386, %v2524
        %v2541 = vadd.f32 %v2387, %v2529
        %v2542 = vadd.f32 %v2388, %v2532
        %2543 = vst [vmem:[#allocation3] sm:$0xff] %v2535
        %2544 = vst [vmem:[#allocation3 + $0x8] sm:$0xff] %v2536
        %2545 = vst [vmem:[#allocation3 + $0x10] sm:$0xff] %v2537
        %2546 = vst [vmem:[#allocation3 + $0x18] sm:$0xff] %v2538
        %2547 = vst [vmem:[#allocation3 + $0x20] sm:$0xff] %v2539
        %2548 = vst [vmem:[#allocation3 + $0x28] sm:$0xff] %v2540
        %2549 = vst [vmem:[#allocation3 + $0x30] sm:$0xff] %v2541
        %2550 = vst [vmem:[#allocation3 + $0x38] sm:$0xff] %v2542
        %v2551 = vld [vmem:[#allocation2] sm:$0xe]
        %v2552 = vld [vmem:[#allocation2 + $0x4] sm:$0x1]
        %v2553 = vld [vmem:[#allocation2 + $0x8] sm:$0xe]
        %v2554 = vld [vmem:[#allocation2 + $0xc] sm:$0x1]
        %v2555 = vld [vmem:[#allocation2 + $0x10] sm:$0xe]
        %v2556 = vld [vmem:[#allocation2 + $0x14] sm:$0x1]
        %v2557 = vld [vmem:[#allocation2 + $0x18] sm:$0xe]
        %v2558 = vld [vmem:[#allocation2 + $0x1c] sm:$0x1]
        %v2559 = vld [vmem:[#allocation2 + $0x20] sm:$0xe]
        %v2560 = vld [vmem:[#allocation2 + $0x24] sm:$0x1]
        %v2561 = vld [vmem:[#allocation2 + $0x28] sm:$0xe]
        %v2562 = vld [vmem:[#allocation2 + $0x2c] sm:$0x1]
        %v2563 = vld [vmem:[#allocation2 + $0x30] sm:$0xe]
        %v2564 = vld [vmem:[#allocation2 + $0x34] sm:$0x1]
        %v2565 = vld [vmem:[#allocation2 + $0x38] sm:$0xe]
        %v2566 = vld [vmem:[#allocation2 + $0x3c] sm:$0x1]
        %vm2583 = vcmask 1042432
        %vm2584 = vcmask 1046532
        %vm2585 = vmor %vm2583, %vm2584
        %v2586 = vrot.slane %v2551, 5
        %v2587 = vrot.slane %v2586, 4
        %v2588 = vrot.slane %v2552, 5
        %v2589 = vsel %vm2585, %v2587, %v2588
        %v2590 = vrot.slane %v2553, 5
        %v2591 = vrot.slane %v2590, 4
        %v2592 = vrot.slane %v2554, 5
        %v2593 = vsel %vm2585, %v2591, %v2592
        %v2594 = vrot.slane %v2555, 5
        %v2595 = vrot.slane %v2594, 4
        %v2596 = vrot.slane %v2556, 5
        %v2597 = vsel %vm2585, %v2595, %v2596
        %v2598 = vrot.slane %v2557, 5
        %v2599 = vrot.slane %v2598, 4
        %v2600 = vrot.slane %v2558, 5
        %v2601 = vsel %vm2585, %v2599, %v2600
        %v2602 = vrot.slane %v2559, 5
        %v2603 = vrot.slane %v2602, 4
        %v2604 = vrot.slane %v2560, 5
        %v2605 = vsel %vm2585, %v2603, %v2604
        %v2606 = vrot.slane %v2561, 5
        %v2607 = vrot.slane %v2606, 4
        %v2608 = vrot.slane %v2562, 5
        %v2609 = vsel %vm2585, %v2607, %v2608
        %v2610 = vrot.slane %v2563, 5
        %v2611 = vrot.slane %v2610, 4
        %v2612 = vrot.slane %v2564, 5
        %v2613 = vsel %vm2585, %v2611, %v2612
        %v2614 = vrot.slane %v2565, 5
        %v2615 = vrot.slane %v2614, 4
        %v2616 = vrot.slane %v2566, 5
        %v2617 = vsel %vm2585, %v2615, %v2616
        %v2618 = vld [vmem:[#allocation3] sm:$0xff]
        %v2619 = vld [vmem:[#allocation3 + $0x8] sm:$0xff]
        %v2620 = vld [vmem:[#allocation3 + $0x10] sm:$0xff]
        %v2621 = vld [vmem:[#allocation3 + $0x18] sm:$0xff]
        %v2622 = vld [vmem:[#allocation3 + $0x20] sm:$0xff]
        %v2623 = vld [vmem:[#allocation3 + $0x28] sm:$0xff]
        %v2624 = vld [vmem:[#allocation3 + $0x30] sm:$0xff]
        %v2625 = vld [vmem:[#allocation3 + $0x38] sm:$0xff]
        %s2626 = scalar_lea.vmem %s3, 128
        %v2627 = vld [vmem:[%s2626] sm:$0xf]
        %v2628 = vld [vmem:[%s2626 + $0x4] sm:$0xf]
        %v2629 = vld [vmem:[%s2626 + $0x8] sm:$0xf]
        %v2630 = vld [vmem:[%s2626 + $0xc] sm:$0xf]
        %v2631 = vld [vmem:[%s2626 + $0x10] sm:$0xf]
        %v2632 = vld [vmem:[%s2626 + $0x14] sm:$0xf]
        %v2633 = vld [vmem:[%s2626 + $0x18] sm:$0xf]
        %v2634 = vld [vmem:[%s2626 + $0x1c] sm:$0xf]
        %v2635 = vld [vmem:[%s2626 + $0x20] sm:$0xf]
        %v2636 = vld [vmem:[%s2626 + $0x24] sm:$0xf]
        %v2637 = vld [vmem:[%s2626 + $0x28] sm:$0xf]
        %v2638 = vld [vmem:[%s2626 + $0x2c] sm:$0xf]
        %v2639 = vld [vmem:[%s2626 + $0x30] sm:$0xf]
        %v2640 = vld [vmem:[%s2626 + $0x34] sm:$0xf]
        %v2641 = vld [vmem:[%s2626 + $0x38] sm:$0xf]
        %v2642 = vld [vmem:[%s2626 + $0x3c] sm:$0xf]
        %v2643 = vunpack.c.l.b16 %v2589
        %v2644 = vunpack.c.l.b16 %v2593
        %v2645 = vunpack.c.l.b16 %v2597
        %v2646 = vunpack.c.l.b16 %v2601
        %v2647 = vunpack.c.l.b16 %v2605
        %v2648 = vunpack.c.l.b16 %v2609
        %v2649 = vunpack.c.l.b16 %v2613
        %v2650 = vunpack.c.l.b16 %v2617
        %v2651 = vpack.c.b16 %v2644, %v2643
        %v2652 = vpack.c.b16 %v2646, %v2645
        %v2653 = vpack.c.b16 %v2648, %v2647
        %v2654 = vpack.c.b16 %v2650, %v2649
        %v2675 = vunpack.c.l.b16 %v2627
        %v2676 = vunpack.c.l.b16 %v2628
        %v2677 = vunpack.c.l.b16 %v2629
        %v2678 = vunpack.c.l.b16 %v2630
        %v2679 = vunpack.c.l.b16 %v2631
        %v2680 = vunpack.c.l.b16 %v2632
        %v2681 = vunpack.c.l.b16 %v2633
        %v2682 = vunpack.c.l.b16 %v2634
        %v2683 = vunpack.c.l.b16 %v2635
        %v2684 = vunpack.c.l.b16 %v2636
        %v2685 = vunpack.c.l.b16 %v2637
        %v2686 = vunpack.c.l.b16 %v2638
        %v2687 = vunpack.c.l.b16 %v2639
        %v2688 = vunpack.c.l.b16 %v2640
        %v2689 = vunpack.c.l.b16 %v2641
        %v2690 = vunpack.c.l.b16 %v2642
        %v2691 = vpack.c.b16 %v2676, %v2675
        %v2692 = vpack.c.b16 %v2678, %v2677
        %v2693 = vpack.c.b16 %v2680, %v2679
        %v2694 = vpack.c.b16 %v2682, %v2681
        %v2695 = vpack.c.b16 %v2684, %v2683
        %v2696 = vpack.c.b16 %v2686, %v2685
        %v2697 = vpack.c.b16 %v2688, %v2687
        %v2698 = vpack.c.b16 %v2690, %v2689
        %2707 = vmatprep.subr.bf16.mxu0 0
        %2708 = vmatpush1.bf16.msra.mxu0 %v2691
        %2709 = vmatprep.subr.bf16.mxu0 0
        %2710 = vmatpush1.bf16.msra.mxu0 %v2692
        %2711 = vmatprep.subr.bf16.mxu0 0
        %2712 = vmatpush1.bf16.msra.mxu0 %v2693
        %2713 = vmatprep.subr.bf16.mxu0 0
        %2714 = vmatpush1.bf16.msra.mxu0 %v2694
        %2715 = vmatprep.subr.bf16.mxu0 0
        %2716 = vmatpush1.bf16.msra.mxu0 %v2695
        %2717 = vmatprep.subr.bf16.mxu0 0
        %2718 = vmatpush1.bf16.msra.mxu0 %v2696
        %2719 = vmatprep.subr.bf16.mxu0 0
        %2720 = vmatpush1.bf16.msra.mxu0 %v2697
        %2721 = vmatprep.subr.bf16.mxu0 0
        %2722 = vmatpush1.bf16.msra.mxu0 %v2698
        %2723 = vmatprep.subr.bf16.mxu0 0
        %2724 = vmatpush1.bf16.msra.mxu0 0
        %2725 = vmatprep.subr.bf16.mxu0 0
        %2726 = vmatpush1.bf16.msra.mxu0 0
        %2727 = vmatprep.subr.bf16.mxu0 0
        %2728 = vmatpush1.bf16.msra.mxu0 0
        %2729 = vmatprep.subr.bf16.mxu0 0
        %2730 = vmatpush1.bf16.msra.mxu0 0
        %2731 = vmatprep.subr.bf16.mxu0 0
        %2732 = vmatpush1.bf16.msra.mxu0 0
        %2733 = vmatprep.subr.bf16.mxu0 0
        %2734 = vmatpush1.bf16.msra.mxu0 0
        %2735 = vmatprep.subr.bf16.mxu0 0
        %2736 = vmatpush1.bf16.msra.mxu0 0
        %2737 = vmatprep.subr.bf16.mxu0 0
        %2738 = vmatpush1.bf16.msra.mxu0 0
        %2739 = vmatprep.mubr.bf16.mxu0 0
        %2740 = vmatmul.mubr.bf16.gmra.mrb[0].mxu0 %v2651
        %v2741 = vpop.f32.mrb[0].mxu0
        %v2742 = vadd.f32 0.0, %v2741
        %v2743 = vpop.f32.mrb[0].mxu0
        %v2744 = vpop.f32.mrb[0].mxu0
        %v2745 = vadd.f32 0.0, %v2744
        %v2746 = vpop.f32.mrb[0].mxu0
        %2747 = vmatprep.mubr.bf16.mxu0 0
        %2748 = vmatmul.mubr.bf16.gmra.mrb[0].mxu0 %v2652
        %v2749 = vpop.f32.mrb[0].mxu0
        %v2750 = vadd.f32 0.0, %v2749
        %v2751 = vpop.f32.mrb[0].mxu0
        %v2752 = vpop.f32.mrb[0].mxu0
        %v2753 = vadd.f32 0.0, %v2752
        %v2754 = vpop.f32.mrb[0].mxu0
        %2755 = vmatprep.mubr.bf16.mxu0 0
        %2756 = vmatmul.mubr.bf16.gmra.mrb[0].mxu0 %v2653
        %v2757 = vpop.f32.mrb[0].mxu0
        %v2758 = vadd.f32 0.0, %v2757
        %v2759 = vpop.f32.mrb[0].mxu0
        %v2760 = vpop.f32.mrb[0].mxu0
        %v2761 = vadd.f32 0.0, %v2760
        %v2762 = vpop.f32.mrb[0].mxu0
        %2763 = vmatprep.mubr.bf16.mxu0 0
        %2764 = vmatmul.mubr.bf16.gmra.mrb[0].mxu0 %v2654
        %v2765 = vpop.f32.mrb[0].mxu0
        %v2766 = vadd.f32 0.0, %v2765
        %v2767 = vpop.f32.mrb[0].mxu0
        %v2768 = vpop.f32.mrb[0].mxu0
        %v2769 = vadd.f32 0.0, %v2768
        %v2770 = vpop.f32.mrb[0].mxu0
        %2771 = vdwg.mxu0
        %v2772 = vadd.f32 %v2618, %v2742
        %v2773 = vadd.f32 %v2619, %v2745
        %v2774 = vadd.f32 %v2620, %v2750
        %v2775 = vadd.f32 %v2621, %v2753
        %v2776 = vadd.f32 %v2622, %v2758
        %v2777 = vadd.f32 %v2623, %v2761
        %v2778 = vadd.f32 %v2624, %v2766
        %v2779 = vadd.f32 %v2625, %v2769
        %2780 = vst [vmem:[#allocation3] sm:$0xff] %v2772
        %2781 = vst [vmem:[#allocation3 + $0x8] sm:$0xff] %v2773
        %2782 = vst [vmem:[#allocation3 + $0x10] sm:$0xff] %v2774
        %2783 = vst [vmem:[#allocation3 + $0x18] sm:$0xff] %v2775
        %2784 = vst [vmem:[#allocation3 + $0x20] sm:$0xff] %v2776
        %2785 = vst [vmem:[#allocation3 + $0x28] sm:$0xff] %v2777
        %2786 = vst [vmem:[#allocation3 + $0x30] sm:$0xff] %v2778
        %2787 = vst [vmem:[#allocation3 + $0x38] sm:$0xff] %v2779
        %v2788 = vld [vmem:[%s2005] sm:$0xf]
        %v2789 = vld [vmem:[%s2005 + $0x8] sm:$0xf]
        %v2790 = vld [vmem:[%s2005 + $0x10] sm:$0xf]
        %v2791 = vld [vmem:[%s2005 + $0x18] sm:$0xf]
        %v2792 = vld [vmem:[%s2005 + $0x20] sm:$0xf]
        %v2793 = vld [vmem:[%s2005 + $0x28] sm:$0xf]
        %v2794 = vld [vmem:[%s2005 + $0x30] sm:$0xf]
        %v2795 = vld [vmem:[%s2005 + $0x38] sm:$0xf]
        %v2796 = vld [vmem:[#allocation3] sm:$0xff]
        %v2797 = vld [vmem:[#allocation3 + $0x8] sm:$0xff]
        %v2798 = vld [vmem:[#allocation3 + $0x10] sm:$0xff]
        %v2799 = vld [vmem:[#allocation3 + $0x18] sm:$0xff]
        %v2800 = vld [vmem:[#allocation3 + $0x20] sm:$0xff]
        %v2801 = vld [vmem:[#allocation3 + $0x28] sm:$0xff]
        %v2802 = vld [vmem:[#allocation3 + $0x30] sm:$0xff]
        %v2803 = vld [vmem:[#allocation3 + $0x38] sm:$0xff]
        %s2804 = scalar_lea.vmem %s3, 192
        %v2805 = vld [vmem:[%s2804] sm:$0xf]
        %v2806 = vld [vmem:[%s2804 + $0x4] sm:$0xf]
        %v2807 = vld [vmem:[%s2804 + $0x8] sm:$0xf]
        %v2808 = vld [vmem:[%s2804 + $0xc] sm:$0xf]
        %v2809 = vld [vmem:[%s2804 + $0x10] sm:$0xf]
        %v2810 = vld [vmem:[%s2804 + $0x14] sm:$0xf]
        %v2811 = vld [vmem:[%s2804 + $0x18] sm:$0xf]
        %v2812 = vld [vmem:[%s2804 + $0x1c] sm:$0xf]
        %v2813 = vld [vmem:[%s2804 + $0x20] sm:$0xf]
        %v2814 = vld [vmem:[%s2804 + $0x24] sm:$0xf]
        %v2815 = vld [vmem:[%s2804 + $0x28] sm:$0xf]
        %v2816 = vld [vmem:[%s2804 + $0x2c] sm:$0xf]
        %v2817 = vld [vmem:[%s2804 + $0x30] sm:$0xf]
        %v2818 = vld [vmem:[%s2804 + $0x34] sm:$0xf]
        %v2819 = vld [vmem:[%s2804 + $0x38] sm:$0xf]
        %v2820 = vld [vmem:[%s2804 + $0x3c] sm:$0xf]
        %v2829 = vunpack.c.l.b16 %v2788
        %v2830 = vunpack.c.l.b16 %v2789
        %v2831 = vunpack.c.l.b16 %v2790
        %v2832 = vunpack.c.l.b16 %v2791
        %v2833 = vunpack.c.l.b16 %v2792
        %v2834 = vunpack.c.l.b16 %v2793
        %v2835 = vunpack.c.l.b16 %v2794
        %v2836 = vunpack.c.l.b16 %v2795
        %v2837 = vpack.c.b16 %v2830, %v2829
        %v2838 = vpack.c.b16 %v2832, %v2831
        %v2839 = vpack.c.b16 %v2834, %v2833
        %v2840 = vpack.c.b16 %v2836, %v2835
        %v2861 = vunpack.c.l.b16 %v2805
        %v2862 = vunpack.c.l.b16 %v2806
        %v2863 = vunpack.c.l.b16 %v2807
        %v2864 = vunpack.c.l.b16 %v2808
        %v2865 = vunpack.c.l.b16 %v2809
        %v2866 = vunpack.c.l.b16 %v2810
        %v2867 = vunpack.c.l.b16 %v2811
        %v2868 = vunpack.c.l.b16 %v2812
        %v2869 = vunpack.c.l.b16 %v2813
        %v2870 = vunpack.c.l.b16 %v2814
        %v2871 = vunpack.c.l.b16 %v2815
        %v2872 = vunpack.c.l.b16 %v2816
        %v2873 = vunpack.c.l.b16 %v2817
        %v2874 = vunpack.c.l.b16 %v2818
        %v2875 = vunpack.c.l.b16 %v2819
        %v2876 = vunpack.c.l.b16 %v2820
        %v2877 = vpack.c.b16 %v2862, %v2861
        %v2878 = vpack.c.b16 %v2864, %v2863
        %v2879 = vpack.c.b16 %v2866, %v2865
        %v2880 = vpack.c.b16 %v2868, %v2867
        %v2881 = vpack.c.b16 %v2870, %v2869
        %v2882 = vpack.c.b16 %v2872, %v2871
        %v2883 = vpack.c.b16 %v2874, %v2873
        %v2884 = vpack.c.b16 %v2876, %v2875
        %2893 = vmatprep.subr.bf16.mxu0 0
        %2894 = vmatpush1.bf16.msra.mxu0 %v2877
        %2895 = vmatprep.subr.bf16.mxu0 0
        %2896 = vmatpush1.bf16.msra.mxu0 %v2878
        %2897 = vmatprep.subr.bf16.mxu0 0
        %2898 = vmatpush1.bf16.msra.mxu0 %v2879
        %2899 = vmatprep.subr.bf16.mxu0 0
        %2900 = vmatpush1.bf16.msra.mxu0 %v2880
        %2901 = vmatprep.subr.bf16.mxu0 0
        %2902 = vmatpush1.bf16.msra.mxu0 %v2881
        %2903 = vmatprep.subr.bf16.mxu0 0
        %2904 = vmatpush1.bf16.msra.mxu0 %v2882
        %2905 = vmatprep.subr.bf16.mxu0 0
        %2906 = vmatpush1.bf16.msra.mxu0 %v2883
        %2907 = vmatprep.subr.bf16.mxu0 0
        %2908 = vmatpush1.bf16.msra.mxu0 %v2884
        %2909 = vmatprep.subr.bf16.mxu0 0
        %2910 = vmatpush1.bf16.msra.mxu0 0
        %2911 = vmatprep.subr.bf16.mxu0 0
        %2912 = vmatpush1.bf16.msra.mxu0 0
        %2913 = vmatprep.subr.bf16.mxu0 0
        %2914 = vmatpush1.bf16.msra.mxu0 0
        %2915 = vmatprep.subr.bf16.mxu0 0
        %2916 = vmatpush1.bf16.msra.mxu0 0
        %2917 = vmatprep.subr.bf16.mxu0 0
        %2918 = vmatpush1.bf16.msra.mxu0 0
        %2919 = vmatprep.subr.bf16.mxu0 0
        %2920 = vmatpush1.bf16.msra.mxu0 0
        %2921 = vmatprep.subr.bf16.mxu0 0
        %2922 = vmatpush1.bf16.msra.mxu0 0
        %2923 = vmatprep.subr.bf16.mxu0 0
        %2924 = vmatpush1.bf16.msra.mxu0 0
        %2925 = vmatprep.mubr.bf16.mxu0 0
        %2926 = vmatmul.mubr.bf16.gmra.mrb[0].mxu0 %v2837
        %v2927 = vpop.f32.mrb[0].mxu0
        %v2928 = vadd.f32 0.0, %v2927
        %v2929 = vpop.f32.mrb[0].mxu0
        %v2930 = vpop.f32.mrb[0].mxu0
        %v2931 = vadd.f32 0.0, %v2930
        %v2932 = vpop.f32.mrb[0].mxu0
        %2933 = vmatprep.mubr.bf16.mxu0 0
        %2934 = vmatmul.mubr.bf16.gmra.mrb[0].mxu0 %v2838
        %v2935 = vpop.f32.mrb[0].mxu0
        %v2936 = vadd.f32 0.0, %v2935
        %v2937 = vpop.f32.mrb[0].mxu0
        %v2938 = vpop.f32.mrb[0].mxu0
        %v2939 = vadd.f32 0.0, %v2938
        %v2940 = vpop.f32.mrb[0].mxu0
        %2941 = vmatprep.mubr.bf16.mxu0 0
        %2942 = vmatmul.mubr.bf16.gmra.mrb[0].mxu0 %v2839
        %v2943 = vpop.f32.mrb[0].mxu0
        %v2944 = vadd.f32 0.0, %v2943
        %v2945 = vpop.f32.mrb[0].mxu0
        %v2946 = vpop.f32.mrb[0].mxu0
        %v2947 = vadd.f32 0.0, %v2946
        %v2948 = vpop.f32.mrb[0].mxu0
        %2949 = vmatprep.mubr.bf16.mxu0 0
        %2950 = vmatmul.mubr.bf16.gmra.mrb[0].mxu0 %v2840
        %v2951 = vpop.f32.mrb[0].mxu0
        %v2952 = vadd.f32 0.0, %v2951
        %v2953 = vpop.f32.mrb[0].mxu0
        %v2954 = vpop.f32.mrb[0].mxu0
        %v2955 = vadd.f32 0.0, %v2954
        %v2956 = vpop.f32.mrb[0].mxu0
        %2957 = vdwg.mxu0
        %v2958 = vadd.f32 %v2796, %v2928
        %v2959 = vadd.f32 %v2797, %v2931
        %v2960 = vadd.f32 %v2798, %v2936
        %v2961 = vadd.f32 %v2799, %v2939
        %v2962 = vadd.f32 %v2800, %v2944
        %v2963 = vadd.f32 %v2801, %v2947
        %v2964 = vadd.f32 %v2802, %v2952
        %v2965 = vadd.f32 %v2803, %v2955
        %2966 = vst [vmem:[#allocation3] sm:$0xff] %v2958
        %2967 = vst [vmem:[#allocation3 + $0x8] sm:$0xff] %v2959
        %2968 = vst [vmem:[#allocation3 + $0x10] sm:$0xff] %v2960
        %2969 = vst [vmem:[#allocation3 + $0x18] sm:$0xff] %v2961
        %2970 = vst [vmem:[#allocation3 + $0x20] sm:$0xff] %v2962
        %2971 = vst [vmem:[#allocation3 + $0x28] sm:$0xff] %v2963
        %2972 = vst [vmem:[#allocation3 + $0x30] sm:$0xff] %v2964
        %2973 = vst [vmem:[#allocation3 + $0x38] sm:$0xff] %v2965
        %v2974 = vld [vmem:[%s2005] sm:$0xf]
        %v2975 = vld [vmem:[%s2005 + $0x4] sm:$0x1]
        %v2976 = vld [vmem:[%s2005 + $0x8] sm:$0xf]
        %v2977 = vld [vmem:[%s2005 + $0xc] sm:$0x1]
        %v2978 = vld [vmem:[%s2005 + $0x10] sm:$0xf]
        %v2979 = vld [vmem:[%s2005 + $0x14] sm:$0x1]
        %v2980 = vld [vmem:[%s2005 + $0x18] sm:$0xf]
        %v2981 = vld [vmem:[%s2005 + $0x1c] sm:$0x1]
        %v2982 = vld [vmem:[%s2005 + $0x20] sm:$0xf]
        %v2983 = vld [vmem:[%s2005 + $0x24] sm:$0x1]
        %v2984 = vld [vmem:[%s2005 + $0x28] sm:$0xf]
        %v2985 = vld [vmem:[%s2005 + $0x2c] sm:$0x1]
        %v2986 = vld [vmem:[%s2005 + $0x30] sm:$0xf]
        %v2987 = vld [vmem:[%s2005 + $0x34] sm:$0x1]
        %v2988 = vld [vmem:[%s2005 + $0x38] sm:$0xf]
        %v2989 = vld [vmem:[%s2005 + $0x3c] sm:$0x1]
        %v2991 = vshrl.u32 %v2974, 16
        %v2993 = vrot.slane %v2991, 4
        %v2994 = vshll.u32 %v2974, 16
        %v2996 = vrot.slane %v2994, 5
        %v2997 = vor.u32 %v2993, %v2996
        %v2998 = vrot.slane %v2997, 4
        %v3000 = vshll.u32 %v2975, 16
        %v3002 = vrot.slane %v3000, 5
        %v3003 = vsel %vm579, %v2998, %v3002
        %v3005 = vshrl.u32 %v2976, 16
        %v3007 = vrot.slane %v3005, 4
        %v3008 = vshll.u32 %v2976, 16
        %v3010 = vrot.slane %v3008, 5
        %v3011 = vor.u32 %v3007, %v3010
        %v3012 = vrot.slane %v3011, 4
        %v3014 = vshll.u32 %v2977, 16
        %v3016 = vrot.slane %v3014, 5
        %v3017 = vsel %vm579, %v3012, %v3016
        %v3019 = vshrl.u32 %v2978, 16
        %v3021 = vrot.slane %v3019, 4
        %v3022 = vshll.u32 %v2978, 16
        %v3024 = vrot.slane %v3022, 5
        %v3025 = vor.u32 %v3021, %v3024
        %v3026 = vrot.slane %v3025, 4
        %v3028 = vshll.u32 %v2979, 16
        %v3030 = vrot.slane %v3028, 5
        %v3031 = vsel %vm579, %v3026, %v3030
        %v3033 = vshrl.u32 %v2980, 16
        %v3035 = vrot.slane %v3033, 4
        %v3036 = vshll.u32 %v2980, 16
        %v3038 = vrot.slane %v3036, 5
        %v3039 = vor.u32 %v3035, %v3038
        %v3040 = vrot.slane %v3039, 4
        %v3042 = vshll.u32 %v2981, 16
        %v3044 = vrot.slane %v3042, 5
        %v3045 = vsel %vm579, %v3040, %v3044
        %v3047 = vshrl.u32 %v2982, 16
        %v3049 = vrot.slane %v3047, 4
        %v3050 = vshll.u32 %v2982, 16
        %v3052 = vrot.slane %v3050, 5
        %v3053 = vor.u32 %v3049, %v3052
        %v3054 = vrot.slane %v3053, 4
        %v3056 = vshll.u32 %v2983, 16
        %v3058 = vrot.slane %v3056, 5
        %v3059 = vsel %vm579, %v3054, %v3058
        %v3061 = vshrl.u32 %v2984, 16
        %v3063 = vrot.slane %v3061, 4
        %v3064 = vshll.u32 %v2984, 16
        %v3066 = vrot.slane %v3064, 5
        %v3067 = vor.u32 %v3063, %v3066
        %v3068 = vrot.slane %v3067, 4
        %v3070 = vshll.u32 %v2985, 16
        %v3072 = vrot.slane %v3070, 5
        %v3073 = vsel %vm579, %v3068, %v3072
        %v3075 = vshrl.u32 %v2986, 16
        %v3077 = vrot.slane %v3075, 4
        %v3078 = vshll.u32 %v2986, 16
        %v3080 = vrot.slane %v3078, 5
        %v3081 = vor.u32 %v3077, %v3080
        %v3082 = vrot.slane %v3081, 4
        %v3084 = vshll.u32 %v2987, 16
        %v3086 = vrot.slane %v3084, 5
        %v3087 = vsel %vm579, %v3082, %v3086
        %v3089 = vshrl.u32 %v2988, 16
        %v3091 = vrot.slane %v3089, 4
        %v3092 = vshll.u32 %v2988, 16
        %v3094 = vrot.slane %v3092, 5
        %v3095 = vor.u32 %v3091, %v3094
        %v3096 = vrot.slane %v3095, 4
        %v3098 = vshll.u32 %v2989, 16
        %v3100 = vrot.slane %v3098, 5
        %v3101 = vsel %vm579, %v3096, %v3100
        %v3102 = vld [vmem:[#allocation3] sm:$0xff]
        %v3103 = vld [vmem:[#allocation3 + $0x8] sm:$0xff]
        %v3104 = vld [vmem:[#allocation3 + $0x10] sm:$0xff]
        %v3105 = vld [vmem:[#allocation3 + $0x18] sm:$0xff]
        %v3106 = vld [vmem:[#allocation3 + $0x20] sm:$0xff]
        %v3107 = vld [vmem:[#allocation3 + $0x28] sm:$0xff]
        %v3108 = vld [vmem:[#allocation3 + $0x30] sm:$0xff]
        %v3109 = vld [vmem:[#allocation3 + $0x38] sm:$0xff]
        %s3110 = scalar_lea.vmem %s3, 256
        %v3111 = vld [vmem:[%s3110] sm:$0xf]
        %v3112 = vld [vmem:[%s3110 + $0x4] sm:$0xf]
        %v3113 = vld [vmem:[%s3110 + $0x8] sm:$0xf]
        %v3114 = vld [vmem:[%s3110 + $0xc] sm:$0xf]
        %v3115 = vld [vmem:[%s3110 + $0x10] sm:$0xf]
        %v3116 = vld [vmem:[%s3110 + $0x14] sm:$0xf]
        %v3117 = vld [vmem:[%s3110 + $0x18] sm:$0xf]
        %v3118 = vld [vmem:[%s3110 + $0x1c] sm:$0xf]
        %v3119 = vld [vmem:[%s3110 + $0x20] sm:$0xf]
        %v3120 = vld [vmem:[%s3110 + $0x24] sm:$0xf]
        %v3121 = vld [vmem:[%s3110 + $0x28] sm:$0xf]
        %v3122 = vld [vmem:[%s3110 + $0x2c] sm:$0xf]
        %v3123 = vld [vmem:[%s3110 + $0x30] sm:$0xf]
        %v3124 = vld [vmem:[%s3110 + $0x34] sm:$0xf]
        %v3125 = vld [vmem:[%s3110 + $0x38] sm:$0xf]
        %v3126 = vld [vmem:[%s3110 + $0x3c] sm:$0xf]
        %v3127 = vunpack.c.l.b16 %v3003
        %v3128 = vunpack.c.l.b16 %v3017
        %v3129 = vunpack.c.l.b16 %v3031
        %v3130 = vunpack.c.l.b16 %v3045
        %v3131 = vunpack.c.l.b16 %v3059
        %v3132 = vunpack.c.l.b16 %v3073
        %v3133 = vunpack.c.l.b16 %v3087
        %v3134 = vunpack.c.l.b16 %v3101
        %v3135 = vpack.c.b16 %v3128, %v3127
        %v3136 = vpack.c.b16 %v3130, %v3129
        %v3137 = vpack.c.b16 %v3132, %v3131
        %v3138 = vpack.c.b16 %v3134, %v3133
        %v3159 = vunpack.c.l.b16 %v3111
        %v3160 = vunpack.c.l.b16 %v3112
        %v3161 = vunpack.c.l.b16 %v3113
        %v3162 = vunpack.c.l.b16 %v3114
        %v3163 = vunpack.c.l.b16 %v3115
        %v3164 = vunpack.c.l.b16 %v3116
        %v3165 = vunpack.c.l.b16 %v3117
        %v3166 = vunpack.c.l.b16 %v3118
        %v3167 = vunpack.c.l.b16 %v3119
        %v3168 = vunpack.c.l.b16 %v3120
        %v3169 = vunpack.c.l.b16 %v3121
        %v3170 = vunpack.c.l.b16 %v3122
        %v3171 = vunpack.c.l.b16 %v3123
        %v3172 = vunpack.c.l.b16 %v3124
        %v3173 = vunpack.c.l.b16 %v3125
        %v3174 = vunpack.c.l.b16 %v3126
        %v3175 = vpack.c.b16 %v3160, %v3159
        %v3176 = vpack.c.b16 %v3162, %v3161
        %v3177 = vpack.c.b16 %v3164, %v3163
        %v3178 = vpack.c.b16 %v3166, %v3165
        %v3179 = vpack.c.b16 %v3168, %v3167
        %v3180 = vpack.c.b16 %v3170, %v3169
        %v3181 = vpack.c.b16 %v3172, %v3171
        %v3182 = vpack.c.b16 %v3174, %v3173
        %3191 = vmatprep.subr.bf16.mxu0 0
        %3192 = vmatpush1.bf16.msra.mxu0 %v3175
        %3193 = vmatprep.subr.bf16.mxu0 0
        %3194 = vmatpush1.bf16.msra.mxu0 %v3176
        %3195 = vmatprep.subr.bf16.mxu0 0
        %3196 = vmatpush1.bf16.msra.mxu0 %v3177
        %3197 = vmatprep.subr.bf16.mxu0 0
        %3198 = vmatpush1.bf16.msra.mxu0 %v3178
        %3199 = vmatprep.subr.bf16.mxu0 0
        %3200 = vmatpush1.bf16.msra.mxu0 %v3179
        %3201 = vmatprep.subr.bf16.mxu0 0
        %3202 = vmatpush1.bf16.msra.mxu0 %v3180
        %3203 = vmatprep.subr.bf16.mxu0 0
        %3204 = vmatpush1.bf16.msra.mxu0 %v3181
        %3205 = vmatprep.subr.bf16.mxu0 0
        %3206 = vmatpush1.bf16.msra.mxu0 %v3182
        %3207 = vmatprep.subr.bf16.mxu0 0
        %3208 = vmatpush1.bf16.msra.mxu0 0
        %3209 = vmatprep.subr.bf16.mxu0 0
        %3210 = vmatpush1.bf16.msra.mxu0 0
        %3211 = vmatprep.subr.bf16.mxu0 0
        %3212 = vmatpush1.bf16.msra.mxu0 0
        %3213 = vmatprep.subr.bf16.mxu0 0
        %3214 = vmatpush1.bf16.msra.mxu0 0
        %3215 = vmatprep.subr.bf16.mxu0 0
        %3216 = vmatpush1.bf16.msra.mxu0 0
        %3217 = vmatprep.subr.bf16.mxu0 0
        %3218 = vmatpush1.bf16.msra.mxu0 0
        %3219 = vmatprep.subr.bf16.mxu0 0
        %3220 = vmatpush1.bf16.msra.mxu0 0
        %3221 = vmatprep.subr.bf16.mxu0 0
        %3222 = vmatpush1.bf16.msra.mxu0 0
        %3223 = vmatprep.mubr.bf16.mxu0 0
        %3224 = vmatmul.mubr.bf16.gmra.mrb[0].mxu0 %v3135
        %v3225 = vpop.f32.mrb[0].mxu0
        %v3226 = vadd.f32 0.0, %v3225
        %v3227 = vpop.f32.mrb[0].mxu0
        %v3228 = vpop.f32.mrb[0].mxu0
        %v3229 = vadd.f32 0.0, %v3228
        %v3230 = vpop.f32.mrb[0].mxu0
        %3231 = vmatprep.mubr.bf16.mxu0 0
        %3232 = vmatmul.mubr.bf16.gmra.mrb[0].mxu0 %v3136
        %v3233 = vpop.f32.mrb[0].mxu0
        %v3234 = vadd.f32 0.0, %v3233
        %v3235 = vpop.f32.mrb[0].mxu0
        %v3236 = vpop.f32.mrb[0].mxu0
        %v3237 = vadd.f32 0.0, %v3236
        %v3238 = vpop.f32.mrb[0].mxu0
        %3239 = vmatprep.mubr.bf16.mxu0 0
        %3240 = vmatmul.mubr.bf16.gmra.mrb[0].mxu0 %v3137
        %v3241 = vpop.f32.mrb[0].mxu0
        %v3242 = vadd.f32 0.0, %v3241
        %v3243 = vpop.f32.mrb[0].mxu0
        %v3244 = vpop.f32.mrb[0].mxu0
        %v3245 = vadd.f32 0.0, %v3244
        %v3246 = vpop.f32.mrb[0].mxu0
        %3247 = vmatprep.mubr.bf16.mxu0 0
        %3248 = vmatmul.mubr.bf16.gmra.mrb[0].mxu0 %v3138
        %v3249 = vpop.f32.mrb[0].mxu0
        %v3250 = vadd.f32 0.0, %v3249
        %v3251 = vpop.f32.mrb[0].mxu0
        %v3252 = vpop.f32.mrb[0].mxu0
        %v3253 = vadd.f32 0.0, %v3252
        %v3254 = vpop.f32.mrb[0].mxu0
        %3255 = vdwg.mxu0
        %v3256 = vadd.f32 %v3102, %v3226
        %v3257 = vadd.f32 %v3103, %v3229
        %v3258 = vadd.f32 %v3104, %v3234
        %v3259 = vadd.f32 %v3105, %v3237
        %v3260 = vadd.f32 %v3106, %v3242
        %v3261 = vadd.f32 %v3107, %v3245
        %v3262 = vadd.f32 %v3108, %v3250
        %v3263 = vadd.f32 %v3109, %v3253
        %3264 = vst [vmem:[#allocation3] sm:$0xff] %v3256
        %3265 = vst [vmem:[#allocation3 + $0x8] sm:$0xff] %v3257
        %3266 = vst [vmem:[#allocation3 + $0x10] sm:$0xff] %v3258
        %3267 = vst [vmem:[#allocation3 + $0x18] sm:$0xff] %v3259
        %3268 = vst [vmem:[#allocation3 + $0x20] sm:$0xff] %v3260
        %3269 = vst [vmem:[#allocation3 + $0x28] sm:$0xff] %v3261
        %3270 = vst [vmem:[#allocation3 + $0x30] sm:$0xff] %v3262
        %3271 = vst [vmem:[#allocation3 + $0x38] sm:$0xff] %v3263
        %v3272 = vld [vmem:[%s2005] sm:$0xe]
        %v3273 = vld [vmem:[%s2005 + $0x4] sm:$0x1]
        %v3274 = vld [vmem:[%s2005 + $0x8] sm:$0xe]
        %v3275 = vld [vmem:[%s2005 + $0xc] sm:$0x1]
        %v3276 = vld [vmem:[%s2005 + $0x10] sm:$0xe]
        %v3277 = vld [vmem:[%s2005 + $0x14] sm:$0x1]
        %v3278 = vld [vmem:[%s2005 + $0x18] sm:$0xe]
        %v3279 = vld [vmem:[%s2005 + $0x1c] sm:$0x1]
        %v3280 = vld [vmem:[%s2005 + $0x20] sm:$0xe]
        %v3281 = vld [vmem:[%s2005 + $0x24] sm:$0x1]
        %v3282 = vld [vmem:[%s2005 + $0x28] sm:$0xe]
        %v3283 = vld [vmem:[%s2005 + $0x2c] sm:$0x1]
        %v3284 = vld [vmem:[%s2005 + $0x30] sm:$0xe]
        %v3285 = vld [vmem:[%s2005 + $0x34] sm:$0x1]
        %v3286 = vld [vmem:[%s2005 + $0x38] sm:$0xe]
        %v3287 = vld [vmem:[%s2005 + $0x3c] sm:$0x1]
        %v3304 = vrot.slane %v3272, 5
        %v3305 = vrot.slane %v3304, 4
        %v3306 = vrot.slane %v3273, 5
        %v3307 = vsel %vm2585, %v3305, %v3306
        %v3308 = vrot.slane %v3274, 5
        %v3309 = vrot.slane %v3308, 4
        %v3310 = vrot.slane %v3275, 5
        %v3311 = vsel %vm2585, %v3309, %v3310
        %v3312 = vrot.slane %v3276, 5
        %v3313 = vrot.slane %v3312, 4
        %v3314 = vrot.slane %v3277, 5
        %v3315 = vsel %vm2585, %v3313, %v3314
        %v3316 = vrot.slane %v3278, 5
        %v3317 = vrot.slane %v3316, 4
        %v3318 = vrot.slane %v3279, 5
        %v3319 = vsel %vm2585, %v3317, %v3318
        %v3320 = vrot.slane %v3280, 5
        %v3321 = vrot.slane %v3320, 4
        %v3322 = vrot.slane %v3281, 5
        %v3323 = vsel %vm2585, %v3321, %v3322
        %v3324 = vrot.slane %v3282, 5
        %v3325 = vrot.slane %v3324, 4
        %v3326 = vrot.slane %v3283, 5
        %v3327 = vsel %vm2585, %v3325, %v3326
        %v3328 = vrot.slane %v3284, 5
        %v3329 = vrot.slane %v3328, 4
        %v3330 = vrot.slane %v3285, 5
        %v3331 = vsel %vm2585, %v3329, %v3330
        %v3332 = vrot.slane %v3286, 5
        %v3333 = vrot.slane %v3332, 4
        %v3334 = vrot.slane %v3287, 5
        %v3335 = vsel %vm2585, %v3333, %v3334
        %v3336 = vld [vmem:[#allocation3] sm:$0xff]
        %v3337 = vld [vmem:[#allocation3 + $0x8] sm:$0xff]
        %v3338 = vld [vmem:[#allocation3 + $0x10] sm:$0xff]
        %v3339 = vld [vmem:[#allocation3 + $0x18] sm:$0xff]
        %v3340 = vld [vmem:[#allocation3 + $0x20] sm:$0xff]
        %v3341 = vld [vmem:[#allocation3 + $0x28] sm:$0xff]
        %v3342 = vld [vmem:[#allocation3 + $0x30] sm:$0xff]
        %v3343 = vld [vmem:[#allocation3 + $0x38] sm:$0xff]
        %s3344 = scalar_lea.vmem %s3, 320
        %v3345 = vld [vmem:[%s3344] sm:$0xf]
        %v3346 = vld [vmem:[%s3344 + $0x4] sm:$0xf]
        %v3347 = vld [vmem:[%s3344 + $0x8] sm:$0xf]
        %v3348 = vld [vmem:[%s3344 + $0xc] sm:$0xf]
        %v3349 = vld [vmem:[%s3344 + $0x10] sm:$0xf]
        %v3350 = vld [vmem:[%s3344 + $0x14] sm:$0xf]
        %v3351 = vld [vmem:[%s3344 + $0x18] sm:$0xf]
        %v3352 = vld [vmem:[%s3344 + $0x1c] sm:$0xf]
        %v3353 = vld [vmem:[%s3344 + $0x20] sm:$0xf]
        %v3354 = vld [vmem:[%s3344 + $0x24] sm:$0xf]
        %v3355 = vld [vmem:[%s3344 + $0x28] sm:$0xf]
        %v3356 = vld [vmem:[%s3344 + $0x2c] sm:$0xf]
        %v3357 = vld [vmem:[%s3344 + $0x30] sm:$0xf]
        %v3358 = vld [vmem:[%s3344 + $0x34] sm:$0xf]
        %v3359 = vld [vmem:[%s3344 + $0x38] sm:$0xf]
        %v3360 = vld [vmem:[%s3344 + $0x3c] sm:$0xf]
        %v3361 = vunpack.c.l.b16 %v3307
        %v3362 = vunpack.c.l.b16 %v3311
        %v3363 = vunpack.c.l.b16 %v3315
        %v3364 = vunpack.c.l.b16 %v3319
        %v3365 = vunpack.c.l.b16 %v3323
        %v3366 = vunpack.c.l.b16 %v3327
        %v3367 = vunpack.c.l.b16 %v3331
        %v3368 = vunpack.c.l.b16 %v3335
        %v3369 = vpack.c.b16 %v3362, %v3361
        %v3370 = vpack.c.b16 %v3364, %v3363
        %v3371 = vpack.c.b16 %v3366, %v3365
        %v3372 = vpack.c.b16 %v3368, %v3367
        %v3393 = vunpack.c.l.b16 %v3345
        %v3394 = vunpack.c.l.b16 %v3346
        %v3395 = vunpack.c.l.b16 %v3347
        %v3396 = vunpack.c.l.b16 %v3348
        %v3397 = vunpack.c.l.b16 %v3349
        %v3398 = vunpack.c.l.b16 %v3350
        %v3399 = vunpack.c.l.b16 %v3351
        %v3400 = vunpack.c.l.b16 %v3352
        %v3401 = vunpack.c.l.b16 %v3353
        %v3402 = vunpack.c.l.b16 %v3354
        %v3403 = vunpack.c.l.b16 %v3355
        %v3404 = vunpack.c.l.b16 %v3356
        %v3405 = vunpack.c.l.b16 %v3357
        %v3406 = vunpack.c.l.b16 %v3358
        %v3407 = vunpack.c.l.b16 %v3359
        %v3408 = vunpack.c.l.b16 %v3360
        %v3409 = vpack.c.b16 %v3394, %v3393
        %v3410 = vpack.c.b16 %v3396, %v3395
        %v3411 = vpack.c.b16 %v3398, %v3397
        %v3412 = vpack.c.b16 %v3400, %v3399
        %v3413 = vpack.c.b16 %v3402, %v3401
        %v3414 = vpack.c.b16 %v3404, %v3403
        %v3415 = vpack.c.b16 %v3406, %v3405
        %v3416 = vpack.c.b16 %v3408, %v3407
        %3425 = vmatprep.subr.bf16.mxu0 0
        %3426 = vmatpush1.bf16.msra.mxu0 %v3409
        %3427 = vmatprep.subr.bf16.mxu0 0
        %3428 = vmatpush1.bf16.msra.mxu0 %v3410
        %3429 = vmatprep.subr.bf16.mxu0 0
        %3430 = vmatpush1.bf16.msra.mxu0 %v3411
        %3431 = vmatprep.subr.bf16.mxu0 0
        %3432 = vmatpush1.bf16.msra.mxu0 %v3412
        %3433 = vmatprep.subr.bf16.mxu0 0
        %3434 = vmatpush1.bf16.msra.mxu0 %v3413
        %3435 = vmatprep.subr.bf16.mxu0 0
        %3436 = vmatpush1.bf16.msra.mxu0 %v3414
        %3437 = vmatprep.subr.bf16.mxu0 0
        %3438 = vmatpush1.bf16.msra.mxu0 %v3415
        %3439 = vmatprep.subr.bf16.mxu0 0
        %3440 = vmatpush1.bf16.msra.mxu0 %v3416
        %3441 = vmatprep.subr.bf16.mxu0 0
        %3442 = vmatpush1.bf16.msra.mxu0 0
        %3443 = vmatprep.subr.bf16.mxu0 0
        %3444 = vmatpush1.bf16.msra.mxu0 0
        %3445 = vmatprep.subr.bf16.mxu0 0
        %3446 = vmatpush1.bf16.msra.mxu0 0
        %3447 = vmatprep.subr.bf16.mxu0 0
        %3448 = vmatpush1.bf16.msra.mxu0 0
        %3449 = vmatprep.subr.bf16.mxu0 0
        %3450 = vmatpush1.bf16.msra.mxu0 0
        %3451 = vmatprep.subr.bf16.mxu0 0
        %3452 = vmatpush1.bf16.msra.mxu0 0
        %3453 = vmatprep.subr.bf16.mxu0 0
        %3454 = vmatpush1.bf16.msra.mxu0 0
        %3455 = vmatprep.subr.bf16.mxu0 0
        %3456 = vmatpush1.bf16.msra.mxu0 0
        %3457 = vmatprep.mubr.bf16.mxu0 0
        %3458 = vmatmul.mubr.bf16.gmra.mrb[0].mxu0 %v3369
        %v3459 = vpop.f32.mrb[0].mxu0
        %v3460 = vadd.f32 0.0, %v3459
        %v3461 = vpop.f32.mrb[0].mxu0
        %v3462 = vpop.f32.mrb[0].mxu0
        %v3463 = vadd.f32 0.0, %v3462
        %v3464 = vpop.f32.mrb[0].mxu0
        %3465 = vmatprep.mubr.bf16.mxu0 0
        %3466 = vmatmul.mubr.bf16.gmra.mrb[0].mxu0 %v3370
        %v3467 = vpop.f32.mrb[0].mxu0
        %v3468 = vadd.f32 0.0, %v3467
        %v3469 = vpop.f32.mrb[0].mxu0
        %v3470 = vpop.f32.mrb[0].mxu0
        %v3471 = vadd.f32 0.0, %v3470
        %v3472 = vpop.f32.mrb[0].mxu0
        %3473 = vmatprep.mubr.bf16.mxu0 0
        %3474 = vmatmul.mubr.bf16.gmra.mrb[0].mxu0 %v3371
        %v3475 = vpop.f32.mrb[0].mxu0
        %v3476 = vadd.f32 0.0, %v3475
        %v3477 = vpop.f32.mrb[0].mxu0
        %v3478 = vpop.f32.mrb[0].mxu0
        %v3479 = vadd.f32 0.0, %v3478
        %v3480 = vpop.f32.mrb[0].mxu0
        %3481 = vmatprep.mubr.bf16.mxu0 0
        %3482 = vmatmul.mubr.bf16.gmra.mrb[0].mxu0 %v3372
        %v3483 = vpop.f32.mrb[0].mxu0
        %v3484 = vadd.f32 0.0, %v3483
        %v3485 = vpop.f32.mrb[0].mxu0
        %v3486 = vpop.f32.mrb[0].mxu0
        %v3487 = vadd.f32 0.0, %v3486
        %v3488 = vpop.f32.mrb[0].mxu0
        %3489 = vdwg.mxu0
        %v3490 = vadd.f32 %v3336, %v3460
        %v3491 = vadd.f32 %v3337, %v3463
        %v3492 = vadd.f32 %v3338, %v3468
        %v3493 = vadd.f32 %v3339, %v3471
        %v3494 = vadd.f32 %v3340, %v3476
        %v3495 = vadd.f32 %v3341, %v3479
        %v3496 = vadd.f32 %v3342, %v3484
        %v3497 = vadd.f32 %v3343, %v3487
        %3498 = vst [vmem:[#allocation3] sm:$0xff] %v3490
        %3499 = vst [vmem:[#allocation3 + $0x8] sm:$0xff] %v3491
        %3500 = vst [vmem:[#allocation3 + $0x10] sm:$0xff] %v3492
        %3501 = vst [vmem:[#allocation3 + $0x18] sm:$0xff] %v3493
        %3502 = vst [vmem:[#allocation3 + $0x20] sm:$0xff] %v3494
        %3503 = vst [vmem:[#allocation3 + $0x28] sm:$0xff] %v3495
        %3504 = vst [vmem:[#allocation3 + $0x30] sm:$0xff] %v3496
        %3505 = vst [vmem:[#allocation3 + $0x38] sm:$0xff] %v3497
        %s3506 = scalar_lea.vmem [#allocation2], 16
        %v3507 = vld [vmem:[%s3506] sm:$0xf]
        %v3508 = vld [vmem:[%s3506 + $0x8] sm:$0xf]
        %v3509 = vld [vmem:[%s3506 + $0x10] sm:$0xf]
        %v3510 = vld [vmem:[%s3506 + $0x18] sm:$0xf]
        %v3511 = vld [vmem:[%s3506 + $0x20] sm:$0xf]
        %v3512 = vld [vmem:[%s3506 + $0x28] sm:$0xf]
        %v3513 = vld [vmem:[%s3506 + $0x30] sm:$0xf]
        %v3514 = vld [vmem:[%s3506 + $0x38] sm:$0xf]
        %v3515 = vld [vmem:[#allocation3] sm:$0xff]
        %v3516 = vld [vmem:[#allocation3 + $0x8] sm:$0xff]
        %v3517 = vld [vmem:[#allocation3 + $0x10] sm:$0xff]
        %v3518 = vld [vmem:[#allocation3 + $0x18] sm:$0xff]
        %v3519 = vld [vmem:[#allocation3 + $0x20] sm:$0xff]
        %v3520 = vld [vmem:[#allocation3 + $0x28] sm:$0xff]
        %v3521 = vld [vmem:[#allocation3 + $0x30] sm:$0xff]
        %v3522 = vld [vmem:[#allocation3 + $0x38] sm:$0xff]
        %s3523 = scalar_lea.vmem %s3, 384
        %v3524 = vld [vmem:[%s3523] sm:$0xf]
        %v3525 = vld [vmem:[%s3523 + $0x4] sm:$0xf]
        %v3526 = vld [vmem:[%s3523 + $0x8] sm:$0xf]
        %v3527 = vld [vmem:[%s3523 + $0xc] sm:$0xf]
        %v3528 = vld [vmem:[%s3523 + $0x10] sm:$0xf]
        %v3529 = vld [vmem:[%s3523 + $0x14] sm:$0xf]
        %v3530 = vld [vmem:[%s3523 + $0x18] sm:$0xf]
        %v3531 = vld [vmem:[%s3523 + $0x1c] sm:$0xf]
        %v3532 = vld [vmem:[%s3523 + $0x20] sm:$0xf]
        %v3533 = vld [vmem:[%s3523 + $0x24] sm:$0xf]
        %v3534 = vld [vmem:[%s3523 + $0x28] sm:$0xf]
        %v3535 = vld [vmem:[%s3523 + $0x2c] sm:$0xf]
        %v3536 = vld [vmem:[%s3523 + $0x30] sm:$0xf]
        %v3537 = vld [vmem:[%s3523 + $0x34] sm:$0xf]
        %v3538 = vld [vmem:[%s3523 + $0x38] sm:$0xf]
        %v3539 = vld [vmem:[%s3523 + $0x3c] sm:$0xf]
        %v3548 = vunpack.c.l.b16 %v3507
        %v3549 = vunpack.c.l.b16 %v3508
        %v3550 = vunpack.c.l.b16 %v3509
        %v3551 = vunpack.c.l.b16 %v3510
        %v3552 = vunpack.c.l.b16 %v3511
        %v3553 = vunpack.c.l.b16 %v3512
        %v3554 = vunpack.c.l.b16 %v3513
        %v3555 = vunpack.c.l.b16 %v3514
        %v3556 = vpack.c.b16 %v3549, %v3548
        %v3557 = vpack.c.b16 %v3551, %v3550
        %v3558 = vpack.c.b16 %v3553, %v3552
        %v3559 = vpack.c.b16 %v3555, %v3554
        %v3580 = vunpack.c.l.b16 %v3524
        %v3581 = vunpack.c.l.b16 %v3525
        %v3582 = vunpack.c.l.b16 %v3526
        %v3583 = vunpack.c.l.b16 %v3527
        %v3584 = vunpack.c.l.b16 %v3528
        %v3585 = vunpack.c.l.b16 %v3529
        %v3586 = vunpack.c.l.b16 %v3530
        %v3587 = vunpack.c.l.b16 %v3531
        %v3588 = vunpack.c.l.b16 %v3532
        %v3589 = vunpack.c.l.b16 %v3533
        %v3590 = vunpack.c.l.b16 %v3534
        %v3591 = vunpack.c.l.b16 %v3535
        %v3592 = vunpack.c.l.b16 %v3536
        %v3593 = vunpack.c.l.b16 %v3537
        %v3594 = vunpack.c.l.b16 %v3538
        %v3595 = vunpack.c.l.b16 %v3539
        %v3596 = vpack.c.b16 %v3581, %v3580
        %v3597 = vpack.c.b16 %v3583, %v3582
        %v3598 = vpack.c.b16 %v3585, %v3584
        %v3599 = vpack.c.b16 %v3587, %v3586
        %v3600 = vpack.c.b16 %v3589, %v3588
        %v3601 = vpack.c.b16 %v3591, %v3590
        %v3602 = vpack.c.b16 %v3593, %v3592
        %v3603 = vpack.c.b16 %v3595, %v3594
        %3612 = vmatprep.subr.bf16.mxu0 0
        %3613 = vmatpush1.bf16.msra.mxu0 %v3596
        %3614 = vmatprep.subr.bf16.mxu0 0
        %3615 = vmatpush1.bf16.msra.mxu0 %v3597
        %3616 = vmatprep.subr.bf16.mxu0 0
        %3617 = vmatpush1.bf16.msra.mxu0 %v3598
        %3618 = vmatprep.subr.bf16.mxu0 0
        %3619 = vmatpush1.bf16.msra.mxu0 %v3599
        %3620 = vmatprep.subr.bf16.mxu0 0
        %3621 = vmatpush1.bf16.msra.mxu0 %v3600
        %3622 = vmatprep.subr.bf16.mxu0 0
        %3623 = vmatpush1.bf16.msra.mxu0 %v3601
        %3624 = vmatprep.subr.bf16.mxu0 0
        %3625 = vmatpush1.bf16.msra.mxu0 %v3602
        %3626 = vmatprep.subr.bf16.mxu0 0
        %3627 = vmatpush1.bf16.msra.mxu0 %v3603
        %3628 = vmatprep.subr.bf16.mxu0 0
        %3629 = vmatpush1.bf16.msra.mxu0 0
        %3630 = vmatprep.subr.bf16.mxu0 0
        %3631 = vmatpush1.bf16.msra.mxu0 0
        %3632 = vmatprep.subr.bf16.mxu0 0
        %3633 = vmatpush1.bf16.msra.mxu0 0
        %3634 = vmatprep.subr.bf16.mxu0 0
        %3635 = vmatpush1.bf16.msra.mxu0 0
        %3636 = vmatprep.subr.bf16.mxu0 0
        %3637 = vmatpush1.bf16.msra.mxu0 0
        %3638 = vmatprep.subr.bf16.mxu0 0
        %3639 = vmatpush1.bf16.msra.mxu0 0
        %3640 = vmatprep.subr.bf16.mxu0 0
        %3641 = vmatpush1.bf16.msra.mxu0 0
        %3642 = vmatprep.subr.bf16.mxu0 0
        %3643 = vmatpush1.bf16.msra.mxu0 0
        %3644 = vmatprep.mubr.bf16.mxu0 0
        %3645 = vmatmul.mubr.bf16.gmra.mrb[0].mxu0 %v3556
        %v3646 = vpop.f32.mrb[0].mxu0
        %v3647 = vadd.f32 0.0, %v3646
        %v3648 = vpop.f32.mrb[0].mxu0
        %v3649 = vpop.f32.mrb[0].mxu0
        %v3650 = vadd.f32 0.0, %v3649
        %v3651 = vpop.f32.mrb[0].mxu0
        %3652 = vmatprep.mubr.bf16.mxu0 0
        %3653 = vmatmul.mubr.bf16.gmra.mrb[0].mxu0 %v3557
        %v3654 = vpop.f32.mrb[0].mxu0
        %v3655 = vadd.f32 0.0, %v3654
        %v3656 = vpop.f32.mrb[0].mxu0
        %v3657 = vpop.f32.mrb[0].mxu0
        %v3658 = vadd.f32 0.0, %v3657
        %v3659 = vpop.f32.mrb[0].mxu0
        %3660 = vmatprep.mubr.bf16.mxu0 0
        %3661 = vmatmul.mubr.bf16.gmra.mrb[0].mxu0 %v3558
        %v3662 = vpop.f32.mrb[0].mxu0
        %v3663 = vadd.f32 0.0, %v3662
        %v3664 = vpop.f32.mrb[0].mxu0
        %v3665 = vpop.f32.mrb[0].mxu0
        %v3666 = vadd.f32 0.0, %v3665
        %v3667 = vpop.f32.mrb[0].mxu0
        %3668 = vmatprep.mubr.bf16.mxu0 0
        %3669 = vmatmul.mubr.bf16.gmra.mrb[0].mxu0 %v3559
        %v3670 = vpop.f32.mrb[0].mxu0
        %v3671 = vadd.f32 0.0, %v3670
        %v3672 = vpop.f32.mrb[0].mxu0
        %v3673 = vpop.f32.mrb[0].mxu0
        %v3674 = vadd.f32 0.0, %v3673
        %v3675 = vpop.f32.mrb[0].mxu0
        %3676 = vdwg.mxu0
        %v3677 = vadd.f32 %v3515, %v3647
        %v3678 = vadd.f32 %v3516, %v3650
        %v3679 = vadd.f32 %v3517, %v3655
        %v3680 = vadd.f32 %v3518, %v3658
        %v3681 = vadd.f32 %v3519, %v3663
        %v3682 = vadd.f32 %v3520, %v3666
        %v3683 = vadd.f32 %v3521, %v3671
        %v3684 = vadd.f32 %v3522, %v3674
        %3685 = vst [vmem:[#allocation3] sm:$0xff] %v3677
        %3686 = vst [vmem:[#allocation3 + $0x8] sm:$0xff] %v3678
        %3687 = vst [vmem:[#allocation3 + $0x10] sm:$0xff] %v3679
        %3688 = vst [vmem:[#allocation3 + $0x18] sm:$0xff] %v3680
        %3689 = vst [vmem:[#allocation3 + $0x20] sm:$0xff] %v3681
        %3690 = vst [vmem:[#allocation3 + $0x28] sm:$0xff] %v3682
        %3691 = vst [vmem:[#allocation3 + $0x30] sm:$0xff] %v3683
        %3692 = vst [vmem:[#allocation3 + $0x38] sm:$0xff] %v3684
        %v3693 = vld [vmem:[%s3506] sm:$0xf]
        %v3694 = vld [vmem:[%s3506 + $0x4] sm:$0x1]
        %v3695 = vld [vmem:[%s3506 + $0x8] sm:$0xf]
        %v3696 = vld [vmem:[%s3506 + $0xc] sm:$0x1]
        %v3697 = vld [vmem:[%s3506 + $0x10] sm:$0xf]
        %v3698 = vld [vmem:[%s3506 + $0x14] sm:$0x1]
        %v3699 = vld [vmem:[%s3506 + $0x18] sm:$0xf]
        %v3700 = vld [vmem:[%s3506 + $0x1c] sm:$0x1]
        %v3701 = vld [vmem:[%s3506 + $0x20] sm:$0xf]
        %v3702 = vld [vmem:[%s3506 + $0x24] sm:$0x1]
        %v3703 = vld [vmem:[%s3506 + $0x28] sm:$0xf]
        %v3704 = vld [vmem:[%s3506 + $0x2c] sm:$0x1]
        %v3705 = vld [vmem:[%s3506 + $0x30] sm:$0xf]
        %v3706 = vld [vmem:[%s3506 + $0x34] sm:$0x1]
        %v3707 = vld [vmem:[%s3506 + $0x38] sm:$0xf]
        %v3708 = vld [vmem:[%s3506 + $0x3c] sm:$0x1]
        %v3710 = vshrl.u32 %v3693, 16
        %v3712 = vrot.slane %v3710, 4
        %v3713 = vshll.u32 %v3693, 16
        %v3715 = vrot.slane %v3713, 5
        %v3716 = vor.u32 %v3712, %v3715
        %v3717 = vrot.slane %v3716, 4
        %v3719 = vshll.u32 %v3694, 16
        %v3721 = vrot.slane %v3719, 5
        %v3722 = vsel %vm579, %v3717, %v3721
        %v3724 = vshrl.u32 %v3695, 16
        %v3726 = vrot.slane %v3724, 4
        %v3727 = vshll.u32 %v3695, 16
        %v3729 = vrot.slane %v3727, 5
        %v3730 = vor.u32 %v3726, %v3729
        %v3731 = vrot.slane %v3730, 4
        %v3733 = vshll.u32 %v3696, 16
        %v3735 = vrot.slane %v3733, 5
        %v3736 = vsel %vm579, %v3731, %v3735
        %v3738 = vshrl.u32 %v3697, 16
        %v3740 = vrot.slane %v3738, 4
        %v3741 = vshll.u32 %v3697, 16
        %v3743 = vrot.slane %v3741, 5
        %v3744 = vor.u32 %v3740, %v3743
        %v3745 = vrot.slane %v3744, 4
        %v3747 = vshll.u32 %v3698, 16
        %v3749 = vrot.slane %v3747, 5
        %v3750 = vsel %vm579, %v3745, %v3749
        %v3752 = vshrl.u32 %v3699, 16
        %v3754 = vrot.slane %v3752, 4
        %v3755 = vshll.u32 %v3699, 16
        %v3757 = vrot.slane %v3755, 5
        %v3758 = vor.u32 %v3754, %v3757
        %v3759 = vrot.slane %v3758, 4
        %v3761 = vshll.u32 %v3700, 16
        %v3763 = vrot.slane %v3761, 5
        %v3764 = vsel %vm579, %v3759, %v3763
        %v3766 = vshrl.u32 %v3701, 16
        %v3768 = vrot.slane %v3766, 4
        %v3769 = vshll.u32 %v3701, 16
        %v3771 = vrot.slane %v3769, 5
        %v3772 = vor.u32 %v3768, %v3771
        %v3773 = vrot.slane %v3772, 4
        %v3775 = vshll.u32 %v3702, 16
        %v3777 = vrot.slane %v3775, 5
        %v3778 = vsel %vm579, %v3773, %v3777
        %v3780 = vshrl.u32 %v3703, 16
        %v3782 = vrot.slane %v3780, 4
        %v3783 = vshll.u32 %v3703, 16
        %v3785 = vrot.slane %v3783, 5
        %v3786 = vor.u32 %v3782, %v3785
        %v3787 = vrot.slane %v3786, 4
        %v3789 = vshll.u32 %v3704, 16
        %v3791 = vrot.slane %v3789, 5
        %v3792 = vsel %vm579, %v3787, %v3791
        %v3794 = vshrl.u32 %v3705, 16
        %v3796 = vrot.slane %v3794, 4
        %v3797 = vshll.u32 %v3705, 16
        %v3799 = vrot.slane %v3797, 5
        %v3800 = vor.u32 %v3796, %v3799
        %v3801 = vrot.slane %v3800, 4
        %v3803 = vshll.u32 %v3706, 16
        %v3805 = vrot.slane %v3803, 5
        %v3806 = vsel %vm579, %v3801, %v3805
        %v3808 = vshrl.u32 %v3707, 16
        %v3810 = vrot.slane %v3808, 4
        %v3811 = vshll.u32 %v3707, 16
        %v3813 = vrot.slane %v3811, 5
        %v3814 = vor.u32 %v3810, %v3813
        %v3815 = vrot.slane %v3814, 4
        %v3817 = vshll.u32 %v3708, 16
        %v3819 = vrot.slane %v3817, 5
        %v3820 = vsel %vm579, %v3815, %v3819
        %v3821 = vld [vmem:[#allocation3] sm:$0xff]
        %v3822 = vld [vmem:[#allocation3 + $0x8] sm:$0xff]
        %v3823 = vld [vmem:[#allocation3 + $0x10] sm:$0xff]
        %v3824 = vld [vmem:[#allocation3 + $0x18] sm:$0xff]
        %v3825 = vld [vmem:[#allocation3 + $0x20] sm:$0xff]
        %v3826 = vld [vmem:[#allocation3 + $0x28] sm:$0xff]
        %v3827 = vld [vmem:[#allocation3 + $0x30] sm:$0xff]
        %v3828 = vld [vmem:[#allocation3 + $0x38] sm:$0xff]
        %s3829 = scalar_lea.vmem %s3, 448
        %v3830 = vld [vmem:[%s3829] sm:$0xf]
        %v3831 = vld [vmem:[%s3829 + $0x4] sm:$0xf]
        %v3832 = vld [vmem:[%s3829 + $0x8] sm:$0xf]
        %v3833 = vld [vmem:[%s3829 + $0xc] sm:$0xf]
        %v3834 = vld [vmem:[%s3829 + $0x10] sm:$0xf]
        %v3835 = vld [vmem:[%s3829 + $0x14] sm:$0xf]
        %v3836 = vld [vmem:[%s3829 + $0x18] sm:$0xf]
        %v3837 = vld [vmem:[%s3829 + $0x1c] sm:$0xf]
        %v3838 = vld [vmem:[%s3829 + $0x20] sm:$0xf]
        %v3839 = vld [vmem:[%s3829 + $0x24] sm:$0xf]
        %v3840 = vld [vmem:[%s3829 + $0x28] sm:$0xf]
        %v3841 = vld [vmem:[%s3829 + $0x2c] sm:$0xf]
        %v3842 = vld [vmem:[%s3829 + $0x30] sm:$0xf]
        %v3843 = vld [vmem:[%s3829 + $0x34] sm:$0xf]
        %v3844 = vld [vmem:[%s3829 + $0x38] sm:$0xf]
        %v3845 = vld [vmem:[%s3829 + $0x3c] sm:$0xf]
        %v3846 = vunpack.c.l.b16 %v3722
        %v3847 = vunpack.c.l.b16 %v3736
        %v3848 = vunpack.c.l.b16 %v3750
        %v3849 = vunpack.c.l.b16 %v3764
        %v3850 = vunpack.c.l.b16 %v3778
        %v3851 = vunpack.c.l.b16 %v3792
        %v3852 = vunpack.c.l.b16 %v3806
        %v3853 = vunpack.c.l.b16 %v3820
        %v3854 = vpack.c.b16 %v3847, %v3846
        %v3855 = vpack.c.b16 %v3849, %v3848
        %v3856 = vpack.c.b16 %v3851, %v3850
        %v3857 = vpack.c.b16 %v3853, %v3852
        %v3878 = vunpack.c.l.b16 %v3830
        %v3879 = vunpack.c.l.b16 %v3831
        %v3880 = vunpack.c.l.b16 %v3832
        %v3881 = vunpack.c.l.b16 %v3833
        %v3882 = vunpack.c.l.b16 %v3834
        %v3883 = vunpack.c.l.b16 %v3835
        %v3884 = vunpack.c.l.b16 %v3836
        %v3885 = vunpack.c.l.b16 %v3837
        %v3886 = vunpack.c.l.b16 %v3838
        %v3887 = vunpack.c.l.b16 %v3839
        %v3888 = vunpack.c.l.b16 %v3840
        %v3889 = vunpack.c.l.b16 %v3841
        %v3890 = vunpack.c.l.b16 %v3842
        %v3891 = vunpack.c.l.b16 %v3843
        %v3892 = vunpack.c.l.b16 %v3844
        %v3893 = vunpack.c.l.b16 %v3845
        %v3894 = vpack.c.b16 %v3879, %v3878
        %v3895 = vpack.c.b16 %v3881, %v3880
        %v3896 = vpack.c.b16 %v3883, %v3882
        %v3897 = vpack.c.b16 %v3885, %v3884
        %v3898 = vpack.c.b16 %v3887, %v3886
        %v3899 = vpack.c.b16 %v3889, %v3888
        %v3900 = vpack.c.b16 %v3891, %v3890
        %v3901 = vpack.c.b16 %v3893, %v3892
        %3910 = vmatprep.subr.bf16.mxu0 0
        %3911 = vmatpush1.bf16.msra.mxu0 %v3894
        %3912 = vmatprep.subr.bf16.mxu0 0
        %3913 = vmatpush1.bf16.msra.mxu0 %v3895
        %3914 = vmatprep.subr.bf16.mxu0 0
        %3915 = vmatpush1.bf16.msra.mxu0 %v3896
        %3916 = vmatprep.subr.bf16.mxu0 0
        %3917 = vmatpush1.bf16.msra.mxu0 %v3897
        %3918 = vmatprep.subr.bf16.mxu0 0
        %3919 = vmatpush1.bf16.msra.mxu0 %v3898
        %3920 = vmatprep.subr.bf16.mxu0 0
        %3921 = vmatpush1.bf16.msra.mxu0 %v3899
        %3922 = vmatprep.subr.bf16.mxu0 0
        %3923 = vmatpush1.bf16.msra.mxu0 %v3900
        %3924 = vmatprep.subr.bf16.mxu0 0
        %3925 = vmatpush1.bf16.msra.mxu0 %v3901
        %3926 = vmatprep.subr.bf16.mxu0 0
        %3927 = vmatpush1.bf16.msra.mxu0 0
        %3928 = vmatprep.subr.bf16.mxu0 0
        %3929 = vmatpush1.bf16.msra.mxu0 0
        %3930 = vmatprep.subr.bf16.mxu0 0
        %3931 = vmatpush1.bf16.msra.mxu0 0
        %3932 = vmatprep.subr.bf16.mxu0 0
        %3933 = vmatpush1.bf16.msra.mxu0 0
        %3934 = vmatprep.subr.bf16.mxu0 0
        %3935 = vmatpush1.bf16.msra.mxu0 0
        %3936 = vmatprep.subr.bf16.mxu0 0
        %3937 = vmatpush1.bf16.msra.mxu0 0
        %3938 = vmatprep.subr.bf16.mxu0 0
        %3939 = vmatpush1.bf16.msra.mxu0 0
        %3940 = vmatprep.subr.bf16.mxu0 0
        %3941 = vmatpush1.bf16.msra.mxu0 0
        %3942 = vmatprep.mubr.bf16.mxu0 0
        %3943 = vmatmul.mubr.bf16.gmra.mrb[0].mxu0 %v3854
        %v3944 = vpop.f32.mrb[0].mxu0
        %v3945 = vadd.f32 0.0, %v3944
        %v3946 = vpop.f32.mrb[0].mxu0
        %v3947 = vpop.f32.mrb[0].mxu0
        %v3948 = vadd.f32 0.0, %v3947
        %v3949 = vpop.f32.mrb[0].mxu0
        %3950 = vmatprep.mubr.bf16.mxu0 0
        %3951 = vmatmul.mubr.bf16.gmra.mrb[0].mxu0 %v3855
        %v3952 = vpop.f32.mrb[0].mxu0
        %v3953 = vadd.f32 0.0, %v3952
        %v3954 = vpop.f32.mrb[0].mxu0
        %v3955 = vpop.f32.mrb[0].mxu0
        %v3956 = vadd.f32 0.0, %v3955
        %v3957 = vpop.f32.mrb[0].mxu0
        %3958 = vmatprep.mubr.bf16.mxu0 0
        %3959 = vmatmul.mubr.bf16.gmra.mrb[0].mxu0 %v3856
        %v3960 = vpop.f32.mrb[0].mxu0
        %v3961 = vadd.f32 0.0, %v3960
        %v3962 = vpop.f32.mrb[0].mxu0
        %v3963 = vpop.f32.mrb[0].mxu0
        %v3964 = vadd.f32 0.0, %v3963
        %v3965 = vpop.f32.mrb[0].mxu0
        %3966 = vmatprep.mubr.bf16.mxu0 0
        %3967 = vmatmul.mubr.bf16.gmra.mrb[0].mxu0 %v3857
        %v3968 = vpop.f32.mrb[0].mxu0
        %v3969 = vadd.f32 0.0, %v3968
        %v3970 = vpop.f32.mrb[0].mxu0
        %v3971 = vpop.f32.mrb[0].mxu0
        %v3972 = vadd.f32 0.0, %v3971
        %v3973 = vpop.f32.mrb[0].mxu0
        %3974 = vdwg.mxu0
        %v3975 = vadd.f32 %v3821, %v3945
        %v3976 = vadd.f32 %v3822, %v3948
        %v3977 = vadd.f32 %v3823, %v3953
        %v3978 = vadd.f32 %v3824, %v3956
        %v3979 = vadd.f32 %v3825, %v3961
        %v3980 = vadd.f32 %v3826, %v3964
        %v3981 = vadd.f32 %v3827, %v3969
        %v3982 = vadd.f32 %v3828, %v3972
        %3983 = vst [vmem:[#allocation3] sm:$0xff] %v3975
        %3984 = vst [vmem:[#allocation3 + $0x8] sm:$0xff] %v3976
        %3985 = vst [vmem:[#allocation3 + $0x10] sm:$0xff] %v3977
        %3986 = vst [vmem:[#allocation3 + $0x18] sm:$0xff] %v3978
        %3987 = vst [vmem:[#allocation3 + $0x20] sm:$0xff] %v3979
        %3988 = vst [vmem:[#allocation3 + $0x28] sm:$0xff] %v3980
        %3989 = vst [vmem:[#allocation3 + $0x30] sm:$0xff] %v3981
        %3990 = vst [vmem:[#allocation3 + $0x38] sm:$0xff] %v3982
        %v3991 = vld [vmem:[%s3506] sm:$0xe]
        %v3992 = vld [vmem:[%s3506 + $0x4] sm:$0x1]
        %v3993 = vld [vmem:[%s3506 + $0x8] sm:$0xe]
        %v3994 = vld [vmem:[%s3506 + $0xc] sm:$0x1]
        %v3995 = vld [vmem:[%s3506 + $0x10] sm:$0xe]
        %v3996 = vld [vmem:[%s3506 + $0x14] sm:$0x1]
        %v3997 = vld [vmem:[%s3506 + $0x18] sm:$0xe]
        %v3998 = vld [vmem:[%s3506 + $0x1c] sm:$0x1]
        %v3999 = vld [vmem:[%s3506 + $0x20] sm:$0xe]
        %v4000 = vld [vmem:[%s3506 + $0x24] sm:$0x1]
        %v4001 = vld [vmem:[%s3506 + $0x28] sm:$0xe]
        %v4002 = vld [vmem:[%s3506 + $0x2c] sm:$0x1]
        %v4003 = vld [vmem:[%s3506 + $0x30] sm:$0xe]
        %v4004 = vld [vmem:[%s3506 + $0x34] sm:$0x1]
        %v4005 = vld [vmem:[%s3506 + $0x38] sm:$0xe]
        %v4006 = vld [vmem:[%s3506 + $0x3c] sm:$0x1]
        %v4023 = vrot.slane %v3991, 5
        %v4024 = vrot.slane %v4023, 4
        %v4025 = vrot.slane %v3992, 5
        %v4026 = vsel %vm2585, %v4024, %v4025
        %v4027 = vrot.slane %v3993, 5
        %v4028 = vrot.slane %v4027, 4
        %v4029 = vrot.slane %v3994, 5
        %v4030 = vsel %vm2585, %v4028, %v4029
        %v4031 = vrot.slane %v3995, 5
        %v4032 = vrot.slane %v4031, 4
        %v4033 = vrot.slane %v3996, 5
        %v4034 = vsel %vm2585, %v4032, %v4033
        %v4035 = vrot.slane %v3997, 5
        %v4036 = vrot.slane %v4035, 4
        %v4037 = vrot.slane %v3998, 5
        %v4038 = vsel %vm2585, %v4036, %v4037
        %v4039 = vrot.slane %v3999, 5
        %v4040 = vrot.slane %v4039, 4
        %v4041 = vrot.slane %v4000, 5
        %v4042 = vsel %vm2585, %v4040, %v4041
        %v4043 = vrot.slane %v4001, 5
        %v4044 = vrot.slane %v4043, 4
        %v4045 = vrot.slane %v4002, 5
        %v4046 = vsel %vm2585, %v4044, %v4045
        %v4047 = vrot.slane %v4003, 5
        %v4048 = vrot.slane %v4047, 4
        %v4049 = vrot.slane %v4004, 5
        %v4050 = vsel %vm2585, %v4048, %v4049
        %v4051 = vrot.slane %v4005, 5
        %v4052 = vrot.slane %v4051, 4
        %v4053 = vrot.slane %v4006, 5
        %v4054 = vsel %vm2585, %v4052, %v4053
        %v4055 = vld [vmem:[#allocation3] sm:$0xff]
        %v4056 = vld [vmem:[#allocation3 + $0x8] sm:$0xff]
        %v4057 = vld [vmem:[#allocation3 + $0x10] sm:$0xff]
        %v4058 = vld [vmem:[#allocation3 + $0x18] sm:$0xff]
        %v4059 = vld [vmem:[#allocation3 + $0x20] sm:$0xff]
        %v4060 = vld [vmem:[#allocation3 + $0x28] sm:$0xff]
        %v4061 = vld [vmem:[#allocation3 + $0x30] sm:$0xff]
        %v4062 = vld [vmem:[#allocation3 + $0x38] sm:$0xff]
        %s4063 = scalar_lea.vmem %s3, 512
        %v4064 = vld [vmem:[%s4063] sm:$0xf]
        %v4065 = vld [vmem:[%s4063 + $0x4] sm:$0xf]
        %v4066 = vld [vmem:[%s4063 + $0x8] sm:$0xf]
        %v4067 = vld [vmem:[%s4063 + $0xc] sm:$0xf]
        %v4068 = vld [vmem:[%s4063 + $0x10] sm:$0xf]
        %v4069 = vld [vmem:[%s4063 + $0x14] sm:$0xf]
        %v4070 = vld [vmem:[%s4063 + $0x18] sm:$0xf]
        %v4071 = vld [vmem:[%s4063 + $0x1c] sm:$0xf]
        %v4072 = vld [vmem:[%s4063 + $0x20] sm:$0xf]
        %v4073 = vld [vmem:[%s4063 + $0x24] sm:$0xf]
        %v4074 = vld [vmem:[%s4063 + $0x28] sm:$0xf]
        %v4075 = vld [vmem:[%s4063 + $0x2c] sm:$0xf]
        %v4076 = vld [vmem:[%s4063 + $0x30] sm:$0xf]
        %v4077 = vld [vmem:[%s4063 + $0x34] sm:$0xf]
        %v4078 = vld [vmem:[%s4063 + $0x38] sm:$0xf]
        %v4079 = vld [vmem:[%s4063 + $0x3c] sm:$0xf]
        %v4080 = vunpack.c.l.b16 %v4026
        %v4081 = vunpack.c.l.b16 %v4030
        %v4082 = vunpack.c.l.b16 %v4034
        %v4083 = vunpack.c.l.b16 %v4038
        %v4084 = vunpack.c.l.b16 %v4042
        %v4085 = vunpack.c.l.b16 %v4046
        %v4086 = vunpack.c.l.b16 %v4050
        %v4087 = vunpack.c.l.b16 %v4054
        %v4088 = vpack.c.b16 %v4081, %v4080
        %v4089 = vpack.c.b16 %v4083, %v4082
        %v4090 = vpack.c.b16 %v4085, %v4084
        %v4091 = vpack.c.b16 %v4087, %v4086
        %v4112 = vunpack.c.l.b16 %v4064
        %v4113 = vunpack.c.l.b16 %v4065
        %v4114 = vunpack.c.l.b16 %v4066
        %v4115 = vunpack.c.l.b16 %v4067
        %v4116 = vunpack.c.l.b16 %v4068
        %v4117 = vunpack.c.l.b16 %v4069
        %v4118 = vunpack.c.l.b16 %v4070
        %v4119 = vunpack.c.l.b16 %v4071
        %v4120 = vunpack.c.l.b16 %v4072
        %v4121 = vunpack.c.l.b16 %v4073
        %v4122 = vunpack.c.l.b16 %v4074
        %v4123 = vunpack.c.l.b16 %v4075
        %v4124 = vunpack.c.l.b16 %v4076
        %v4125 = vunpack.c.l.b16 %v4077
        %v4126 = vunpack.c.l.b16 %v4078
        %v4127 = vunpack.c.l.b16 %v4079
        %v4128 = vpack.c.b16 %v4113, %v4112
        %v4129 = vpack.c.b16 %v4115, %v4114
        %v4130 = vpack.c.b16 %v4117, %v4116
        %v4131 = vpack.c.b16 %v4119, %v4118
        %v4132 = vpack.c.b16 %v4121, %v4120
        %v4133 = vpack.c.b16 %v4123, %v4122
        %v4134 = vpack.c.b16 %v4125, %v4124
        %v4135 = vpack.c.b16 %v4127, %v4126
        %4144 = vmatprep.subr.bf16.mxu0 0
        %4145 = vmatpush1.bf16.msra.mxu0 %v4128
        %4146 = vmatprep.subr.bf16.mxu0 0
        %4147 = vmatpush1.bf16.msra.mxu0 %v4129
        %4148 = vmatprep.subr.bf16.mxu0 0
        %4149 = vmatpush1.bf16.msra.mxu0 %v4130
        %4150 = vmatprep.subr.bf16.mxu0 0
        %4151 = vmatpush1.bf16.msra.mxu0 %v4131
        %4152 = vmatprep.subr.bf16.mxu0 0
        %4153 = vmatpush1.bf16.msra.mxu0 %v4132
        %4154 = vmatprep.subr.bf16.mxu0 0
        %4155 = vmatpush1.bf16.msra.mxu0 %v4133
        %4156 = vmatprep.subr.bf16.mxu0 0
        %4157 = vmatpush1.bf16.msra.mxu0 %v4134
        %4158 = vmatprep.subr.bf16.mxu0 0
        %4159 = vmatpush1.bf16.msra.mxu0 %v4135
        %4160 = vmatprep.subr.bf16.mxu0 0
        %4161 = vmatpush1.bf16.msra.mxu0 0
        %4162 = vmatprep.subr.bf16.mxu0 0
        %4163 = vmatpush1.bf16.msra.mxu0 0
        %4164 = vmatprep.subr.bf16.mxu0 0
        %4165 = vmatpush1.bf16.msra.mxu0 0
        %4166 = vmatprep.subr.bf16.mxu0 0
        %4167 = vmatpush1.bf16.msra.mxu0 0
        %4168 = vmatprep.subr.bf16.mxu0 0
        %4169 = vmatpush1.bf16.msra.mxu0 0
        %4170 = vmatprep.subr.bf16.mxu0 0
        %4171 = vmatpush1.bf16.msra.mxu0 0
        %4172 = vmatprep.subr.bf16.mxu0 0
        %4173 = vmatpush1.bf16.msra.mxu0 0
        %4174 = vmatprep.subr.bf16.mxu0 0
        %4175 = vmatpush1.bf16.msra.mxu0 0
        %4176 = vmatprep.mubr.bf16.mxu0 0
        %4177 = vmatmul.mubr.bf16.gmra.mrb[0].mxu0 %v4088
        %v4178 = vpop.f32.mrb[0].mxu0
        %v4179 = vadd.f32 0.0, %v4178
        %v4180 = vpop.f32.mrb[0].mxu0
        %v4181 = vpop.f32.mrb[0].mxu0
        %v4182 = vadd.f32 0.0, %v4181
        %v4183 = vpop.f32.mrb[0].mxu0
        %4184 = vmatprep.mubr.bf16.mxu0 0
        %4185 = vmatmul.mubr.bf16.gmra.mrb[0].mxu0 %v4089
        %v4186 = vpop.f32.mrb[0].mxu0
        %v4187 = vadd.f32 0.0, %v4186
        %v4188 = vpop.f32.mrb[0].mxu0
        %v4189 = vpop.f32.mrb[0].mxu0
        %v4190 = vadd.f32 0.0, %v4189
        %v4191 = vpop.f32.mrb[0].mxu0
        %4192 = vmatprep.mubr.bf16.mxu0 0
        %4193 = vmatmul.mubr.bf16.gmra.mrb[0].mxu0 %v4090
        %v4194 = vpop.f32.mrb[0].mxu0
        %v4195 = vadd.f32 0.0, %v4194
        %v4196 = vpop.f32.mrb[0].mxu0
        %v4197 = vpop.f32.mrb[0].mxu0
        %v4198 = vadd.f32 0.0, %v4197
        %v4199 = vpop.f32.mrb[0].mxu0
        %4200 = vmatprep.mubr.bf16.mxu0 0
        %4201 = vmatmul.mubr.bf16.gmra.mrb[0].mxu0 %v4091
        %v4202 = vpop.f32.mrb[0].mxu0
        %v4203 = vadd.f32 0.0, %v4202
        %v4204 = vpop.f32.mrb[0].mxu0
        %v4205 = vpop.f32.mrb[0].mxu0
        %v4206 = vadd.f32 0.0, %v4205
        %v4207 = vpop.f32.mrb[0].mxu0
        %4208 = vdwg.mxu0
        %v4209 = vadd.f32 %v4055, %v4179
        %v4210 = vadd.f32 %v4056, %v4182
        %v4211 = vadd.f32 %v4057, %v4187
        %v4212 = vadd.f32 %v4058, %v4190
        %v4213 = vadd.f32 %v4059, %v4195
        %v4214 = vadd.f32 %v4060, %v4198
        %v4215 = vadd.f32 %v4061, %v4203
        %v4216 = vadd.f32 %v4062, %v4206
        %4217 = vst [vmem:[#allocation3] sm:$0xff] %v4209
        %4218 = vst [vmem:[#allocation3 + $0x8] sm:$0xff] %v4210
        %4219 = vst [vmem:[#allocation3 + $0x10] sm:$0xff] %v4211
        %4220 = vst [vmem:[#allocation3 + $0x18] sm:$0xff] %v4212
        %4221 = vst [vmem:[#allocation3 + $0x20] sm:$0xff] %v4213
        %4222 = vst [vmem:[#allocation3 + $0x28] sm:$0xff] %v4214
        %4223 = vst [vmem:[#allocation3 + $0x30] sm:$0xff] %v4215
        %4224 = vst [vmem:[#allocation3 + $0x38] sm:$0xff] %v4216
        %v4225 = vld [vmem:[#allocation3] sm:$0xff]
        %v4226 = vld [vmem:[#allocation3 + $0x8] sm:$0xff]
        %v4227 = vld [vmem:[#allocation3 + $0x10] sm:$0xff]
        %v4228 = vld [vmem:[#allocation3 + $0x18] sm:$0xff]
        %v4229 = vld [vmem:[#allocation3 + $0x20] sm:$0xff]
        %v4230 = vld [vmem:[#allocation3 + $0x28] sm:$0xff]
        %v4231 = vld [vmem:[#allocation3 + $0x30] sm:$0xff]
        %v4232 = vld [vmem:[#allocation3 + $0x38] sm:$0xff]
        %v4233 = vld [vmem:[%s4] sm:$0x1]
        %v4235 = vlaneseq
        %v4236 = vshrl.u32 %v4235, 7
        %v4237 = vsub.s32 0, %v4236
        %v4238 = vrot.slane %v4233, %v4237
        %v4240 = vadd.f32 %v4225, %v4238
        %v4241 = vadd.f32 %v4226, %v4238
        %v4242 = vadd.f32 %v4227, %v4238
        %v4243 = vadd.f32 %v4228, %v4238
        %v4244 = vadd.f32 %v4229, %v4238
        %v4245 = vadd.f32 %v4230, %v4238
        %v4246 = vadd.f32 %v4231, %v4238
        %v4247 = vadd.f32 %v4232, %v4238
        %v4248 = vld [vmem:[%s945] sm:$0xf]
        %v4249 = vld [vmem:[%s945 + $0x8] sm:$0xf]
        %v4250 = vld [vmem:[%s945 + $0x10] sm:$0xf]
        %v4251 = vld [vmem:[%s945 + $0x18] sm:$0xf]
        %v4252 = vld [vmem:[%s945 + $0x20] sm:$0xf]
        %v4253 = vld [vmem:[%s945 + $0x28] sm:$0xf]
        %v4254 = vld [vmem:[%s945 + $0x30] sm:$0xf]
        %v4255 = vld [vmem:[%s945 + $0x38] sm:$0xf]
        %v4256 = vld [vmem:[%s5] sm:$0x3]
        %v4257 = vld [vmem:[%s6] sm:$0x1]
        %v4259 = vlaneseq
        %v4260 = vshrl.u32 %v4259, 7
        %v4261 = vsub.s32 0, %v4260
        %v4262 = vrot.slane %v4257, %v4261
        %v4272 = vunpack.c.l.b16 %v4248
        %v4273 = vunpack.c.l.b16 %v4249
        %v4274 = vunpack.c.l.b16 %v4250
        %v4275 = vunpack.c.l.b16 %v4251
        %v4276 = vunpack.c.l.b16 %v4252
        %v4277 = vunpack.c.l.b16 %v4253
        %v4278 = vunpack.c.l.b16 %v4254
        %v4279 = vunpack.c.l.b16 %v4255
        %v4280 = vpack.c.b16 %v4273, %v4272
        %v4281 = vpack.c.b16 %v4275, %v4274
        %v4282 = vpack.c.b16 %v4277, %v4276
        %v4283 = vpack.c.b16 %v4279, %v4278
        %v4285 = vsel %vm328, %v4280, 0
        %v4288 = vsel %vm328, %v4281, 0
        %v4291 = vsel %vm328, %v4282, 0
        %v4294 = vsel %vm328, %v4283, 0
        %v4297 = vsel %vm341, %v4256, 0
        %4299 = vmatprep.subr.bf16.mxu0 0
        %4300 = vmatpush1.bf16.msra.mxu0 %v4297
        %4301 = vmatprep.subr.bf16.mxu0 0
        %4302 = vmatpush1.bf16.msra.mxu0 0
        %4303 = vmatprep.subr.bf16.mxu0 0
        %4304 = vmatpush1.bf16.msra.mxu0 0
        %4305 = vmatprep.subr.bf16.mxu0 0
        %4306 = vmatpush1.bf16.msra.mxu0 0
        %4307 = vmatprep.subr.bf16.mxu0 0
        %4308 = vmatpush1.bf16.msra.mxu0 0
        %4309 = vmatprep.subr.bf16.mxu0 0
        %4310 = vmatpush1.bf16.msra.mxu0 0
        %4311 = vmatprep.subr.bf16.mxu0 0
        %4312 = vmatpush1.bf16.msra.mxu0 0
        %4313 = vmatprep.subr.bf16.mxu0 0
        %4314 = vmatpush1.bf16.msra.mxu0 0
        %4315 = vmatprep.subr.bf16.mxu0 0
        %4316 = vmatpush1.bf16.msra.mxu0 0
        %4317 = vmatprep.subr.bf16.mxu0 0
        %4318 = vmatpush1.bf16.msra.mxu0 0
        %4319 = vmatprep.subr.bf16.mxu0 0
        %4320 = vmatpush1.bf16.msra.mxu0 0
        %4321 = vmatprep.subr.bf16.mxu0 0
        %4322 = vmatpush1.bf16.msra.mxu0 0
        %4323 = vmatprep.subr.bf16.mxu0 0
        %4324 = vmatpush1.bf16.msra.mxu0 0
        %4325 = vmatprep.subr.bf16.mxu0 0
        %4326 = vmatpush1.bf16.msra.mxu0 0
        %4327 = vmatprep.subr.bf16.mxu0 0
        %4328 = vmatpush1.bf16.msra.mxu0 0
        %4329 = vmatprep.subr.bf16.mxu0 0
        %4330 = vmatpush1.bf16.msra.mxu0 0
        %4331 = vmatprep.mubr.bf16.mxu0 0
        %4332 = vmatmul.mubr.bf16.gmra.mrb[0].mxu0 %v4285
        %v4333 = vpop.f32.mrb[0].mxu0
        %v4334 = vadd.f32 %v4262, %v4333
        %v4335 = vpop.f32.mrb[0].mxu0
        %v4336 = vpop.f32.mrb[0].mxu0
        %v4337 = vadd.f32 %v4262, %v4336
        %v4338 = vpop.f32.mrb[0].mxu0
        %4339 = vmatprep.mubr.bf16.mxu0 0
        %4340 = vmatmul.mubr.bf16.gmra.mrb[0].mxu0 %v4288
        %v4341 = vpop.f32.mrb[0].mxu0
        %v4342 = vadd.f32 %v4262, %v4341
        %v4343 = vpop.f32.mrb[0].mxu0
        %v4344 = vpop.f32.mrb[0].mxu0
        %v4345 = vadd.f32 %v4262, %v4344
        %v4346 = vpop.f32.mrb[0].mxu0
        %4347 = vmatprep.mubr.bf16.mxu0 0
        %4348 = vmatmul.mubr.bf16.gmra.mrb[0].mxu0 %v4291
        %v4349 = vpop.f32.mrb[0].mxu0
        %v4350 = vadd.f32 %v4262, %v4349
        %v4351 = vpop.f32.mrb[0].mxu0
        %v4352 = vpop.f32.mrb[0].mxu0
        %v4353 = vadd.f32 %v4262, %v4352
        %v4354 = vpop.f32.mrb[0].mxu0
        %4355 = vmatprep.mubr.bf16.mxu0 0
        %4356 = vmatmul.mubr.bf16.gmra.mrb[0].mxu0 %v4294
        %v4357 = vpop.f32.mrb[0].mxu0
        %v4358 = vadd.f32 %v4262, %v4357
        %v4359 = vpop.f32.mrb[0].mxu0
        %v4360 = vpop.f32.mrb[0].mxu0
        %v4361 = vadd.f32 %v4262, %v4360
        %v4362 = vpop.f32.mrb[0].mxu0
        %4363 = vdwg.mxu0
        %v4364 = vadd.f32 %v4240, %v4334
        %v4365 = vadd.f32 %v4241, %v4337
        %v4366 = vadd.f32 %v4242, %v4342
        %v4367 = vadd.f32 %v4243, %v4345
        %v4368 = vadd.f32 %v4244, %v4350
        %v4369 = vadd.f32 %v4245, %v4353
        %v4370 = vadd.f32 %v4246, %v4358
        %v4371 = vadd.f32 %v4247, %v4361
        %v4372 = vmax.f32 %v4364, 0.0
        %v4373 = vmax.f32 %v4365, 0.0
        %v4374 = vmax.f32 %v4366, 0.0
        %v4375 = vmax.f32 %v4367, 0.0
        %v4376 = vmax.f32 %v4368, 0.0
        %v4377 = vmax.f32 %v4369, 0.0
        %v4378 = vmax.f32 %v4370, 0.0
        %v4379 = vmax.f32 %v4371, 0.0
        %4380 = vst [vmem:[%s274] sm:$0xff] %v4372
        %4381 = vst [vmem:[%s274 + $0x8] sm:$0xff] %v4373
        %4382 = vst [vmem:[%s274 + $0x10] sm:$0xff] %v4374
        %4383 = vst [vmem:[%s274 + $0x18] sm:$0xff] %v4375
        %4384 = vst [vmem:[%s274 + $0x20] sm:$0xff] %v4376
        %4385 = vst [vmem:[%s274 + $0x28] sm:$0xff] %v4377
        %4386 = vst [vmem:[%s274 + $0x30] sm:$0xff] %v4378
        %4387 = vst [vmem:[%s274 + $0x38] sm:$0xff] %v4379
        %s4388 = sand.u32 %s181, 1
        %s4389 = scalar_lea.sflag [#allocation5], %s4388
        %s4390 = sand.u32 %s181, 1
        %s4391 = smul.addr %s4390, 64
        %s4392 = scalar_lea.vmem [#allocation4], %s4391
        // Predicated region
        $region49: #{tpu_custom_call.1} parent=47 // pred_check
          %p4393 = pneg %p191
        $region50: #{tpu_custom_call.1} parent=47 // pred_check_branch
          %4395 = sbr.rel (%p4393) target = $region52
        $region51: #{tpu_custom_call.1} parent=47 // pred_region
          %s4397 = ssub.s32 1024, 1024
          %4398 = vsyncadd %s4389, %s4397
          %s4399 = smul.addr %s21, 8
          %s4400 = smul.addr %s4399, 128
          %s4401 = scalar_lea.hbm %s7, %s4400
          %s4402 = sshll.u32 %s4392, 4
          %s4403 = int_to_ptr.vmem [resolvable:$true] %s4402
          %4408 = dma.vmem_to_hbm [thread:$0]  %s4403, 1024, %s4401, %s4389, 128, 128, 8
        $region52: #{tpu_custom_call.1} parent=47 // pred_fallthru
          _
      $region48: #{tpu_custom_call.1} parent=5 // pred_fallthru
        _
      %p4409 = scmp.le.s32.totalorder 2, %s16
      // Predicated region
      $region53: #{tpu_custom_call.1} parent=5 // pred_check
        %p4410 = pneg %p4409
      $region54: #{tpu_custom_call.1} parent=5 // pred_check_branch
        %4412 = sbr.rel (%p4410) target = $region56
      $region55: #{tpu_custom_call.1} parent=5 // pred_region
        %s4413 = ssub.s32 %s16, 2
        // Predicated region
        $region57: #{tpu_custom_call.1} parent=55 // pred_check
          %p4414 = pneg %p197
        $region58: #{tpu_custom_call.1} parent=55 // pred_check_branch
          %4416 = sbr.rel (%p4414) target = $region60
        $region59: #{tpu_custom_call.1} parent=55 // pred_region
          %s4417 = sand.u32 %s182, 1
          %s4418 = scalar_lea.sflag [#allocation5], %s4417
          %s4419 = sand.u32 %s182, 1
          %s4420 = smul.addr %s4419, 64
          %s4421 = scalar_lea.vmem [#allocation4], %s4420
          %4422 = dma.done %s4418, 1024
        $region60: #{tpu_custom_call.1} parent=55 // pred_fallthru
          _
      $region56: #{tpu_custom_call.1} parent=5 // pred_fallthru
        _
    $region6: #{tpu_custom_call.1} parent=1 // loop_footer
      %s20 = sadd.s32 1, %s16
    $region7: #{tpu_custom_call.1} parent=1 // loop_footer_branch
      %15 = sbr.rel target = $region3
    $region8: #{tpu_custom_call.1} parent=1 // loop_exit
      _
    %4423 = vsyncpa [#allocation5], 1
    %s4424 = scalar_lea.sflag [#allocation5], 1
    %4425 = vsyncpa %s4424, 1

</llo_original>
